<compile_context>
chip_gen: v6e
topology: v6e:2x2x1
jax: 0.10.0
libtpu: 0.0.40
codegen_flags: <defaults>
</compile_context>

<pallas_src>
import math

import numpy as np
import jax
import jax.numpy as jnp
from jax import lax
from jax.experimental import pallas as pl
from jax.experimental.pallas import tpu as pltpu

WINDOW_SIZE = 11
SIGMA = 1.5
PAD = WINDOW_SIZE // 2          # 5
C1 = 0.01 ** 2
C2 = 0.03 ** 2

_HALO_ROWS = 16                 # >= 10 rows of vertical halo, sublane aligned
_MAX_H_TILE = 256
_VMEM_TARGET = 44 * 1024 * 1024   # headroom inside v7x's 64 MiB physical VMEM
_NUM_MOMENTS = 8                # a, b, f, a*a, b*b, f*f, a*f, b*f


def _round_up(x, m):
    return ((x + m - 1) // m) * m


def _gaussian_1d(window_size, sigma):
    """1-D Gaussian window (matches `gaussian` in the PyTorch reference)."""
    g = [math.exp(-((i - window_size // 2) ** 2) / (2.0 * sigma * sigma))
         for i in range(window_size)]
    s = sum(g)
    return [v / s for v in g]


_WIN1D = _gaussian_1d(WINDOW_SIZE, SIGMA)


def _gauss_band_matrices(h_tile, tile_rows, w, wp, w_out_pad):
    """Banded matrices realizing the two separable Gaussian passes as matmuls.

    gv  (h_tile, tile_rows): gv[i, i+u] = win[u]      -> (gv @ X)[i] = vertical conv.
    gwin (wp, w_out_pad):    gwin[j+u, j] = win[u] for j < w, zero columns j >= w
                             (lane-dense output; padding columns are masked later).
    """
    gv = np.zeros((h_tile, tile_rows), np.float32)
    for i in range(h_tile):
        for u in range(WINDOW_SIZE):
            gv[i, i + u] = np.float32(_WIN1D[u])
    gwin = np.zeros((wp, w_out_pad), np.float32)
    for j in range(w):
        for u in range(WINDOW_SIZE):
            gwin[j + u, j] = np.float32(_WIN1D[u])
    return jnp.asarray(gv), jnp.asarray(gwin)


def _pad_and_tile(x, h, w, h_tile, num_tiles, tile_rows, wp):
    """(B, C, H, W) -> (B*C, num_tiles, tile_rows, Wp) f32 overlapping row tiles.

    The slab is zero padded by 5 (SSIM 'same' padding) on top/left and by
    5 + alignment on bottom/right; tile t covers slab rows
    [t*h_tile, t*h_tile + tile_rows), i.e. a 16-row halo shared with tile t+1.
    """
    n = x.shape[0] * x.shape[1]
    xf = x.reshape(n, h, w).astype(jnp.float32)
    h_slab = num_tiles * h_tile + _HALO_ROWS
    slab = jnp.pad(xf, ((0, 0), (PAD, h_slab - h - PAD), (PAD, wp - w - PAD)))
    if num_tiles == 1:
        return slab[:, None, :, :]
    tiles = [slab[:, t * h_tile: t * h_tile + tile_rows, :] for t in range(num_tiles)]
    return jnp.stack(tiles, axis=1)


def _vmem_bytes_estimate(h_tile, wp, w_out_pad):
    """Rough per-grid-step VMEM footprint (bytes) for the chosen tile size."""
    tile_rows = h_tile + _HALO_ROWS
    f = 4
    est = 0
    est += 2 * 3 * tile_rows * wp * f                        # 3 image tiles, 2 buffers
    est += 2 * (h_tile * tile_rows + wp * w_out_pad) * f     # gv / gwin (2 buffers each)
    est += tile_rows * _NUM_MOMENTS * wp * f                 # lane-stacked products scratch
    est += _NUM_MOMENTS * h_tile * wp * f                    # sublane-stacked scratch
    est += h_tile * _NUM_MOMENTS * wp * f                    # vertical matmul output
    est += _NUM_MOMENTS * h_tile * w_out_pad * f             # horizontal matmul output
    est += _NUM_MOMENTS * h_tile * w_out_pad * f             # SSIM-map temporaries (approx)
    est += 6 * h_tile * wp * f                               # Sobel temporaries (approx)
    return est


def _make_fused_kernel(h, w, h_tile, wp, w_out_pad):
    """Kernel closure over the static tiling parameters."""
    hi = lax.Precision.HIGHEST   # TODO(synk): evaluate Precision.HIGH for the Gaussian passes

    def kernel(gv_ref, gwin_ref, a_ref, b_ref, f_ref, out_ref, xstk_ref, ystk_ref):
        a = a_ref[0, 0]                      # (tile_rows, Wp) f32, zero-padded slab tile
        b = b_ref[0, 0]
        f = f_ref[0, 0]
        t = pl.program_id(1)
        # Rows of this tile that correspond to real image rows (last tile may be short).
        valid_rows = jnp.minimum(h - t * h_tile, h_tile)

        # ---- masks (extra zero-pad rows/cols must not contribute to the sums) ----
        row_o = lax.broadcasted_iota(jnp.int32, (h_tile, w_out_pad), 0)
        col_o = lax.broadcasted_iota(jnp.int32, (h_tile, w_out_pad), 1)
        ssim_mask = jnp.where((row_o < valid_rows) & (col_o < w),
                              jnp.float32(1.0), jnp.float32(0.0))

        row_s = lax.broadcasted_iota(jnp.int32, (h_tile, wp), 0)
        col_s = lax.broadcasted_iota(jnp.int32, (h_tile, wp), 1)
        sob_mask = jnp.where(
            (row_s < valid_rows) & (col_s >= PAD) & (col_s < PAD + w),
            jnp.float32(1.0), jnp.float32(0.0))

        # ---- Sobel gradient magnitude: [1,2,1] (x) [-1,0,1], no matmuls ----
        # H pass: 3 sublane-shifted slices; W pass: XLU lane rolls (+-1).
        # |gx| and gy are symmetric under +-1 swap, so roll direction is immaterial,
        # and the wrapped lanes (c = 0, Wp-1) are outside sob_mask.
        def sobel_sum(x):
            th = x[4:4 + h_tile, :] + 2.0 * x[5:5 + h_tile, :] + x[6:6 + h_tile, :]
            td = x[4:4 + h_tile, :] - x[6:6 + h_tile, :]
            th_m = pltpu.roll(th, 1, 1)
            th_p = pltpu.roll(th, wp - 1, 1)
            td_m = pltpu.roll(td, 1, 1)
            td_p = pltpu.roll(td, wp - 1, 1)
            gx = th_p - th_m
            gy = td_m + 2.0 * td + td_p
            return jnp.sum(sob_mask * (jnp.abs(gx) + jnp.abs(gy)))

        g_a = sobel_sum(a)
        g_b = sobel_sum(b)

        # ---- SSIM moments: both separable Gaussian passes on the MXU ----
        # Lane-stack the 8 moment channels (pad(x)*pad(y) == pad(x*y)).
        xstk_ref[:, 0 * wp:1 * wp] = a
        xstk_ref[:, 1 * wp:2 * wp] = b
        xstk_ref[:, 2 * wp:3 * wp] = f
        xstk_ref[:, 3 * wp:4 * wp] = a * a
        xstk_ref[:, 4 * wp:5 * wp] = b * b
        xstk_ref[:, 5 * wp:6 * wp] = f * f
        xstk_ref[:, 6 * wp:7 * wp] = a * f
        xstk_ref[:, 7 * wp:8 * wp] = b * f

        # Vertical 11-tap pass: one left band-matmul over all 8 channels at once.
        v = jnp.dot(gv_ref[...], xstk_ref[...], precision=hi,
                    preferred_element_type=jnp.float32)          # (h_tile, 8*Wp)

        # Re-stack along sublanes so the horizontal pass is ONE matmul too.
        for k in range(_NUM_MOMENTS):
            ystk_ref[k * h_tile:(k + 1) * h_tile, :] = v[:, k * wp:(k + 1) * wp]
        m = jnp.dot(ystk_ref[...], gwin_ref[...], precision=hi,
                    preferred_element_type=jnp.float32)          # (8*h_tile, w_out_pad)

        mu_a = m[0 * h_tile:1 * h_tile]
        mu_b = m[1 * h_tile:2 * h_tile]
        mu_f = m[2 * h_tile:3 * h_tile]
        e_aa = m[3 * h_tile:4 * h_tile]
        e_bb = m[4 * h_tile:5 * h_tile]
        e_ff = m[5 * h_tile:6 * h_tile]
        e_af = m[6 * h_tile:7 * h_tile]
        e_bf = m[7 * h_tile:8 * h_tile]

        mu_f_sq = mu_f * mu_f
        sig_ff = e_ff - mu_f_sq                # shared F-side variance

        def ssim_sum(mu1, e11, e1f):
            mu1_sq = mu1 * mu1
            mu1_mu2 = mu1 * mu_f
            sig11 = e11 - mu1_sq
            sig1f = e1f - mu1_mu2
            num = (2.0 * mu1_mu2 + C1) * (2.0 * sig1f + C2)
            den = (mu1_sq + mu_f_sq + C1) * (sig11 + sig_ff + C2)
            return jnp.sum(ssim_mask * (num / den))

        s_af = ssim_sum(mu_a, e_aa, e_af)
        s_bf = ssim_sum(mu_b, e_bb, e_bf)

        out_ref[0, 0, 0] = g_a
        out_ref[0, 0, 1] = g_b
        out_ref[0, 0, 2] = s_af
        out_ref[0, 0, 3] = s_bf

    return kernel


def l_ssim_loss(image_A, image_B, image_fused):
    """Forward pass of L_SSIM (single fused Pallas kernel + tiny JAX epilogue)."""
    bsz, ch, h, w = image_A.shape
    n = bsz * ch
    wp = _round_up(w + 2 * PAD, 128)        # lane-aligned padded slab width
    w_out = _round_up(w, 128)               # lane-dense SSIM output width (extra cols masked)

    # Pick the biggest H tile that keeps the per-step VMEM estimate under target.
    h_tile = min(_MAX_H_TILE, _round_up(h, 8))
    while h_tile > 8 and _vmem_bytes_estimate(h_tile, wp, w_out) > _VMEM_TARGET:
        nxt = max(8, _round_up(h_tile // 2, 8))
        if nxt == h_tile:
            break
        h_tile = nxt
    tile_rows = h_tile + _HALO_ROWS
    num_tiles = -(-h // h_tile)             # ceil(h / h_tile)

    a_t = _pad_and_tile(image_A, h, w, h_tile, num_tiles, tile_rows, wp)
    b_t = _pad_and_tile(image_B, h, w, h_tile, num_tiles, tile_rows, wp)
    f_t = _pad_and_tile(image_fused, h, w, h_tile, num_tiles, tile_rows, wp)
    gv, gwin = _gauss_band_matrices(h_tile, tile_rows, w, wp, w_out)

    gv_spec = pl.BlockSpec((h_tile, tile_rows), lambda i, t: (0, 0))
    gwin_spec = pl.BlockSpec((wp, w_out), lambda i, t: (0, 0))
    img_spec = pl.BlockSpec((1, 1, tile_rows, wp), lambda i, t: (i, t, 0, 0))
    out_spec = pl.BlockSpec((1, 1, 4), lambda i, t: (i, t, 0),
                            memory_space=pltpu.MemorySpace.SMEM)

    est_vmem = _vmem_bytes_estimate(h_tile, wp, w_out)
    # Cap well below the 64 MiB physical VMEM of a v7x TensorCore.
    vmem_limit = int(min(56 * 1024 * 1024,
                         max(32 * 1024 * 1024, int(est_vmem * 1.25))))

    flops_step = (2 * h_tile * tile_rows * _NUM_MOMENTS * wp   # vertical Gaussian matmul
                  + 2 * _NUM_MOMENTS * h_tile * wp * w_out     # horizontal Gaussian matmul
                  + 90 * tile_rows * wp)                       # products / Sobel / SSIM map
    cost = pl.CostEstimate(
        flops=int(n * num_tiles * flops_step),
        transcendentals=0,
        bytes_accessed=int(n * num_tiles * (3 * tile_rows * wp * 4 + 16)
                           + (h_tile * tile_rows + wp * w_out) * 4),
    )

    sums = pl.pallas_call(
        _make_fused_kernel(h, w, h_tile, wp, w_out),
        out_shape=jax.ShapeDtypeStruct((n, num_tiles, 4), jnp.float32),
        grid=(n, num_tiles),
        in_specs=[gv_spec, gwin_spec, img_spec, img_spec, img_spec],
        out_specs=out_spec,
        scratch_shapes=[pltpu.VMEM((tile_rows, _NUM_MOMENTS * wp), jnp.float32),
                        pltpu.VMEM((_NUM_MOMENTS * h_tile, wp), jnp.float32)],
        compiler_params=pltpu.CompilerParams(
            dimension_semantics=("parallel", "parallel"),
            vmem_limit_bytes=vmem_limit,
        ),
        cost_estimate=cost,
    )(gv, gwin, a_t, b_t, f_t)

    totals = jnp.sum(sums, axis=(0, 1))            # (4,) partial-sum reduction
    count = jnp.float32(n * h * w)
    mean_grad_a = totals[0] / count
    mean_grad_b = totals[1] / count
    ssim_af = totals[2] / count
    ssim_bf = totals[3] / count

    # Faithful to the reference: no epsilon, so constant (zero-gradient) images
    # produce NaN exactly like the PyTorch module.
    denom = mean_grad_a + mean_grad_b
    weight_a = mean_grad_a / denom
    weight_b = mean_grad_b / denom
    return weight_a * ssim_af + weight_b * ssim_bf


if __name__ == "__main__":
    key = jax.random.PRNGKey(0)
    k_a, k_b, k_f = jax.random.split(key, 3)
    shape = (2, 1, 16, 16)   # (B, C, H, W); C = 1 as required by Sobelxy's weights
    image_A = jax.random.uniform(k_a, shape, dtype=jnp.float32)
    image_B = jax.random.uniform(k_b, shape, dtype=jnp.float32)
    image_F = jax.random.uniform(k_f, shape, dtype=jnp.float32)

    loss = jax.jit(l_ssim_loss)(image_A, image_B, image_F)
    jax.block_until_ready(loss)
    print("KERNEL_OK")
</pallas_src>

<mosaic_0001>
module attributes {stable_mosaic.version = 11 : i64} {
  func.func @kernel(%arg0: i32, %arg1: i32, %arg2: memref<16x32xf32, #tpu.memory_space<vmem>>, %arg3: memref<128x128xf32, #tpu.memory_space<vmem>>, %arg4: memref<1x1x32x128xf32, #tpu.memory_space<vmem>>, %arg5: memref<1x1x32x128xf32, #tpu.memory_space<vmem>>, %arg6: memref<1x1x32x128xf32, #tpu.memory_space<vmem>>, %arg7: memref<1x1x4xf32, #tpu.memory_space<smem>>, %arg8: memref<32x1024xf32, #tpu.memory_space<vmem>>, %arg9: memref<128x128xf32, #tpu.memory_space<vmem>>) attributes {dimension_semantics = [#tpu.dimension_semantics<parallel>, #tpu.dimension_semantics<parallel>], iteration_bounds = array<i64: 2, 1>, scalar_prefetch = 0 : i64, scratch_operands = 2 : i64, tpu.core_type = #tpu.core_type<tc>, window_params = [{pipeline_mode = #tpu.pipeline_mode<synchronous>, transform_indices = @transform_0, window_bounds = array<i64: 16, 32>}, {pipeline_mode = #tpu.pipeline_mode<synchronous>, transform_indices = @transform_1, window_bounds = array<i64: 128, 128>}, {transform_indices = @transform_2, window_bounds = array<i64: 1, 1, 32, 128>}, {transform_indices = @transform_3, window_bounds = array<i64: 1, 1, 32, 128>}, {transform_indices = @transform_4, window_bounds = array<i64: 1, 1, 32, 128>}, {transform_indices = @transform_5, window_bounds = array<i64: 1, 1, 4>}]} {
    %c0 = arith.constant 0 : index
    %c0_0 = arith.constant 0 : index
    %c0_1 = arith.constant 0 : index
    %c0_2 = arith.constant 0 : index
    %0 = vector.load %arg4[%c0, %c0_0, %c0_1, %c0_2] : memref<1x1x32x128xf32, #tpu.memory_space<vmem>>, vector<1x1x32x128xf32>
    %1 = vector.shape_cast %0 : vector<1x1x32x128xf32> to vector<32x128xf32>
    %c0_3 = arith.constant 0 : index
    %c0_4 = arith.constant 0 : index
    %c0_5 = arith.constant 0 : index
    %c0_6 = arith.constant 0 : index
    %2 = vector.load %arg5[%c0_3, %c0_4, %c0_5, %c0_6] : memref<1x1x32x128xf32, #tpu.memory_space<vmem>>, vector<1x1x32x128xf32>
    %3 = vector.shape_cast %2 : vector<1x1x32x128xf32> to vector<32x128xf32>
    %c0_7 = arith.constant 0 : index
    %c0_8 = arith.constant 0 : index
    %c0_9 = arith.constant 0 : index
    %c0_10 = arith.constant 0 : index
    %4 = vector.load %arg6[%c0_7, %c0_8, %c0_9, %c0_10] : memref<1x1x32x128xf32, #tpu.memory_space<vmem>>, vector<1x1x32x128xf32>
    %5 = vector.shape_cast %4 : vector<1x1x32x128xf32> to vector<32x128xf32>
    %c16_i32 = arith.constant 16 : i32
    %6 = arith.muli %arg1, %c16_i32 : i32
    %c16_i32_11 = arith.constant 16 : i32
    %7 = arith.subi %c16_i32_11, %6 : i32
    %c16_i32_12 = arith.constant 16 : i32
    %8 = arith.minsi %7, %c16_i32_12 : i32
    %9 = tpu.iota {dimensions = array<i32: 0>} : vector<16x128xi32>
    %10 = tpu.iota {dimensions = array<i32: 1>} : vector<16x128xi32>
    %11 = vector.broadcast %8 : i32 to vector<16x128xi32>
    %12 = arith.cmpi slt, %9, %11 : vector<16x128xi32>
    %c16_i32_13 = arith.constant 16 : i32
    %13 = vector.broadcast %c16_i32_13 : i32 to vector<16x128xi32>
    %14 = arith.cmpi slt, %10, %13 : vector<16x128xi32>
    %15 = arith.andi %12, %14 : vector<16x128xi1>
    %cst = arith.constant 1.000000e+00 : f32
    %cst_14 = arith.constant 0.000000e+00 : f32
    %16 = vector.broadcast %cst : f32 to vector<16x128xf32>
    %17 = vector.broadcast %cst_14 : f32 to vector<16x128xf32>
    %18 = arith.select %15, %16, %17 : vector<16x128xi1>, vector<16x128xf32>
    %19 = tpu.iota {dimensions = array<i32: 0>} : vector<16x128xi32>
    %20 = tpu.iota {dimensions = array<i32: 1>} : vector<16x128xi32>
    %21 = vector.broadcast %8 : i32 to vector<16x128xi32>
    %22 = arith.cmpi slt, %19, %21 : vector<16x128xi32>
    %c5_i32 = arith.constant 5 : i32
    %23 = vector.broadcast %c5_i32 : i32 to vector<16x128xi32>
    %24 = arith.cmpi sge, %20, %23 : vector<16x128xi32>
    %25 = arith.andi %22, %24 : vector<16x128xi1>
    %c21_i32 = arith.constant 21 : i32
    %26 = vector.broadcast %c21_i32 : i32 to vector<16x128xi32>
    %27 = arith.cmpi slt, %20, %26 : vector<16x128xi32>
    %28 = arith.andi %25, %27 : vector<16x128xi1>
    %cst_15 = arith.constant 1.000000e+00 : f32
    %cst_16 = arith.constant 0.000000e+00 : f32
    %29 = vector.broadcast %cst_15 : f32 to vector<16x128xf32>
    %30 = vector.broadcast %cst_16 : f32 to vector<16x128xf32>
    %31 = arith.select %28, %29, %30 : vector<16x128xi1>, vector<16x128xf32>
    %32 = vector.extract_strided_slice %1 {offsets = [4, 0], sizes = [16, 128], strides = [1, 1]} : vector<32x128xf32> to vector<16x128xf32>
    %33 = vector.extract_strided_slice %1 {offsets = [5, 0], sizes = [16, 128], strides = [1, 1]} : vector<32x128xf32> to vector<16x128xf32>
    %cst_17 = arith.constant 2.000000e+00 : f32
    %34 = vector.broadcast %cst_17 : f32 to vector<16x128xf32>
    %35 = arith.mulf %34, %33 : vector<16x128xf32>
    %36 = arith.addf %32, %35 : vector<16x128xf32>
    %37 = vector.extract_strided_slice %1 {offsets = [6, 0], sizes = [16, 128], strides = [1, 1]} : vector<32x128xf32> to vector<16x128xf32>
    %38 = arith.addf %36, %37 : vector<16x128xf32>
    %39 = vector.extract_strided_slice %1 {offsets = [4, 0], sizes = [16, 128], strides = [1, 1]} : vector<32x128xf32> to vector<16x128xf32>
    %40 = vector.extract_strided_slice %1 {offsets = [6, 0], sizes = [16, 128], strides = [1, 1]} : vector<32x128xf32> to vector<16x128xf32>
    %41 = arith.subf %39, %40 : vector<16x128xf32>
    %c1_i32 = arith.constant 1 : i32
    %42 = tpu.dynamic_rotate %38 by %c1_i32 dim 1 : vector<16x128xf32>, i32 -> vector<16x128xf32>
    %c127_i32 = arith.constant 127 : i32
    %43 = tpu.dynamic_rotate %38 by %c127_i32 dim 1 : vector<16x128xf32>, i32 -> vector<16x128xf32>
    %c1_i32_18 = arith.constant 1 : i32
    %44 = tpu.dynamic_rotate %41 by %c1_i32_18 dim 1 : vector<16x128xf32>, i32 -> vector<16x128xf32>
    %c127_i32_19 = arith.constant 127 : i32
    %45 = tpu.dynamic_rotate %41 by %c127_i32_19 dim 1 : vector<16x128xf32>, i32 -> vector<16x128xf32>
    %46 = arith.subf %43, %42 : vector<16x128xf32>
    %cst_20 = arith.constant 2.000000e+00 : f32
    %47 = vector.broadcast %cst_20 : f32 to vector<16x128xf32>
    %48 = arith.mulf %47, %41 : vector<16x128xf32>
    %49 = arith.addf %44, %48 : vector<16x128xf32>
    %50 = arith.addf %49, %45 : vector<16x128xf32>
    %51 = math.absf %46 : vector<16x128xf32>
    %52 = math.absf %50 : vector<16x128xf32>
    %53 = arith.addf %51, %52 : vector<16x128xf32>
    %54 = arith.mulf %31, %53 : vector<16x128xf32>
    %55 = vector.shape_cast %54 : vector<16x128xf32> to vector<1x16x128xf32>
    %cst_21 = arith.constant dense<0.000000e+00> : vector<1xf32>
    %56 = vector.multi_reduction <add>, %55, %cst_21 [1, 2] : vector<1x16x128xf32> to vector<1xf32>
    %57 = vector.shape_cast %56 : vector<1xf32> to vector<1x1x1xf32>
    %58 = vector.extract %57[0, 0, 0] : f32 from vector<1x1x1xf32>
    %59 = vector.extract_strided_slice %3 {offsets = [4, 0], sizes = [16, 128], strides = [1, 1]} : vector<32x128xf32> to vector<16x128xf32>
    %60 = vector.extract_strided_slice %3 {offsets = [5, 0], sizes = [16, 128], strides = [1, 1]} : vector<32x128xf32> to vector<16x128xf32>
    %cst_22 = arith.constant 2.000000e+00 : f32
    %61 = vector.broadcast %cst_22 : f32 to vector<16x128xf32>
    %62 = arith.mulf %61, %60 : vector<16x128xf32>
    %63 = arith.addf %59, %62 : vector<16x128xf32>
    %64 = vector.extract_strided_slice %3 {offsets = [6, 0], sizes = [16, 128], strides = [1, 1]} : vector<32x128xf32> to vector<16x128xf32>
    %65 = arith.addf %63, %64 : vector<16x128xf32>
    %66 = vector.extract_strided_slice %3 {offsets = [4, 0], sizes = [16, 128], strides = [1, 1]} : vector<32x128xf32> to vector<16x128xf32>
    %67 = vector.extract_strided_slice %3 {offsets = [6, 0], sizes = [16, 128], strides = [1, 1]} : vector<32x128xf32> to vector<16x128xf32>
    %68 = arith.subf %66, %67 : vector<16x128xf32>
    %c1_i32_23 = arith.constant 1 : i32
    %69 = tpu.dynamic_rotate %65 by %c1_i32_23 dim 1 : vector<16x128xf32>, i32 -> vector<16x128xf32>
    %c127_i32_24 = arith.constant 127 : i32
    %70 = tpu.dynamic_rotate %65 by %c127_i32_24 dim 1 : vector<16x128xf32>, i32 -> vector<16x128xf32>
    %c1_i32_25 = arith.constant 1 : i32
    %71 = tpu.dynamic_rotate %68 by %c1_i32_25 dim 1 : vector<16x128xf32>, i32 -> vector<16x128xf32>
    %c127_i32_26 = arith.constant 127 : i32
    %72 = tpu.dynamic_rotate %68 by %c127_i32_26 dim 1 : vector<16x128xf32>, i32 -> vector<16x128xf32>
    %73 = arith.subf %70, %69 : vector<16x128xf32>
    %cst_27 = arith.constant 2.000000e+00 : f32
    %74 = vector.broadcast %cst_27 : f32 to vector<16x128xf32>
    %75 = arith.mulf %74, %68 : vector<16x128xf32>
    %76 = arith.addf %71, %75 : vector<16x128xf32>
    %77 = arith.addf %76, %72 : vector<16x128xf32>
    %78 = math.absf %73 : vector<16x128xf32>
    %79 = math.absf %77 : vector<16x128xf32>
    %80 = arith.addf %78, %79 : vector<16x128xf32>
    %81 = arith.mulf %31, %80 : vector<16x128xf32>
    %82 = vector.shape_cast %81 : vector<16x128xf32> to vector<1x16x128xf32>
    %cst_28 = arith.constant dense<0.000000e+00> : vector<1xf32>
    %83 = vector.multi_reduction <add>, %82, %cst_28 [1, 2] : vector<1x16x128xf32> to vector<1xf32>
    %84 = vector.shape_cast %83 : vector<1xf32> to vector<1x1x1xf32>
    %85 = vector.extract %84[0, 0, 0] : f32 from vector<1x1x1xf32>
    %c0_29 = arith.constant 0 : index
    %c0_30 = arith.constant 0 : index
    %86 = vector.load %arg8[%c0_29, %c0_30] : memref<32x1024xf32, #tpu.memory_space<vmem>>, vector<32x128xf32>
    tpu.vector_store %arg8[%c0_29, %c0_30], %1 {strides = array<i32>} : memref<32x1024xf32, #tpu.memory_space<vmem>>, vector<32x128xf32>,
    %c0_31 = arith.constant 0 : index
    %c128 = arith.constant 128 : index
    %87 = vector.load %arg8[%c0_31, %c128] : memref<32x1024xf32, #tpu.memory_space<vmem>>, vector<32x128xf32>
    tpu.vector_store %arg8[%c0_31, %c128], %3 {strides = array<i32>} : memref<32x1024xf32, #tpu.memory_space<vmem>>, vector<32x128xf32>,
    %c0_32 = arith.constant 0 : index
    %c256 = arith.constant 256 : index
    %88 = vector.load %arg8[%c0_32, %c256] : memref<32x1024xf32, #tpu.memory_space<vmem>>, vector<32x128xf32>
    tpu.vector_store %arg8[%c0_32, %c256], %5 {strides = array<i32>} : memref<32x1024xf32, #tpu.memory_space<vmem>>, vector<32x128xf32>,
    %89 = arith.mulf %1, %1 : vector<32x128xf32>
    %c0_33 = arith.constant 0 : index
    %c384 = arith.constant 384 : index
    %90 = vector.load %arg8[%c0_33, %c384] : memref<32x1024xf32, #tpu.memory_space<vmem>>, vector<32x128xf32>
    tpu.vector_store %arg8[%c0_33, %c384], %89 {strides = array<i32>} : memref<32x1024xf32, #tpu.memory_space<vmem>>, vector<32x128xf32>,
    %91 = arith.mulf %3, %3 : vector<32x128xf32>
    %c0_34 = arith.constant 0 : index
    %c512 = arith.constant 512 : index
    %92 = vector.load %arg8[%c0_34, %c512] : memref<32x1024xf32, #tpu.memory_space<vmem>>, vector<32x128xf32>
    tpu.vector_store %arg8[%c0_34, %c512], %91 {strides = array<i32>} : memref<32x1024xf32, #tpu.memory_space<vmem>>, vector<32x128xf32>,
    %93 = arith.mulf %5, %5 : vector<32x128xf32>
    %c0_35 = arith.constant 0 : index
    %c640 = arith.constant 640 : index
    %94 = vector.load %arg8[%c0_35, %c640] : memref<32x1024xf32, #tpu.memory_space<vmem>>, vector<32x128xf32>
    tpu.vector_store %arg8[%c0_35, %c640], %93 {strides = array<i32>} : memref<32x1024xf32, #tpu.memory_space<vmem>>, vector<32x128xf32>,
    %95 = arith.mulf %1, %5 : vector<32x128xf32>
    %c0_36 = arith.constant 0 : index
    %c768 = arith.constant 768 : index
    %96 = vector.load %arg8[%c0_36, %c768] : memref<32x1024xf32, #tpu.memory_space<vmem>>, vector<32x128xf32>
    tpu.vector_store %arg8[%c0_36, %c768], %95 {strides = array<i32>} : memref<32x1024xf32, #tpu.memory_space<vmem>>, vector<32x128xf32>,
    %97 = arith.mulf %3, %5 : vector<32x128xf32>
    %c0_37 = arith.constant 0 : index
    %c896 = arith.constant 896 : index
    %98 = vector.load %arg8[%c0_37, %c896] : memref<32x1024xf32, #tpu.memory_space<vmem>>, vector<32x128xf32>
    tpu.vector_store %arg8[%c0_37, %c896], %97 {strides = array<i32>} : memref<32x1024xf32, #tpu.memory_space<vmem>>, vector<32x128xf32>,
    %c0_38 = arith.constant 0 : index
    %c0_39 = arith.constant 0 : index
    %99 = vector.load %arg2[%c0_38, %c0_39] : memref<16x32xf32, #tpu.memory_space<vmem>>, vector<16x32xf32>
    %c0_40 = arith.constant 0 : index
    %c0_41 = arith.constant 0 : index
    %100 = vector.load %arg8[%c0_40, %c0_41] : memref<32x1024xf32, #tpu.memory_space<vmem>>, vector<32x1024xf32>
    %cst_42 = arith.constant dense<0.000000e+00> : vector<16x1024xf32>
    %101 = tpu.matmul %99, %100, %cst_42 {dimension_numbers = #tpu.dot_dimension_numbers<[1], [0], [0], [1], [0, 0, 1, 1], [], []>, precision = #tpu.contract_precision<fp32>} : vector<16x32xf32>, vector<32x1024xf32>, vector<16x1024xf32> -> vector<16x1024xf32>
    %102 = vector.extract_strided_slice %101 {offsets = [0, 0], sizes = [16, 128], strides = [1, 1]} : vector<16x1024xf32> to vector<16x128xf32>
    %c0_43 = arith.constant 0 : index
    %c0_44 = arith.constant 0 : index
    %103 = vector.load %arg9[%c0_43, %c0_44] : memref<128x128xf32, #tpu.memory_space<vmem>>, vector<16x128xf32>
    tpu.vector_store %arg9[%c0_43, %c0_44], %102 {strides = array<i32>} : memref<128x128xf32, #tpu.memory_space<vmem>>, vector<16x128xf32>,
    %104 = vector.extract_strided_slice %101 {offsets = [0, 128], sizes = [16, 128], strides = [1, 1]} : vector<16x1024xf32> to vector<16x128xf32>
    %c16 = arith.constant 16 : index
    %c0_45 = arith.constant 0 : index
    %105 = vector.load %arg9[%c16, %c0_45] : memref<128x128xf32, #tpu.memory_space<vmem>>, vector<16x128xf32>
    tpu.vector_store %arg9[%c16, %c0_45], %104 {strides = array<i32>} : memref<128x128xf32, #tpu.memory_space<vmem>>, vector<16x128xf32>,
    %106 = vector.extract_strided_slice %101 {offsets = [0, 256], sizes = [16, 128], strides = [1, 1]} : vector<16x1024xf32> to vector<16x128xf32>
    %c32 = arith.constant 32 : index
    %c0_46 = arith.constant 0 : index
    %107 = vector.load %arg9[%c32, %c0_46] : memref<128x128xf32, #tpu.memory_space<vmem>>, vector<16x128xf32>
    tpu.vector_store %arg9[%c32, %c0_46], %106 {strides = array<i32>} : memref<128x128xf32, #tpu.memory_space<vmem>>, vector<16x128xf32>,
    %108 = vector.extract_strided_slice %101 {offsets = [0, 384], sizes = [16, 128], strides = [1, 1]} : vector<16x1024xf32> to vector<16x128xf32>
    %c48 = arith.constant 48 : index
    %c0_47 = arith.constant 0 : index
    %109 = vector.load %arg9[%c48, %c0_47] : memref<128x128xf32, #tpu.memory_space<vmem>>, vector<16x128xf32>
    tpu.vector_store %arg9[%c48, %c0_47], %108 {strides = array<i32>} : memref<128x128xf32, #tpu.memory_space<vmem>>, vector<16x128xf32>,
    %110 = vector.extract_strided_slice %101 {offsets = [0, 512], sizes = [16, 128], strides = [1, 1]} : vector<16x1024xf32> to vector<16x128xf32>
    %c64 = arith.constant 64 : index
    %c0_48 = arith.constant 0 : index
    %111 = vector.load %arg9[%c64, %c0_48] : memref<128x128xf32, #tpu.memory_space<vmem>>, vector<16x128xf32>
    tpu.vector_store %arg9[%c64, %c0_48], %110 {strides = array<i32>} : memref<128x128xf32, #tpu.memory_space<vmem>>, vector<16x128xf32>,
    %112 = vector.extract_strided_slice %101 {offsets = [0, 640], sizes = [16, 128], strides = [1, 1]} : vector<16x1024xf32> to vector<16x128xf32>
    %c80 = arith.constant 80 : index
    %c0_49 = arith.constant 0 : index
    %113 = vector.load %arg9[%c80, %c0_49] : memref<128x128xf32, #tpu.memory_space<vmem>>, vector<16x128xf32>
    tpu.vector_store %arg9[%c80, %c0_49], %112 {strides = array<i32>} : memref<128x128xf32, #tpu.memory_space<vmem>>, vector<16x128xf32>,
    %114 = vector.extract_strided_slice %101 {offsets = [0, 768], sizes = [16, 128], strides = [1, 1]} : vector<16x1024xf32> to vector<16x128xf32>
    %c96 = arith.constant 96 : index
    %c0_50 = arith.constant 0 : index
    %115 = vector.load %arg9[%c96, %c0_50] : memref<128x128xf32, #tpu.memory_space<vmem>>, vector<16x128xf32>
    tpu.vector_store %arg9[%c96, %c0_50], %114 {strides = array<i32>} : memref<128x128xf32, #tpu.memory_space<vmem>>, vector<16x128xf32>,
    %116 = vector.extract_strided_slice %101 {offsets = [0, 896], sizes = [16, 128], strides = [1, 1]} : vector<16x1024xf32> to vector<16x128xf32>
    %c112 = arith.constant 112 : index
    %c0_51 = arith.constant 0 : index
    %117 = vector.load %arg9[%c112, %c0_51] : memref<128x128xf32, #tpu.memory_space<vmem>>, vector<16x128xf32>
    tpu.vector_store %arg9[%c112, %c0_51], %116 {strides = array<i32>} : memref<128x128xf32, #tpu.memory_space<vmem>>, vector<16x128xf32>,
    %c0_52 = arith.constant 0 : index
    %c0_53 = arith.constant 0 : index
    %118 = vector.load %arg9[%c0_52, %c0_53] : memref<128x128xf32, #tpu.memory_space<vmem>>, vector<128x128xf32>
    %c0_54 = arith.constant 0 : index
    %c0_55 = arith.constant 0 : index
    %119 = vector.load %arg3[%c0_54, %c0_55] : memref<128x128xf32, #tpu.memory_space<vmem>>, vector<128x128xf32>
    %cst_56 = arith.constant dense<0.000000e+00> : vector<128x128xf32>
    %120 = tpu.matmul %118, %119, %cst_56 {dimension_numbers = #tpu.dot_dimension_numbers<[1], [0], [0], [1], [0, 0, 1, 1], [], []>, precision = #tpu.contract_precision<fp32>} : vector<128x128xf32>, vector<128x128xf32>, vector<128x128xf32> -> vector<128x128xf32>
    %121 = vector.extract_strided_slice %120 {offsets = [0, 0], sizes = [16, 128], strides = [1, 1]} : vector<128x128xf32> to vector<16x128xf32>
    %122 = vector.extract_strided_slice %120 {offsets = [16, 0], sizes = [16, 128], strides = [1, 1]} : vector<128x128xf32> to vector<16x128xf32>
    %123 = vector.extract_strided_slice %120 {offsets = [32, 0], sizes = [16, 128], strides = [1, 1]} : vector<128x128xf32> to vector<16x128xf32>
    %124 = vector.extract_strided_slice %120 {offsets = [48, 0], sizes = [16, 128], strides = [1, 1]} : vector<128x128xf32> to vector<16x128xf32>
    %125 = vector.extract_strided_slice %120 {offsets = [64, 0], sizes = [16, 128], strides = [1, 1]} : vector<128x128xf32> to vector<16x128xf32>
    %126 = vector.extract_strided_slice %120 {offsets = [80, 0], sizes = [16, 128], strides = [1, 1]} : vector<128x128xf32> to vector<16x128xf32>
    %127 = vector.extract_strided_slice %120 {offsets = [96, 0], sizes = [16, 128], strides = [1, 1]} : vector<128x128xf32> to vector<16x128xf32>
    %128 = vector.extract_strided_slice %120 {offsets = [112, 0], sizes = [16, 128], strides = [1, 1]} : vector<128x128xf32> to vector<16x128xf32>
    %129 = arith.mulf %123, %123 : vector<16x128xf32>
    %130 = arith.subf %126, %129 : vector<16x128xf32>
    %131 = arith.mulf %121, %121 : vector<16x128xf32>
    %132 = arith.mulf %121, %123 : vector<16x128xf32>
    %133 = arith.subf %124, %131 : vector<16x128xf32>
    %134 = arith.subf %127, %132 : vector<16x128xf32>
    %cst_57 = arith.constant 2.000000e+00 : f32
    %135 = vector.broadcast %cst_57 : f32 to vector<16x128xf32>
    %136 = arith.mulf %135, %132 : vector<16x128xf32>
    %cst_58 = arith.constant 9.99999974E-5 : f32
    %137 = vector.broadcast %cst_58 : f32 to vector<16x128xf32>
    %138 = arith.addf %136, %137 : vector<16x128xf32>
    %cst_59 = arith.constant 2.000000e+00 : f32
    %139 = vector.broadcast %cst_59 : f32 to vector<16x128xf32>
    %140 = arith.mulf %139, %134 : vector<16x128xf32>
    %cst_60 = arith.constant 8.99999984E-4 : f32
    %141 = vector.broadcast %cst_60 : f32 to vector<16x128xf32>
    %142 = arith.addf %140, %141 : vector<16x128xf32>
    %143 = arith.mulf %138, %142 : vector<16x128xf32>
    %144 = arith.addf %131, %129 : vector<16x128xf32>
    %cst_61 = arith.constant 9.99999974E-5 : f32
    %145 = vector.broadcast %cst_61 : f32 to vector<16x128xf32>
    %146 = arith.addf %144, %145 : vector<16x128xf32>
    %147 = arith.addf %133, %130 : vector<16x128xf32>
    %cst_62 = arith.constant 8.99999984E-4 : f32
    %148 = vector.broadcast %cst_62 : f32 to vector<16x128xf32>
    %149 = arith.addf %147, %148 : vector<16x128xf32>
    %150 = arith.mulf %146, %149 : vector<16x128xf32>
    %151 = arith.divf %143, %150 : vector<16x128xf32>
    %152 = arith.mulf %18, %151 : vector<16x128xf32>
    %153 = vector.shape_cast %152 : vector<16x128xf32> to vector<1x16x128xf32>
    %cst_63 = arith.constant dense<0.000000e+00> : vector<1xf32>
    %154 = vector.multi_reduction <add>, %153, %cst_63 [1, 2] : vector<1x16x128xf32> to vector<1xf32>
    %155 = vector.shape_cast %154 : vector<1xf32> to vector<1x1x1xf32>
    %156 = vector.extract %155[0, 0, 0] : f32 from vector<1x1x1xf32>
    %157 = arith.mulf %122, %122 : vector<16x128xf32>
    %158 = arith.mulf %122, %123 : vector<16x128xf32>
    %159 = arith.subf %125, %157 : vector<16x128xf32>
    %160 = arith.subf %128, %158 : vector<16x128xf32>
    %cst_64 = arith.constant 2.000000e+00 : f32
    %161 = vector.broadcast %cst_64 : f32 to vector<16x128xf32>
    %162 = arith.mulf %161, %158 : vector<16x128xf32>
    %cst_65 = arith.constant 9.99999974E-5 : f32
    %163 = vector.broadcast %cst_65 : f32 to vector<16x128xf32>
    %164 = arith.addf %162, %163 : vector<16x128xf32>
    %cst_66 = arith.constant 2.000000e+00 : f32
    %165 = vector.broadcast %cst_66 : f32 to vector<16x128xf32>
    %166 = arith.mulf %165, %160 : vector<16x128xf32>
    %cst_67 = arith.constant 8.99999984E-4 : f32
    %167 = vector.broadcast %cst_67 : f32 to vector<16x128xf32>
    %168 = arith.addf %166, %167 : vector<16x128xf32>
    %169 = arith.mulf %164, %168 : vector<16x128xf32>
    %170 = arith.addf %157, %129 : vector<16x128xf32>
    %cst_68 = arith.constant 9.99999974E-5 : f32
    %171 = vector.broadcast %cst_68 : f32 to vector<16x128xf32>
    %172 = arith.addf %170, %171 : vector<16x128xf32>
    %173 = arith.addf %159, %130 : vector<16x128xf32>
    %cst_69 = arith.constant 8.99999984E-4 : f32
    %174 = vector.broadcast %cst_69 : f32 to vector<16x128xf32>
    %175 = arith.addf %173, %174 : vector<16x128xf32>
    %176 = arith.mulf %172, %175 : vector<16x128xf32>
    %177 = arith.divf %169, %176 : vector<16x128xf32>
    %178 = arith.mulf %18, %177 : vector<16x128xf32>
    %179 = vector.shape_cast %178 : vector<16x128xf32> to vector<1x16x128xf32>
    %cst_70 = arith.constant dense<0.000000e+00> : vector<1xf32>
    %180 = vector.multi_reduction <add>, %179, %cst_70 [1, 2] : vector<1x16x128xf32> to vector<1xf32>
    %181 = vector.shape_cast %180 : vector<1xf32> to vector<1x1x1xf32>
    %182 = vector.extract %181[0, 0, 0] : f32 from vector<1x1x1xf32>
    %c0_71 = arith.constant 0 : index
    %c0_72 = arith.constant 0 : index
    %c0_73 = arith.constant 0 : index
    %183 = memref.load %arg7[%c0_71, %c0_72, %c0_73] : memref<1x1x4xf32, #tpu.memory_space<smem>>
    memref.store %58, %arg7[%c0_71, %c0_72, %c0_73] : memref<1x1x4xf32, #tpu.memory_space<smem>>
    %c0_74 = arith.constant 0 : index
    %c0_75 = arith.constant 0 : index
    %c1 = arith.constant 1 : index
    %184 = memref.load %arg7[%c0_74, %c0_75, %c1] : memref<1x1x4xf32, #tpu.memory_space<smem>>
    memref.store %85, %arg7[%c0_74, %c0_75, %c1] : memref<1x1x4xf32, #tpu.memory_space<smem>>
    %c0_76 = arith.constant 0 : index
    %c0_77 = arith.constant 0 : index
    %c2 = arith.constant 2 : index
    %185 = memref.load %arg7[%c0_76, %c0_77, %c2] : memref<1x1x4xf32, #tpu.memory_space<smem>>
    memref.store %156, %arg7[%c0_76, %c0_77, %c2] : memref<1x1x4xf32, #tpu.memory_space<smem>>
    %c0_78 = arith.constant 0 : index
    %c0_79 = arith.constant 0 : index
    %c3 = arith.constant 3 : index
    %186 = memref.load %arg7[%c0_78, %c0_79, %c3] : memref<1x1x4xf32, #tpu.memory_space<smem>>
    memref.store %182, %arg7[%c0_78, %c0_79, %c3] : memref<1x1x4xf32, #tpu.memory_space<smem>>
    return
  }
  func.func @transform_0(%arg0: i32, %arg1: i32) -> (i32, i32) {
    %c0_i32 = arith.constant 0 : i32
    %c0_i32_0 = arith.constant 0 : i32
    %c0_i32_1 = arith.constant 0 : i32
    return %c0_i32, %c0_i32_0 : i32, i32
  }
  func.func @transform_1(%arg0: i32, %arg1: i32) -> (i32, i32) {
    %c0_i32 = arith.constant 0 : i32
    %c0_i32_0 = arith.constant 0 : i32
    %c0_i32_1 = arith.constant 0 : i32
    return %c0_i32, %c0_i32_0 : i32, i32
  }
  func.func @transform_2(%arg0: i32, %arg1: i32) -> (i32, i32, i32, i32) {
    %c0_i32 = arith.constant 0 : i32
    %c0_i32_0 = arith.constant 0 : i32
    %c0_i32_1 = arith.constant 0 : i32
    return %arg0, %arg1, %c0_i32, %c0_i32_0 : i32, i32, i32, i32
  }
  func.func @transform_3(%arg0: i32, %arg1: i32) -> (i32, i32, i32, i32) {
    %c0_i32 = arith.constant 0 : i32
    %c0_i32_0 = arith.constant 0 : i32
    %c0_i32_1 = arith.constant 0 : i32
    return %arg0, %arg1, %c0_i32, %c0_i32_0 : i32, i32, i32, i32
  }
  func.func @transform_4(%arg0: i32, %arg1: i32) -> (i32, i32, i32, i32) {
    %c0_i32 = arith.constant 0 : i32
    %c0_i32_0 = arith.constant 0 : i32
    %c0_i32_1 = arith.constant 0 : i32
    return %arg0, %arg1, %c0_i32, %c0_i32_0 : i32, i32, i32, i32
  }
  func.func @transform_5(%arg0: i32, %arg1: i32) -> (i32, i32, i32) {
    %c0_i32 = arith.constant 0 : i32
    %c0_i32_0 = arith.constant 0 : i32
    return %arg0, %arg1, %c0_i32 : i32, i32, i32
  }
}

</mosaic_0001>

<llo_original>
// kernel: l_ssim_loss.1
$region0: #{l_ssim_loss.1}
  #allocation0 [shape = 'u32[]', space=smem, size = 0x4, offset = 0x4, fixed_abs, tag = 'smem constant byte address 0x4 - core index']
  #allocation1 [shape = 'u32[144,128]{1,0:T(1,128)}', space=vmem, size = 0x12000, scoped, tag = 'internal scratch']
  #allocation2 [shape = 'f32[32,1024]{1,0:T(8,128)}', space=vmem, size = 0x20000, scoped, tag = 'scratch operand']
  #allocation3 [shape = 'f32[128,128]{1,0:T(8,128)}', space=vmem, size = 0x10000, scoped, tag = 'scratch operand']
  %s0 = inlined_call_operand.vmem [shape: f32[16,32], index: 0, kind: input, shape index: {}]
  %s1 = inlined_call_operand.vmem [shape: f32[128,128], index: 1, kind: input, shape index: {}]
  %s2 = inlined_call_operand.vmem [shape: f32[2,1,32,128], index: 2, kind: input, shape index: {}]
  %s3 = inlined_call_operand.vmem [shape: f32[2,1,32,128], index: 3, kind: input, shape index: {}]
  %s4 = inlined_call_operand.vmem [shape: f32[2,1,32,128], index: 4, kind: input, shape index: {}]
  %s5 = inlined_call_operand.vmem [shape: f32[2,1,4], index: 5, kind: output, shape index: {}]
  %s6 = sld [smem:[#allocation0]]
  $region53: #{l_ssim_loss.1} parent=0
    _
  %s8 = ssub.s32 1, %s6
  %s9 = scalar_select 0, %s8, %s6
  $region1: #{l_ssim_loss.1} parent=0
    #allocation4 [shape = 'u8[1024]{0}', space=smem, size = 0x400, scoped, tag = 'output window, operand 0']
    #allocation5 [shape = 's32[2]{0}', space=sflag, size = 0x8, scoped, tag = 'scoped memory for l_ssim_loss.1']
    %10 = vsyncpa [#allocation5], 0
    %s11 = scalar_lea.sflag [#allocation5], 1
    %12 = vsyncpa %s11, 0
    loop: start=0, step=1, limit=4
    $region2: #{l_ssim_loss.1} parent=1 // loop_pre_header
      _
    $region3: #{l_ssim_loss.1} parent=1 // loop_header
      %s14 = sphi 0, %s18
      %p15 = scmp.ge.s32.totalorder %s14, 4
      %s21 = sphi 0, %s33
      %s22 = sphi 0, %s29
      %s23 = sphi 0, %s21
      %s24 = sphi 0, %s22
      %s25 = sphi 0, %s23
      %s26 = sphi 0, %s24
      %s34 = sphi 0, %s34
      %s36 = sphi 0, %s34
      %s37 = sphi 0, %s36
      %s51 = sphi 0, %s37
      %s55 = sphi 0, %s55
      %s57 = sphi 0, %s55
      %s58 = sphi 0, %s57
      %s72 = sphi 0, %s58
      %s80 = sphi 0, %s82
      %s83 = sphi 0, %s80
      %s84 = sphi 0, %s83
      %s100 = sphi 0, %s84
      %s108 = sphi 0, %s110
      %s111 = sphi 0, %s108
      %s112 = sphi 0, %s111
      %s128 = sphi 0, %s112
      %s136 = sphi 0, %s138
      %s139 = sphi 0, %s136
      %s140 = sphi 0, %s139
      %s156 = sphi 0, %s140
      %s164 = sphi 0, %s166
      %s167 = sphi 0, %s164
      %s168 = sphi 0, %s167
      %s184 = sphi 0, %s168
    $region4: #{l_ssim_loss.1} parent=1 // loop_header_branch
      %17 = sbr.rel (%p15) target = $region8
    $region5: #{l_ssim_loss.1} parent=1 // loop_body
      %s19 = ssub.s32 %s14, 1
      %s20 = ssub.s32 %s14, 2
      %s27 = sadd.s32 1, %s22
      %p28 = scmp.ge.s32.totalorder %s27, 1
      %s29 = scalar_select %p28, 0, %s27
      %s30 = sadd.s32 1, %s21
      %s31 = scalar_select %p28, %s30, %s21
      %p32 = scmp.ge.s32.totalorder %s31, 2
      %s33 = scalar_select %p32, 0, %s31
      %s35 = sadd.s32 %s34, 1
      %p38 = scmp.eq.s32.totalorder %s14, 1
      %p39 = scmp.ne.s32.totalorder %s34, %s36
      %p40 = scmp.eq.s32.totalorder %s14, 0
      %p41 = por %p39, %p40
      %p42 = scmp.ne.s32.totalorder %s34, %s36
      %p43 = scmp.eq.s32.totalorder %s19, 1
      %p44 = por %p42, %p43
      %p45 = scmp.ne.s32.totalorder %s36, %s37
      %p46 = scmp.eq.s32.totalorder %s19, 0
      %p47 = por %p45, %p46
      %p48 = scmp.ne.s32.totalorder %s36, %s37
      %p49 = scmp.eq.s32.totalorder %s20, 1
      %p50 = por %p48, %p49
      %p52 = scmp.ne.s32.totalorder %s37, %s51
      %p53 = scmp.eq.s32.totalorder %s20, 0
      %p54 = por %p52, %p53
      %s56 = sadd.s32 %s55, 1
      %p59 = scmp.eq.s32.totalorder %s14, 1
      %p60 = scmp.ne.s32.totalorder %s55, %s57
      %p61 = scmp.eq.s32.totalorder %s14, 0
      %p62 = por %p60, %p61
      %p63 = scmp.ne.s32.totalorder %s55, %s57
      %p64 = scmp.eq.s32.totalorder %s19, 1
      %p65 = por %p63, %p64
      %p66 = scmp.ne.s32.totalorder %s57, %s58
      %p67 = scmp.eq.s32.totalorder %s19, 0
      %p68 = por %p66, %p67
      %p69 = scmp.ne.s32.totalorder %s57, %s58
      %p70 = scmp.eq.s32.totalorder %s20, 1
      %p71 = por %p69, %p70
      %p73 = scmp.ne.s32.totalorder %s58, %s72
      %p74 = scmp.eq.s32.totalorder %s20, 0
      %p75 = por %p73, %p74
      %s76 = ssub.s32 %s21, %s33
      %s77 = ssub.s32 %s22, %s29
      %s78 = sor.u32 %s76, %s77
      %p79 = scmp.eq.s32.totalorder %s78, 0
      %s81 = sadd.s32 %s80, 1
      %s82 = scalar_select %p79, %s80, %s81
      %p85 = pneg %p79
      %p86 = scmp.eq.s32.totalorder %s14, 1
      %p87 = por %p85, %p86
      %p88 = scmp.ne.s32.totalorder %s80, %s83
      %p89 = scmp.eq.s32.totalorder %s14, 0
      %p90 = por %p88, %p89
      %p91 = scmp.ne.s32.totalorder %s80, %s83
      %p92 = scmp.eq.s32.totalorder %s19, 1
      %p93 = por %p91, %p92
      %p94 = scmp.ne.s32.totalorder %s83, %s84
      %p95 = scmp.eq.s32.totalorder %s19, 0
      %p96 = por %p94, %p95
      %p97 = scmp.ne.s32.totalorder %s83, %s84
      %p98 = scmp.eq.s32.totalorder %s20, 1
      %p99 = por %p97, %p98
      %p101 = scmp.ne.s32.totalorder %s84, %s100
      %p102 = scmp.eq.s32.totalorder %s20, 0
      %p103 = por %p101, %p102
      %s104 = ssub.s32 %s21, %s33
      %s105 = ssub.s32 %s22, %s29
      %s106 = sor.u32 %s104, %s105
      %p107 = scmp.eq.s32.totalorder %s106, 0
      %s109 = sadd.s32 %s108, 1
      %s110 = scalar_select %p107, %s108, %s109
      %p113 = pneg %p107
      %p114 = scmp.eq.s32.totalorder %s14, 1
      %p115 = por %p113, %p114
      %p116 = scmp.ne.s32.totalorder %s108, %s111
      %p117 = scmp.eq.s32.totalorder %s14, 0
      %p118 = por %p116, %p117
      %p119 = scmp.ne.s32.totalorder %s108, %s111
      %p120 = scmp.eq.s32.totalorder %s19, 1
      %p121 = por %p119, %p120
      %p122 = scmp.ne.s32.totalorder %s111, %s112
      %p123 = scmp.eq.s32.totalorder %s19, 0
      %p124 = por %p122, %p123
      %p125 = scmp.ne.s32.totalorder %s111, %s112
      %p126 = scmp.eq.s32.totalorder %s20, 1
      %p127 = por %p125, %p126
      %p129 = scmp.ne.s32.totalorder %s112, %s128
      %p130 = scmp.eq.s32.totalorder %s20, 0
      %p131 = por %p129, %p130
      %s132 = ssub.s32 %s21, %s33
      %s133 = ssub.s32 %s22, %s29
      %s134 = sor.u32 %s132, %s133
      %p135 = scmp.eq.s32.totalorder %s134, 0
      %s137 = sadd.s32 %s136, 1
      %s138 = scalar_select %p135, %s136, %s137
      %p141 = pneg %p135
      %p142 = scmp.eq.s32.totalorder %s14, 1
      %p143 = por %p141, %p142
      %p144 = scmp.ne.s32.totalorder %s136, %s139
      %p145 = scmp.eq.s32.totalorder %s14, 0
      %p146 = por %p144, %p145
      %p147 = scmp.ne.s32.totalorder %s136, %s139
      %p148 = scmp.eq.s32.totalorder %s19, 1
      %p149 = por %p147, %p148
      %p150 = scmp.ne.s32.totalorder %s139, %s140
      %p151 = scmp.eq.s32.totalorder %s19, 0
      %p152 = por %p150, %p151
      %p153 = scmp.ne.s32.totalorder %s139, %s140
      %p154 = scmp.eq.s32.totalorder %s20, 1
      %p155 = por %p153, %p154
      %p157 = scmp.ne.s32.totalorder %s140, %s156
      %p158 = scmp.eq.s32.totalorder %s20, 0
      %p159 = por %p157, %p158
      %s160 = ssub.s32 %s21, %s33
      %s161 = ssub.s32 %s22, %s29
      %s162 = sor.u32 %s160, %s161
      %p163 = scmp.eq.s32.totalorder %s162, 0
      %s165 = sadd.s32 %s164, 1
      %s166 = scalar_select %p163, %s164, %s165
      %p169 = pneg %p163
      %p170 = scmp.eq.s32.totalorder %s14, 1
      %p171 = por %p169, %p170
      %p172 = scmp.ne.s32.totalorder %s164, %s167
      %p173 = scmp.eq.s32.totalorder %s14, 0
      %p174 = por %p172, %p173
      %p175 = scmp.ne.s32.totalorder %s164, %s167
      %p176 = scmp.eq.s32.totalorder %s19, 1
      %p177 = por %p175, %p176
      %p178 = scmp.ne.s32.totalorder %s167, %s168
      %p179 = scmp.eq.s32.totalorder %s19, 0
      %p180 = por %p178, %p179
      %p181 = scmp.ne.s32.totalorder %s167, %s168
      %p182 = scmp.eq.s32.totalorder %s20, 1
      %p183 = por %p181, %p182
      %p185 = scmp.ne.s32.totalorder %s168, %s184
      %p186 = scmp.eq.s32.totalorder %s20, 0
      %p187 = por %p185, %p186
      %p188 = scmp.le.s32.totalorder 1, %s14
      %p189 = scmp.lt.s32.totalorder %s14, 3
      %p190 = pnand %p188, %p189
      %p191 = pneg %p190
      // Predicated region
      $region9: #{l_ssim_loss.1} parent=5 // pred_check
        _
      $region10: #{l_ssim_loss.1} parent=5 // pred_check_branch
        %193 = sbr.rel (%p190) target = $region12
      $region11: #{l_ssim_loss.1} parent=5 // pred_region
        %s194 = ssub.s32 %s14, 1
        // Predicated region
        $region13: #{l_ssim_loss.1} parent=11 // pred_check
          %p195 = pneg %p47
        $region14: #{l_ssim_loss.1} parent=11 // pred_check_branch
          %197 = sbr.rel (%p195) target = $region16
        $region15: #{l_ssim_loss.1} parent=11 // pred_region
          _
        $region16: #{l_ssim_loss.1} parent=11 // pred_fallthru
          _
        // Predicated region
        $region17: #{l_ssim_loss.1} parent=11 // pred_check
          %p198 = pneg %p68
        $region18: #{l_ssim_loss.1} parent=11 // pred_check_branch
          %200 = sbr.rel (%p198) target = $region20
        $region19: #{l_ssim_loss.1} parent=11 // pred_region
          _
        $region20: #{l_ssim_loss.1} parent=11 // pred_fallthru
          _
      $region12: #{l_ssim_loss.1} parent=5 // pred_fallthru
        _
      %p201 = scmp.lt.s32.totalorder %s14, 2
      // Predicated region
      $region21: #{l_ssim_loss.1} parent=5 // pred_check
        %p202 = pneg %p201
      $region22: #{l_ssim_loss.1} parent=5 // pred_check_branch
        %204 = sbr.rel (%p202) target = $region24
      $region23: #{l_ssim_loss.1} parent=5 // pred_region
        // Predicated region
        $region25: #{l_ssim_loss.1} parent=23 // pred_check
          %p205 = pneg %p90
        $region26: #{l_ssim_loss.1} parent=23 // pred_check_branch
          %207 = sbr.rel (%p205) target = $region28
        $region27: #{l_ssim_loss.1} parent=23 // pred_region
          %p208 = scmp.lt.s32.totalorder %s21, 1
          %s209 = scalar_select %p208, %s21, 1
          %p210 = scmp.lt.s32.totalorder %s22, 0
          %s211 = scalar_select %p210, %s22, 0
          %s212 = smul.addr %s211, 4
          %s213 = smul.addr %s209, 4
          %s214 = sadd.s32 %s212, %s213
          %s215 = smul.addr %s214, 8
          %s216 = scalar_lea.vmem %s2, %s215
        $region28: #{l_ssim_loss.1} parent=23 // pred_fallthru
          _
        // Predicated region
        $region29: #{l_ssim_loss.1} parent=23 // pred_check
          %p217 = pneg %p118
        $region30: #{l_ssim_loss.1} parent=23 // pred_check_branch
          %219 = sbr.rel (%p217) target = $region32
        $region31: #{l_ssim_loss.1} parent=23 // pred_region
          %p220 = scmp.lt.s32.totalorder %s21, 1
          %s221 = scalar_select %p220, %s21, 1
          %p222 = scmp.lt.s32.totalorder %s22, 0
          %s223 = scalar_select %p222, %s22, 0
          %s224 = smul.addr %s223, 4
          %s225 = smul.addr %s221, 4
          %s226 = sadd.s32 %s224, %s225
          %s227 = smul.addr %s226, 8
          %s228 = scalar_lea.vmem %s3, %s227
        $region32: #{l_ssim_loss.1} parent=23 // pred_fallthru
          _
        // Predicated region
        $region33: #{l_ssim_loss.1} parent=23 // pred_check
          %p229 = pneg %p146
        $region34: #{l_ssim_loss.1} parent=23 // pred_check_branch
          %231 = sbr.rel (%p229) target = $region36
        $region35: #{l_ssim_loss.1} parent=23 // pred_region
          %p232 = scmp.lt.s32.totalorder %s21, 1
          %s233 = scalar_select %p232, %s21, 1
          %p234 = scmp.lt.s32.totalorder %s22, 0
          %s235 = scalar_select %p234, %s22, 0
          %s236 = smul.addr %s235, 4
          %s237 = smul.addr %s233, 4
          %s238 = sadd.s32 %s236, %s237
          %s239 = smul.addr %s238, 8
          %s240 = scalar_lea.vmem %s4, %s239
        $region36: #{l_ssim_loss.1} parent=23 // pred_fallthru
          _
      $region24: #{l_ssim_loss.1} parent=5 // pred_fallthru
        _
      %p241 = scmp.le.s32.totalorder 1, %s14
      %p242 = scmp.lt.s32.totalorder %s14, 3
      %p243 = pnand %p241, %p242
      %p244 = pneg %p243
      // Predicated region
      $region37: #{l_ssim_loss.1} parent=5 // pred_check
        _
      $region38: #{l_ssim_loss.1} parent=5 // pred_check_branch
        %246 = sbr.rel (%p243) target = $region40
      $region39: #{l_ssim_loss.1} parent=5 // pred_region
        %s247 = ssub.s32 %s14, 1
        %p248 = pneg %p47
        %p249 = pneg %p44
        %p250 = pneg %p68
        %p251 = pneg %p65
        %p252 = scmp.lt.s32.totalorder %s23, 1
        %s253 = scalar_select %p252, %s23, 1
        %p254 = scmp.lt.s32.totalorder %s24, 0
        %s255 = scalar_select %p254, %s24, 0
        %s256 = smul.addr %s255, 4
        %s257 = smul.addr %s253, 4
        %s258 = sadd.s32 %s256, %s257
        %s259 = smul.addr %s258, 8
        %s260 = scalar_lea.vmem %s2, %s259
        %p261 = pneg %p96
        %p262 = pneg %p93
        %p263 = scmp.lt.s32.totalorder %s23, 1
        %s264 = scalar_select %p263, %s23, 1
        %p265 = scmp.lt.s32.totalorder %s24, 0
        %s266 = scalar_select %p265, %s24, 0
        %s267 = smul.addr %s266, 4
        %s268 = smul.addr %s264, 4
        %s269 = sadd.s32 %s267, %s268
        %s270 = smul.addr %s269, 8
        %s271 = scalar_lea.vmem %s3, %s270
        %p272 = pneg %p124
        %p273 = pneg %p121
        %p274 = scmp.lt.s32.totalorder %s23, 1
        %s275 = scalar_select %p274, %s23, 1
        %p276 = scmp.lt.s32.totalorder %s24, 0
        %s277 = scalar_select %p276, %s24, 0
        %s278 = smul.addr %s277, 4
        %s279 = smul.addr %s275, 4
        %s280 = sadd.s32 %s278, %s279
        %s281 = smul.addr %s280, 8
        %s282 = scalar_lea.vmem %s4, %s281
        %p283 = pneg %p152
        %p284 = pneg %p149
        %p285 = pneg %p180
        %p286 = pneg %p177
        %s287 = sand.u32 %s167, 1
        %s288 = scalar_lea.sflag [#allocation5], %s287
        %s289 = sand.u32 %s167, 1
        %s290 = smul.addr %s289, 128
        %s291 = scalar_lea.smem [#allocation4], %s290
        %p292 = scmp.lt.s32.totalorder %s23, 1
        %s293 = scalar_select %p292, %s23, 1
        %p294 = scmp.lt.s32.totalorder %s24, 0
        %s295 = scalar_select %p294, %s24, 0
        %s296 = smul.addr %s295, 4
        %s297 = smul.addr %s293, 4
        %s298 = sadd.s32 %s296, %s297
        %s299 = smul.addr %s298, 8
        %s300 = scalar_lea.vmem %s2, %s299
        %p301 = scmp.lt.s32.totalorder %s23, 1
        %s302 = scalar_select %p301, %s23, 1
        %p303 = scmp.lt.s32.totalorder %s24, 0
        %s304 = scalar_select %p303, %s24, 0
        %s305 = smul.addr %s304, 4
        %s306 = smul.addr %s302, 4
        %s307 = sadd.s32 %s305, %s306
        %s308 = smul.addr %s307, 8
        %s309 = scalar_lea.vmem %s3, %s308
        %p310 = scmp.lt.s32.totalorder %s23, 1
        %s311 = scalar_select %p310, %s23, 1
        %p312 = scmp.lt.s32.totalorder %s24, 0
        %s313 = scalar_select %p312, %s24, 0
        %s314 = smul.addr %s313, 4
        %s315 = smul.addr %s311, 4
        %s316 = sadd.s32 %s314, %s315
        %s317 = smul.addr %s316, 8
        %s318 = scalar_lea.vmem %s4, %s317
        %v319 = vld [vmem:[%s300] sm:$0xff]
        %v320 = vld [vmem:[%s300 + $0x8] sm:$0xff]
        %v321 = vld [vmem:[%s300 + $0x10] sm:$0xff]
        %v322 = vld [vmem:[%s300 + $0x18] sm:$0xff]
        %v323 = vld [vmem:[%s309] sm:$0xff]
        %v324 = vld [vmem:[%s309 + $0x8] sm:$0xff]
        %v325 = vld [vmem:[%s309 + $0x10] sm:$0xff]
        %v326 = vld [vmem:[%s309 + $0x18] sm:$0xff]
        %v327 = vld [vmem:[%s318] sm:$0xff]
        %v328 = vld [vmem:[%s318 + $0x8] sm:$0xff]
        %v329 = vld [vmem:[%s318 + $0x10] sm:$0xff]
        %v330 = vld [vmem:[%s318 + $0x18] sm:$0xff]
        %s331 = smul.u32 %s24, 16
        %s332 = ssub.s32 16, %s331
        %p333 = scmp.lt.s32.totalorder %s332, 16
        %s334 = scalar_select %p333, %s332, 16
        %v335 = vlaneseq
        %v336 = vshrl.u32 %v335, 7
        %v337 = vadd.s32 %v336, 8
        %v338 = vlaneseq
        %v339 = vand.u32 %v338, 127
        %v340 = vstv %s334
        %vm341 = vcmp.lt.s32.totalorder %v336, %v340
        %vm342 = vcmp.lt.s32.totalorder %v337, %v340
        %vm343 = vcmp.lt.s32.totalorder %v339, 16
        %vm344 = vmand %vm341, %vm343
        %vm345 = vmand %vm342, %vm343
        %v346 = vsel %vm344, 1.0, 0.0
        %v347 = vsel %vm345, 1.0, 0.0
        %vm348 = vcmp.ge.s32.totalorder %v339, 5
        %vm349 = vmand %vm341, %vm348
        %vm350 = vmand %vm342, %vm348
        %vm351 = vcmp.lt.s32.totalorder %v339, 21
        %vm352 = vmand %vm349, %vm351
        %vm353 = vmand %vm350, %vm351
        %v354 = vsel %vm352, 1.0, 0.0
        %v355 = vsel %vm353, 1.0, 0.0
        %v356 = vmul.f32 %v319, 2.0
        %v357 = vmul.f32 %v320, 2.0
        %v358 = vmul.f32 %v321, 2.0
        %vm362 = vcmask 1046528
        %v363 = vrot.slane %v356, 1
        %v364 = vrot.slane %v357, 1
        %v365 = vsel %vm362, %v363, %v364
        %v366 = vrot.slane %v358, 1
        %v367 = vsel %vm362, %v364, %v366
        %v371 = vadd.f32 %v319, %v365
        %v372 = vadd.f32 %v320, %v367
        %v373 = vadd.f32 %v321, %v366
        %vm377 = vcmask 1045504
        %v378 = vrot.slane %v319, 2
        %v379 = vrot.slane %v320, 2
        %v380 = vsel %vm377, %v378, %v379
        %v381 = vrot.slane %v321, 2
        %v382 = vsel %vm377, %v379, %v381
        %v386 = vadd.f32 %v371, %v380
        %v387 = vadd.f32 %v372, %v382
        %v388 = vadd.f32 %v373, %v381
        %v389 = vsub.f32 %v319, %v380
        %v390 = vsub.f32 %v320, %v382
        %v391 = vsub.f32 %v321, %v381
        %vm395 = vcmask 1043456
        %v396 = vrot.slane %v386, 4
        %v397 = vrot.slane %v387, 4
        %v398 = vsel %vm395, %v396, %v397
        %v399 = vrot.slane %v388, 4
        %v400 = vsel %vm395, %v397, %v399
        %403 = vrot.lane.b32.xlu0 %v398, 1
        %v404 = vpop.permute.xlu0 %403
        %405 = vrot.lane.b32.xlu0 %v400, 1
        %v406 = vpop.permute.xlu0 %405
        %407 = vrot.lane.b32.xlu0 %v398, 127
        %v408 = vpop.permute.xlu0 %407
        %409 = vrot.lane.b32.xlu0 %v400, 127
        %v410 = vpop.permute.xlu0 %409
        %v414 = vrot.slane %v389, 4
        %v415 = vrot.slane %v390, 4
        %v416 = vsel %vm395, %v414, %v415
        %v417 = vrot.slane %v391, 4
        %v418 = vsel %vm395, %v415, %v417
        %421 = vrot.lane.b32.xlu0 %v416, 1
        %v422 = vpop.permute.xlu0 %421
        %423 = vrot.lane.b32.xlu0 %v418, 1
        %v424 = vpop.permute.xlu0 %423
        %425 = vrot.lane.b32.xlu0 %v416, 127
        %v426 = vpop.permute.xlu0 %425
        %427 = vrot.lane.b32.xlu0 %v418, 127
        %v428 = vpop.permute.xlu0 %427
        %v429 = vsub.f32 %v408, %v404
        %v430 = vsub.f32 %v410, %v406
        %v431 = vmul.f32 %v389, 2.0
        %v432 = vmul.f32 %v390, 2.0
        %v433 = vmul.f32 %v391, 2.0
        %v437 = vrot.slane %v431, 4
        %v438 = vrot.slane %v432, 4
        %v439 = vsel %vm395, %v437, %v438
        %v440 = vrot.slane %v433, 4
        %v441 = vsel %vm395, %v438, %v440
        %v444 = vadd.f32 %v422, %v439
        %v445 = vadd.f32 %v424, %v441
        %v446 = vadd.f32 %v444, %v426
        %v447 = vadd.f32 %v445, %v428
        %v448 = vand.u32 2147483647, %v429
        %v449 = vand.u32 2147483647, %v430
        %v450 = vand.u32 2147483647, %v446
        %v451 = vand.u32 2147483647, %v447
        %v452 = vadd.f32 %v448, %v450
        %v453 = vadd.f32 %v449, %v451
        %v454 = vmul.f32 %v354, %v452
        %v455 = vmul.f32 %v355, %v453
        %v456 = vadd.f32 %v454, %v455
        %457 = vadd.xlane.f32.xlu0 %v456
        %v458 = vpop.xlane.xlu0 %457
        %v459 = vrot.slane %v458, 4
        %v460 = vadd.f32 %v458, %v459
        %v461 = vrot.slane %v460, 2
        %v462 = vadd.f32 %v460, %v461
        %v463 = vrot.slane %v462, 1
        %v464 = vadd.f32 %v462, %v463
        %s465 = vtos %v464
        %v466 = vmul.f32 %v323, 2.0
        %v467 = vmul.f32 %v324, 2.0
        %v468 = vmul.f32 %v325, 2.0
        %v472 = vrot.slane %v466, 1
        %v473 = vrot.slane %v467, 1
        %v474 = vsel %vm362, %v472, %v473
        %v475 = vrot.slane %v468, 1
        %v476 = vsel %vm362, %v473, %v475
        %v480 = vadd.f32 %v323, %v474
        %v481 = vadd.f32 %v324, %v476
        %v482 = vadd.f32 %v325, %v475
        %v486 = vrot.slane %v323, 2
        %v487 = vrot.slane %v324, 2
        %v488 = vsel %vm377, %v486, %v487
        %v489 = vrot.slane %v325, 2
        %v490 = vsel %vm377, %v487, %v489
        %v494 = vadd.f32 %v480, %v488
        %v495 = vadd.f32 %v481, %v490
        %v496 = vadd.f32 %v482, %v489
        %v497 = vsub.f32 %v323, %v488
        %v498 = vsub.f32 %v324, %v490
        %v499 = vsub.f32 %v325, %v489
        %v503 = vrot.slane %v494, 4
        %v504 = vrot.slane %v495, 4
        %v505 = vsel %vm395, %v503, %v504
        %v506 = vrot.slane %v496, 4
        %v507 = vsel %vm395, %v504, %v506
        %510 = vrot.lane.b32.xlu0 %v505, 1
        %v511 = vpop.permute.xlu0 %510
        %512 = vrot.lane.b32.xlu0 %v507, 1
        %v513 = vpop.permute.xlu0 %512
        %514 = vrot.lane.b32.xlu0 %v505, 127
        %v515 = vpop.permute.xlu0 %514
        %516 = vrot.lane.b32.xlu0 %v507, 127
        %v517 = vpop.permute.xlu0 %516
        %v521 = vrot.slane %v497, 4
        %v522 = vrot.slane %v498, 4
        %v523 = vsel %vm395, %v521, %v522
        %v524 = vrot.slane %v499, 4
        %v525 = vsel %vm395, %v522, %v524
        %528 = vrot.lane.b32.xlu0 %v523, 1
        %v529 = vpop.permute.xlu0 %528
        %530 = vrot.lane.b32.xlu0 %v525, 1
        %v531 = vpop.permute.xlu0 %530
        %532 = vrot.lane.b32.xlu0 %v523, 127
        %v533 = vpop.permute.xlu0 %532
        %534 = vrot.lane.b32.xlu0 %v525, 127
        %v535 = vpop.permute.xlu0 %534
        %v536 = vsub.f32 %v515, %v511
        %v537 = vsub.f32 %v517, %v513
        %v538 = vmul.f32 %v497, 2.0
        %v539 = vmul.f32 %v498, 2.0
        %v540 = vmul.f32 %v499, 2.0
        %v544 = vrot.slane %v538, 4
        %v545 = vrot.slane %v539, 4
        %v546 = vsel %vm395, %v544, %v545
        %v547 = vrot.slane %v540, 4
        %v548 = vsel %vm395, %v545, %v547
        %v551 = vadd.f32 %v529, %v546
        %v552 = vadd.f32 %v531, %v548
        %v553 = vadd.f32 %v551, %v533
        %v554 = vadd.f32 %v552, %v535
        %v555 = vand.u32 2147483647, %v536
        %v556 = vand.u32 2147483647, %v537
        %v557 = vand.u32 2147483647, %v553
        %v558 = vand.u32 2147483647, %v554
        %v559 = vadd.f32 %v555, %v557
        %v560 = vadd.f32 %v556, %v558
        %v561 = vmul.f32 %v354, %v559
        %v562 = vmul.f32 %v355, %v560
        %v563 = vadd.f32 %v561, %v562
        %564 = vadd.xlane.f32.xlu0 %v563
        %v565 = vpop.xlane.xlu0 %564
        %v566 = vrot.slane %v565, 4
        %v567 = vadd.f32 %v565, %v566
        %v568 = vrot.slane %v567, 2
        %v569 = vadd.f32 %v567, %v568
        %v570 = vrot.slane %v569, 1
        %v571 = vadd.f32 %v569, %v570
        %s572 = vtos %v571
        %573 = vst [vmem:[#allocation2] sm:$0xff] %v319
        %574 = vst [vmem:[#allocation2 + $0x40] sm:$0xff] %v320
        %575 = vst [vmem:[#allocation2 + $0x80] sm:$0xff] %v321
        %576 = vst [vmem:[#allocation2 + $0xc0] sm:$0xff] %v322
        %577 = vst [vmem:[#allocation2 + $0x8] sm:$0xff] %v323
        %578 = vst [vmem:[#allocation2 + $0x48] sm:$0xff] %v324
        %579 = vst [vmem:[#allocation2 + $0x88] sm:$0xff] %v325
        %580 = vst [vmem:[#allocation2 + $0xc8] sm:$0xff] %v326
        %581 = vst [vmem:[#allocation2 + $0x10] sm:$0xff] %v327
        %582 = vst [vmem:[#allocation2 + $0x50] sm:$0xff] %v328
        %583 = vst [vmem:[#allocation2 + $0x90] sm:$0xff] %v329
        %584 = vst [vmem:[#allocation2 + $0xd0] sm:$0xff] %v330
        %v585 = vmul.f32 %v319, %v319
        %v586 = vmul.f32 %v320, %v320
        %v587 = vmul.f32 %v321, %v321
        %v588 = vmul.f32 %v322, %v322
        %589 = vst [vmem:[#allocation2 + $0x18] sm:$0xff] %v585
        %590 = vst [vmem:[#allocation2 + $0x58] sm:$0xff] %v586
        %591 = vst [vmem:[#allocation2 + $0x98] sm:$0xff] %v587
        %592 = vst [vmem:[#allocation2 + $0xd8] sm:$0xff] %v588
        %v593 = vmul.f32 %v323, %v323
        %v594 = vmul.f32 %v324, %v324
        %v595 = vmul.f32 %v325, %v325
        %v596 = vmul.f32 %v326, %v326
        %597 = vst [vmem:[#allocation2 + $0x20] sm:$0xff] %v593
        %598 = vst [vmem:[#allocation2 + $0x60] sm:$0xff] %v594
        %599 = vst [vmem:[#allocation2 + $0xa0] sm:$0xff] %v595
        %600 = vst [vmem:[#allocation2 + $0xe0] sm:$0xff] %v596
        %v601 = vmul.f32 %v327, %v327
        %v602 = vmul.f32 %v328, %v328
        %v603 = vmul.f32 %v329, %v329
        %v604 = vmul.f32 %v330, %v330
        %605 = vst [vmem:[#allocation2 + $0x28] sm:$0xff] %v601
        %606 = vst [vmem:[#allocation2 + $0x68] sm:$0xff] %v602
        %607 = vst [vmem:[#allocation2 + $0xa8] sm:$0xff] %v603
        %608 = vst [vmem:[#allocation2 + $0xe8] sm:$0xff] %v604
        %v609 = vmul.f32 %v319, %v327
        %v610 = vmul.f32 %v320, %v328
        %v611 = vmul.f32 %v321, %v329
        %v612 = vmul.f32 %v322, %v330
        %613 = vst [vmem:[#allocation2 + $0x30] sm:$0xff] %v609
        %614 = vst [vmem:[#allocation2 + $0x70] sm:$0xff] %v610
        %615 = vst [vmem:[#allocation2 + $0xb0] sm:$0xff] %v611
        %616 = vst [vmem:[#allocation2 + $0xf0] sm:$0xff] %v612
        %v617 = vmul.f32 %v323, %v327
        %v618 = vmul.f32 %v324, %v328
        %v619 = vmul.f32 %v325, %v329
        %v620 = vmul.f32 %v326, %v330
        %621 = vst [vmem:[#allocation2 + $0x38] sm:$0xff] %v617
        %622 = vst [vmem:[#allocation2 + $0x78] sm:$0xff] %v618
        %623 = vst [vmem:[#allocation2 + $0xb8] sm:$0xff] %v619
        %624 = vst [vmem:[#allocation2 + $0xf8] sm:$0xff] %v620
        %v625 = vld [vmem:[%s0] sm:$0xff]
        %v626 = vld [vmem:[%s0 + $0x8] sm:$0xff]
        %v627 = vld [vmem:[#allocation2] sm:$0xff]
        %v628 = vld [vmem:[#allocation2 + $0x8] sm:$0xff]
        %v629 = vld [vmem:[#allocation2 + $0x10] sm:$0xff]
        %v630 = vld [vmem:[#allocation2 + $0x18] sm:$0xff]
        %v631 = vld [vmem:[#allocation2 + $0x20] sm:$0xff]
        %v632 = vld [vmem:[#allocation2 + $0x28] sm:$0xff]
        %v633 = vld [vmem:[#allocation2 + $0x30] sm:$0xff]
        %v634 = vld [vmem:[#allocation2 + $0x38] sm:$0xff]
        %v635 = vld [vmem:[#allocation2 + $0x40] sm:$0xff]
        %v636 = vld [vmem:[#allocation2 + $0x48] sm:$0xff]
        %v637 = vld [vmem:[#allocation2 + $0x50] sm:$0xff]
        %v638 = vld [vmem:[#allocation2 + $0x58] sm:$0xff]
        %v639 = vld [vmem:[#allocation2 + $0x60] sm:$0xff]
        %v640 = vld [vmem:[#allocation2 + $0x68] sm:$0xff]
        %v641 = vld [vmem:[#allocation2 + $0x70] sm:$0xff]
        %v642 = vld [vmem:[#allocation2 + $0x78] sm:$0xff]
        %v643 = vld [vmem:[#allocation2 + $0x80] sm:$0xff]
        %v644 = vld [vmem:[#allocation2 + $0x88] sm:$0xff]
        %v645 = vld [vmem:[#allocation2 + $0x90] sm:$0xff]
        %v646 = vld [vmem:[#allocation2 + $0x98] sm:$0xff]
        %v647 = vld [vmem:[#allocation2 + $0xa0] sm:$0xff]
        %v648 = vld [vmem:[#allocation2 + $0xa8] sm:$0xff]
        %v649 = vld [vmem:[#allocation2 + $0xb0] sm:$0xff]
        %v650 = vld [vmem:[#allocation2 + $0xb8] sm:$0xff]
        %v651 = vld [vmem:[#allocation2 + $0xc0] sm:$0xff]
        %v652 = vld [vmem:[#allocation2 + $0xc8] sm:$0xff]
        %v653 = vld [vmem:[#allocation2 + $0xd0] sm:$0xff]
        %v654 = vld [vmem:[#allocation2 + $0xd8] sm:$0xff]
        %v655 = vld [vmem:[#allocation2 + $0xe0] sm:$0xff]
        %v656 = vld [vmem:[#allocation2 + $0xe8] sm:$0xff]
        %v657 = vld [vmem:[#allocation2 + $0xf0] sm:$0xff]
        %v658 = vld [vmem:[#allocation2 + $0xf8] sm:$0xff]
        %vm659 = vcmask 261120
        %v661 = vsel %vm659, %v625, 0
        %v664 = vsel %vm659, %v626, 0
        %666 = vmatprep.subr.mxu0 0.0
        %667 = vmatpush1.msra.mxu0 0.0
        %668 = vmatprep.subr.mxu0 0.0
        %669 = vmatpush1.msra.mxu0 0.0
        %670 = vmatprep.subr.mxu0 0.0
        %671 = vmatpush1.msra.mxu0 0.0
        %672 = vmatprep.subr.mxu0 0.0
        %673 = vmatpush1.msra.mxu0 0.0
        %674 = vmatprep.subr.mxu0 0.0
        %675 = vmatpush1.msra.mxu0 0.0
        %676 = vmatprep.subr.mxu0 0.0
        %677 = vmatpush1.msra.mxu0 0.0
        %678 = vmatprep.subr.mxu0 0.0
        %679 = vmatpush1.msra.mxu0 0.0
        %680 = vmatprep.subr.mxu0 0.0
        %681 = vmatpush1.msra.mxu0 0.0
        %682 = vmatprep.subr.mxu0 0.0
        %683 = vmatpush1.msra.mxu0 0.0
        %684 = vmatprep.subr.mxu0 0.0
        %685 = vmatpush1.msra.mxu0 0.0
        %686 = vmatprep.subr.mxu0 0.0
        %687 = vmatpush1.msra.mxu0 0.0
        %688 = vmatprep.subr.mxu0 0.0
        %689 = vmatpush1.msra.mxu0 0.0
        %v690 = vand.u32 %v652, 4294901760
        %691 = vmatprep.subr.mxu0 %v690
        %v692 = vand.u32 %v651, 4294901760
        %693 = vmatpush1.msra.mxu0 %v692
        %v694 = vand.u32 %v644, 4294901760
        %695 = vmatprep.subr.mxu0 %v694
        %v696 = vand.u32 %v643, 4294901760
        %697 = vmatpush1.msra.mxu0 %v696
        %v698 = vand.u32 %v636, 4294901760
        %699 = vmatprep.subr.mxu0 %v698
        %v700 = vand.u32 %v635, 4294901760
        %701 = vmatpush1.msra.mxu0 %v700
        %v702 = vand.u32 %v628, 4294901760
        %703 = vmatprep.subr.mxu0 %v702
        %v704 = vand.u32 %v627, 4294901760
        %705 = vmatpush1.msra.mxu0 %v704
        %706 = vmatprep.subr.mxu0 0.0
        %707 = vmatpush2.msra.mxu0 0.0
        %708 = vmatprep.subr.mxu0 0.0
        %709 = vmatpush2.msra.mxu0 0.0
        %710 = vmatprep.subr.mxu0 0.0
        %711 = vmatpush2.msra.mxu0 0.0
        %712 = vmatprep.subr.mxu0 0.0
        %713 = vmatpush2.msra.mxu0 0.0
        %714 = vmatprep.subr.mxu0 0.0
        %715 = vmatpush2.msra.mxu0 0.0
        %716 = vmatprep.subr.mxu0 0.0
        %717 = vmatpush2.msra.mxu0 0.0
        %718 = vmatprep.subr.mxu0 0.0
        %719 = vmatpush2.msra.mxu0 0.0
        %720 = vmatprep.subr.mxu0 0.0
        %721 = vmatpush2.msra.mxu0 0.0
        %722 = vmatprep.subr.mxu0 0.0
        %723 = vmatpush2.msra.mxu0 0.0
        %724 = vmatprep.subr.mxu0 0.0
        %725 = vmatpush2.msra.mxu0 0.0
        %726 = vmatprep.subr.mxu0 0.0
        %727 = vmatpush2.msra.mxu0 0.0
        %728 = vmatprep.subr.mxu0 0.0
        %729 = vmatpush2.msra.mxu0 0.0
        %730 = vmatprep.subr.mxu0 0.0
        %731 = vmatpush2.msra.mxu0 0.0
        %732 = vmatprep.subr.mxu0 0.0
        %733 = vmatpush2.msra.mxu0 0.0
        %734 = vmatprep.subr.mxu0 0.0
        %735 = vmatpush2.msra.mxu0 0.0
        %736 = vmatprep.subr.mxu0 0.0
        %737 = vmatpush2.msra.mxu0 0.0
        %738 = vmatprep.mubr.f32.mxu0 0.0
        %v739 = vand.u32 %v661, 4294901760
        %v740 = vsub.f32 %v661, %v739
        %v741 = vand.u32 %v740, 4294901760
        %v742 = vsub.f32 %v740, %v741
        %v743 = vand.u32 %v742, 4294901760
        %744 = vmatmul.mubr.f32.gmra.mxu0 %v743
        %v745 = vpop.f32.mrf.mxu0
        %v746 = vadd.f32 0.0, %v745
        %v747 = vpop.f32.mrf.mxu0
        %v748 = vadd.f32 0.0, %v747
        %749 = vmatprep.mubr.f32.mxu0 0.0
        %v750 = vand.u32 %v664, 4294901760
        %v751 = vsub.f32 %v664, %v750
        %v752 = vand.u32 %v751, 4294901760
        %v753 = vsub.f32 %v751, %v752
        %v754 = vand.u32 %v753, 4294901760
        %755 = vmatmul.mubr.f32.gmra.mxu0 %v754
        %v756 = vpop.f32.mrf.mxu0
        %v757 = vadd.f32 0.0, %v756
        %v758 = vpop.f32.mrf.mxu0
        %v759 = vadd.f32 0.0, %v758
        %760 = vdwg.mxu0
        %761 = vmatprep.subr.mxu0 0.0
        %762 = vmatpush1.msra.mxu0 0.0
        %763 = vmatprep.subr.mxu0 0.0
        %764 = vmatpush1.msra.mxu0 0.0
        %765 = vmatprep.subr.mxu0 0.0
        %766 = vmatpush1.msra.mxu0 0.0
        %767 = vmatprep.subr.mxu0 0.0
        %768 = vmatpush1.msra.mxu0 0.0
        %769 = vmatprep.subr.mxu0 0.0
        %770 = vmatpush1.msra.mxu0 0.0
        %771 = vmatprep.subr.mxu0 0.0
        %772 = vmatpush1.msra.mxu0 0.0
        %773 = vmatprep.subr.mxu0 0.0
        %774 = vmatpush1.msra.mxu0 0.0
        %775 = vmatprep.subr.mxu0 0.0
        %776 = vmatpush1.msra.mxu0 0.0
        %777 = vmatprep.subr.mxu0 0.0
        %778 = vmatpush1.msra.mxu0 0.0
        %779 = vmatprep.subr.mxu0 0.0
        %780 = vmatpush1.msra.mxu0 0.0
        %781 = vmatprep.subr.mxu0 0.0
        %782 = vmatpush1.msra.mxu0 0.0
        %783 = vmatprep.subr.mxu0 0.0
        %784 = vmatpush1.msra.mxu0 0.0
        %v785 = vand.u32 %v652, 4294901760
        %v786 = vsub.f32 %v652, %v785
        %v787 = vand.u32 %v786, 4294901760
        %v788 = vsub.f32 %v786, %v787
        %v789 = vand.u32 %v788, 4294901760
        %790 = vmatprep.subr.mxu0 %v789
        %v791 = vand.u32 %v651, 4294901760
        %v792 = vsub.f32 %v651, %v791
        %v793 = vand.u32 %v792, 4294901760
        %v794 = vsub.f32 %v792, %v793
        %v795 = vand.u32 %v794, 4294901760
        %796 = vmatpush1.msra.mxu0 %v795
        %v797 = vand.u32 %v644, 4294901760
        %v798 = vsub.f32 %v644, %v797
        %v799 = vand.u32 %v798, 4294901760
        %v800 = vsub.f32 %v798, %v799
        %v801 = vand.u32 %v800, 4294901760
        %802 = vmatprep.subr.mxu0 %v801
        %v803 = vand.u32 %v643, 4294901760
        %v804 = vsub.f32 %v643, %v803
        %v805 = vand.u32 %v804, 4294901760
        %v806 = vsub.f32 %v804, %v805
        %v807 = vand.u32 %v806, 4294901760
        %808 = vmatpush1.msra.mxu0 %v807
        %v809 = vand.u32 %v636, 4294901760
        %v810 = vsub.f32 %v636, %v809
        %v811 = vand.u32 %v810, 4294901760
        %v812 = vsub.f32 %v810, %v811
        %v813 = vand.u32 %v812, 4294901760
        %814 = vmatprep.subr.mxu0 %v813
        %v815 = vand.u32 %v635, 4294901760
        %v816 = vsub.f32 %v635, %v815
        %v817 = vand.u32 %v816, 4294901760
        %v818 = vsub.f32 %v816, %v817
        %v819 = vand.u32 %v818, 4294901760
        %820 = vmatpush1.msra.mxu0 %v819
        %v821 = vand.u32 %v628, 4294901760
        %v822 = vsub.f32 %v628, %v821
        %v823 = vand.u32 %v822, 4294901760
        %v824 = vsub.f32 %v822, %v823
        %v825 = vand.u32 %v824, 4294901760
        %826 = vmatprep.subr.mxu0 %v825
        %v827 = vand.u32 %v627, 4294901760
        %v828 = vsub.f32 %v627, %v827
        %v829 = vand.u32 %v828, 4294901760
        %v830 = vsub.f32 %v828, %v829
        %v831 = vand.u32 %v830, 4294901760
        %832 = vmatpush1.msra.mxu0 %v831
        %833 = vmatprep.subr.mxu0 0.0
        %834 = vmatpush2.msra.mxu0 0.0
        %835 = vmatprep.subr.mxu0 0.0
        %836 = vmatpush2.msra.mxu0 0.0
        %837 = vmatprep.subr.mxu0 0.0
        %838 = vmatpush2.msra.mxu0 0.0
        %839 = vmatprep.subr.mxu0 0.0
        %840 = vmatpush2.msra.mxu0 0.0
        %841 = vmatprep.subr.mxu0 0.0
        %842 = vmatpush2.msra.mxu0 0.0
        %843 = vmatprep.subr.mxu0 0.0
        %844 = vmatpush2.msra.mxu0 0.0
        %845 = vmatprep.subr.mxu0 0.0
        %846 = vmatpush2.msra.mxu0 0.0
        %847 = vmatprep.subr.mxu0 0.0
        %848 = vmatpush2.msra.mxu0 0.0
        %849 = vmatprep.subr.mxu0 0.0
        %850 = vmatpush2.msra.mxu0 0.0
        %851 = vmatprep.subr.mxu0 0.0
        %852 = vmatpush2.msra.mxu0 0.0
        %853 = vmatprep.subr.mxu0 0.0
        %854 = vmatpush2.msra.mxu0 0.0
        %855 = vmatprep.subr.mxu0 0.0
        %856 = vmatpush2.msra.mxu0 0.0
        %857 = vmatprep.subr.mxu0 0.0
        %858 = vmatpush2.msra.mxu0 0.0
        %859 = vmatprep.subr.mxu0 0.0
        %860 = vmatpush2.msra.mxu0 0.0
        %861 = vmatprep.subr.mxu0 0.0
        %862 = vmatpush2.msra.mxu0 0.0
        %863 = vmatprep.subr.mxu0 0.0
        %864 = vmatpush2.msra.mxu0 0.0
        %865 = vmatprep.mubr.f32.mxu0 0.0
        %v866 = vand.u32 %v661, 4294901760
        %867 = vmatmul.mubr.f32.gmra.mxu0 %v866
        %v868 = vpop.f32.mrf.mxu0
        %v869 = vadd.f32 %v746, %v868
        %v870 = vpop.f32.mrf.mxu0
        %v871 = vadd.f32 %v748, %v870
        %872 = vmatprep.mubr.f32.mxu0 0.0
        %v873 = vand.u32 %v664, 4294901760
        %874 = vmatmul.mubr.f32.gmra.mxu0 %v873
        %v875 = vpop.f32.mrf.mxu0
        %v876 = vadd.f32 %v757, %v875
        %v877 = vpop.f32.mrf.mxu0
        %v878 = vadd.f32 %v759, %v877
        %879 = vdwg.mxu0
        %880 = vmatprep.subr.mxu0 0.0
        %881 = vmatpush1.msra.mxu0 0.0
        %882 = vmatprep.subr.mxu0 0.0
        %883 = vmatpush1.msra.mxu0 0.0
        %884 = vmatprep.subr.mxu0 0.0
        %885 = vmatpush1.msra.mxu0 0.0
        %886 = vmatprep.subr.mxu0 0.0
        %887 = vmatpush1.msra.mxu0 0.0
        %888 = vmatprep.subr.mxu0 0.0
        %889 = vmatpush1.msra.mxu0 0.0
        %890 = vmatprep.subr.mxu0 0.0
        %891 = vmatpush1.msra.mxu0 0.0
        %892 = vmatprep.subr.mxu0 0.0
        %893 = vmatpush1.msra.mxu0 0.0
        %894 = vmatprep.subr.mxu0 0.0
        %895 = vmatpush1.msra.mxu0 0.0
        %896 = vmatprep.subr.mxu0 0.0
        %897 = vmatpush1.msra.mxu0 0.0
        %898 = vmatprep.subr.mxu0 0.0
        %899 = vmatpush1.msra.mxu0 0.0
        %900 = vmatprep.subr.mxu0 0.0
        %901 = vmatpush1.msra.mxu0 0.0
        %902 = vmatprep.subr.mxu0 0.0
        %903 = vmatpush1.msra.mxu0 0.0
        %v904 = vand.u32 %v652, 4294901760
        %v905 = vsub.f32 %v652, %v904
        %906 = vmatprep.subr.mxu0 %v905
        %v907 = vand.u32 %v651, 4294901760
        %v908 = vsub.f32 %v651, %v907
        %909 = vmatpush1.msra.mxu0 %v908
        %v910 = vand.u32 %v644, 4294901760
        %v911 = vsub.f32 %v644, %v910
        %912 = vmatprep.subr.mxu0 %v911
        %v913 = vand.u32 %v643, 4294901760
        %v914 = vsub.f32 %v643, %v913
        %915 = vmatpush1.msra.mxu0 %v914
        %v916 = vand.u32 %v636, 4294901760
        %v917 = vsub.f32 %v636, %v916
        %918 = vmatprep.subr.mxu0 %v917
        %v919 = vand.u32 %v635, 4294901760
        %v920 = vsub.f32 %v635, %v919
        %921 = vmatpush1.msra.mxu0 %v920
        %v922 = vand.u32 %v628, 4294901760
        %v923 = vsub.f32 %v628, %v922
        %924 = vmatprep.subr.mxu0 %v923
        %v925 = vand.u32 %v627, 4294901760
        %v926 = vsub.f32 %v627, %v925
        %927 = vmatpush1.msra.mxu0 %v926
        %928 = vmatprep.subr.mxu0 0.0
        %929 = vmatpush2.msra.mxu0 0.0
        %930 = vmatprep.subr.mxu0 0.0
        %931 = vmatpush2.msra.mxu0 0.0
        %932 = vmatprep.subr.mxu0 0.0
        %933 = vmatpush2.msra.mxu0 0.0
        %934 = vmatprep.subr.mxu0 0.0
        %935 = vmatpush2.msra.mxu0 0.0
        %936 = vmatprep.subr.mxu0 0.0
        %937 = vmatpush2.msra.mxu0 0.0
        %938 = vmatprep.subr.mxu0 0.0
        %939 = vmatpush2.msra.mxu0 0.0
        %940 = vmatprep.subr.mxu0 0.0
        %941 = vmatpush2.msra.mxu0 0.0
        %942 = vmatprep.subr.mxu0 0.0
        %943 = vmatpush2.msra.mxu0 0.0
        %944 = vmatprep.subr.mxu0 0.0
        %945 = vmatpush2.msra.mxu0 0.0
        %946 = vmatprep.subr.mxu0 0.0
        %947 = vmatpush2.msra.mxu0 0.0
        %948 = vmatprep.subr.mxu0 0.0
        %949 = vmatpush2.msra.mxu0 0.0
        %950 = vmatprep.subr.mxu0 0.0
        %951 = vmatpush2.msra.mxu0 0.0
        %952 = vmatprep.subr.mxu0 0.0
        %953 = vmatpush2.msra.mxu0 0.0
        %954 = vmatprep.subr.mxu0 0.0
        %955 = vmatpush2.msra.mxu0 0.0
        %956 = vmatprep.subr.mxu0 0.0
        %957 = vmatpush2.msra.mxu0 0.0
        %958 = vmatprep.subr.mxu0 0.0
        %959 = vmatpush2.msra.mxu0 0.0
        %960 = vmatprep.mubr.f32.mxu0 0.0
        %v961 = vand.u32 %v661, 4294901760
        %v962 = vsub.f32 %v661, %v961
        %963 = vmatmul.mubr.f32.gmra.mxu0 %v962
        %v964 = vpop.f32.mrf.mxu0
        %v965 = vadd.f32 %v869, %v964
        %v966 = vpop.f32.mrf.mxu0
        %v967 = vadd.f32 %v871, %v966
        %968 = vmatprep.mubr.f32.mxu0 0.0
        %v969 = vand.u32 %v664, 4294901760
        %v970 = vsub.f32 %v664, %v969
        %971 = vmatmul.mubr.f32.gmra.mxu0 %v970
        %v972 = vpop.f32.mrf.mxu0
        %v973 = vadd.f32 %v876, %v972
        %v974 = vpop.f32.mrf.mxu0
        %v975 = vadd.f32 %v878, %v974
        %976 = vdwg.mxu0
        %977 = vmatprep.subr.mxu0 0.0
        %978 = vmatpush1.msra.mxu0 0.0
        %979 = vmatprep.subr.mxu0 0.0
        %980 = vmatpush1.msra.mxu0 0.0
        %981 = vmatprep.subr.mxu0 0.0
        %982 = vmatpush1.msra.mxu0 0.0
        %983 = vmatprep.subr.mxu0 0.0
        %984 = vmatpush1.msra.mxu0 0.0
        %985 = vmatprep.subr.mxu0 0.0
        %986 = vmatpush1.msra.mxu0 0.0
        %987 = vmatprep.subr.mxu0 0.0
        %988 = vmatpush1.msra.mxu0 0.0
        %989 = vmatprep.subr.mxu0 0.0
        %990 = vmatpush1.msra.mxu0 0.0
        %991 = vmatprep.subr.mxu0 0.0
        %992 = vmatpush1.msra.mxu0 0.0
        %993 = vmatprep.subr.mxu0 0.0
        %994 = vmatpush1.msra.mxu0 0.0
        %995 = vmatprep.subr.mxu0 0.0
        %996 = vmatpush1.msra.mxu0 0.0
        %997 = vmatprep.subr.mxu0 0.0
        %998 = vmatpush1.msra.mxu0 0.0
        %999 = vmatprep.subr.mxu0 0.0
        %1000 = vmatpush1.msra.mxu0 0.0
        %v1001 = vand.u32 %v652, 4294901760
        %1002 = vmatprep.subr.mxu0 %v1001
        %v1003 = vand.u32 %v651, 4294901760
        %1004 = vmatpush1.msra.mxu0 %v1003
        %v1005 = vand.u32 %v644, 4294901760
        %1006 = vmatprep.subr.mxu0 %v1005
        %v1007 = vand.u32 %v643, 4294901760
        %1008 = vmatpush1.msra.mxu0 %v1007
        %v1009 = vand.u32 %v636, 4294901760
        %1010 = vmatprep.subr.mxu0 %v1009
        %v1011 = vand.u32 %v635, 4294901760
        %1012 = vmatpush1.msra.mxu0 %v1011
        %v1013 = vand.u32 %v628, 4294901760
        %1014 = vmatprep.subr.mxu0 %v1013
        %v1015 = vand.u32 %v627, 4294901760
        %1016 = vmatpush1.msra.mxu0 %v1015
        %1017 = vmatprep.subr.mxu0 0.0
        %1018 = vmatpush2.msra.mxu0 0.0
        %1019 = vmatprep.subr.mxu0 0.0
        %1020 = vmatpush2.msra.mxu0 0.0
        %1021 = vmatprep.subr.mxu0 0.0
        %1022 = vmatpush2.msra.mxu0 0.0
        %1023 = vmatprep.subr.mxu0 0.0
        %1024 = vmatpush2.msra.mxu0 0.0
        %1025 = vmatprep.subr.mxu0 0.0
        %1026 = vmatpush2.msra.mxu0 0.0
        %1027 = vmatprep.subr.mxu0 0.0
        %1028 = vmatpush2.msra.mxu0 0.0
        %1029 = vmatprep.subr.mxu0 0.0
        %1030 = vmatpush2.msra.mxu0 0.0
        %1031 = vmatprep.subr.mxu0 0.0
        %1032 = vmatpush2.msra.mxu0 0.0
        %1033 = vmatprep.subr.mxu0 0.0
        %1034 = vmatpush2.msra.mxu0 0.0
        %1035 = vmatprep.subr.mxu0 0.0
        %1036 = vmatpush2.msra.mxu0 0.0
        %1037 = vmatprep.subr.mxu0 0.0
        %1038 = vmatpush2.msra.mxu0 0.0
        %1039 = vmatprep.subr.mxu0 0.0
        %1040 = vmatpush2.msra.mxu0 0.0
        %1041 = vmatprep.subr.mxu0 0.0
        %1042 = vmatpush2.msra.mxu0 0.0
        %1043 = vmatprep.subr.mxu0 0.0
        %1044 = vmatpush2.msra.mxu0 0.0
        %1045 = vmatprep.subr.mxu0 0.0
        %1046 = vmatpush2.msra.mxu0 0.0
        %1047 = vmatprep.subr.mxu0 0.0
        %1048 = vmatpush2.msra.mxu0 0.0
        %1049 = vmatprep.mubr.f32.mxu0 0.0
        %v1050 = vand.u32 %v661, 4294901760
        %v1051 = vsub.f32 %v661, %v1050
        %v1052 = vand.u32 %v1051, 4294901760
        %1053 = vmatmul.mubr.f32.gmra.mxu0 %v1052
        %v1054 = vpop.f32.mrf.mxu0
        %v1055 = vadd.f32 %v965, %v1054
        %v1056 = vpop.f32.mrf.mxu0
        %v1057 = vadd.f32 %v967, %v1056
        %1058 = vmatprep.mubr.f32.mxu0 0.0
        %v1059 = vand.u32 %v664, 4294901760
        %v1060 = vsub.f32 %v664, %v1059
        %v1061 = vand.u32 %v1060, 4294901760
        %1062 = vmatmul.mubr.f32.gmra.mxu0 %v1061
        %v1063 = vpop.f32.mrf.mxu0
        %v1064 = vadd.f32 %v973, %v1063
        %v1065 = vpop.f32.mrf.mxu0
        %v1066 = vadd.f32 %v975, %v1065
        %1067 = vdwg.mxu0
        %1068 = vmatprep.subr.mxu0 0.0
        %1069 = vmatpush1.msra.mxu0 0.0
        %1070 = vmatprep.subr.mxu0 0.0
        %1071 = vmatpush1.msra.mxu0 0.0
        %1072 = vmatprep.subr.mxu0 0.0
        %1073 = vmatpush1.msra.mxu0 0.0
        %1074 = vmatprep.subr.mxu0 0.0
        %1075 = vmatpush1.msra.mxu0 0.0
        %1076 = vmatprep.subr.mxu0 0.0
        %1077 = vmatpush1.msra.mxu0 0.0
        %1078 = vmatprep.subr.mxu0 0.0
        %1079 = vmatpush1.msra.mxu0 0.0
        %1080 = vmatprep.subr.mxu0 0.0
        %1081 = vmatpush1.msra.mxu0 0.0
        %1082 = vmatprep.subr.mxu0 0.0
        %1083 = vmatpush1.msra.mxu0 0.0
        %1084 = vmatprep.subr.mxu0 0.0
        %1085 = vmatpush1.msra.mxu0 0.0
        %1086 = vmatprep.subr.mxu0 0.0
        %1087 = vmatpush1.msra.mxu0 0.0
        %1088 = vmatprep.subr.mxu0 0.0
        %1089 = vmatpush1.msra.mxu0 0.0
        %1090 = vmatprep.subr.mxu0 0.0
        %1091 = vmatpush1.msra.mxu0 0.0
        %v1092 = vand.u32 %v652, 4294901760
        %v1093 = vsub.f32 %v652, %v1092
        %v1094 = vand.u32 %v1093, 4294901760
        %1095 = vmatprep.subr.mxu0 %v1094
        %v1096 = vand.u32 %v651, 4294901760
        %v1097 = vsub.f32 %v651, %v1096
        %v1098 = vand.u32 %v1097, 4294901760
        %1099 = vmatpush1.msra.mxu0 %v1098
        %v1100 = vand.u32 %v644, 4294901760
        %v1101 = vsub.f32 %v644, %v1100
        %v1102 = vand.u32 %v1101, 4294901760
        %1103 = vmatprep.subr.mxu0 %v1102
        %v1104 = vand.u32 %v643, 4294901760
        %v1105 = vsub.f32 %v643, %v1104
        %v1106 = vand.u32 %v1105, 4294901760
        %1107 = vmatpush1.msra.mxu0 %v1106
        %v1108 = vand.u32 %v636, 4294901760
        %v1109 = vsub.f32 %v636, %v1108
        %v1110 = vand.u32 %v1109, 4294901760
        %1111 = vmatprep.subr.mxu0 %v1110
        %v1112 = vand.u32 %v635, 4294901760
        %v1113 = vsub.f32 %v635, %v1112
        %v1114 = vand.u32 %v1113, 4294901760
        %1115 = vmatpush1.msra.mxu0 %v1114
        %v1116 = vand.u32 %v628, 4294901760
        %v1117 = vsub.f32 %v628, %v1116
        %v1118 = vand.u32 %v1117, 4294901760
        %1119 = vmatprep.subr.mxu0 %v1118
        %v1120 = vand.u32 %v627, 4294901760
        %v1121 = vsub.f32 %v627, %v1120
        %v1122 = vand.u32 %v1121, 4294901760
        %1123 = vmatpush1.msra.mxu0 %v1122
        %1124 = vmatprep.subr.mxu0 0.0
        %1125 = vmatpush2.msra.mxu0 0.0
        %1126 = vmatprep.subr.mxu0 0.0
        %1127 = vmatpush2.msra.mxu0 0.0
        %1128 = vmatprep.subr.mxu0 0.0
        %1129 = vmatpush2.msra.mxu0 0.0
        %1130 = vmatprep.subr.mxu0 0.0
        %1131 = vmatpush2.msra.mxu0 0.0
        %1132 = vmatprep.subr.mxu0 0.0
        %1133 = vmatpush2.msra.mxu0 0.0
        %1134 = vmatprep.subr.mxu0 0.0
        %1135 = vmatpush2.msra.mxu0 0.0
        %1136 = vmatprep.subr.mxu0 0.0
        %1137 = vmatpush2.msra.mxu0 0.0
        %1138 = vmatprep.subr.mxu0 0.0
        %1139 = vmatpush2.msra.mxu0 0.0
        %1140 = vmatprep.subr.mxu0 0.0
        %1141 = vmatpush2.msra.mxu0 0.0
        %1142 = vmatprep.subr.mxu0 0.0
        %1143 = vmatpush2.msra.mxu0 0.0
        %1144 = vmatprep.subr.mxu0 0.0
        %1145 = vmatpush2.msra.mxu0 0.0
        %1146 = vmatprep.subr.mxu0 0.0
        %1147 = vmatpush2.msra.mxu0 0.0
        %1148 = vmatprep.subr.mxu0 0.0
        %1149 = vmatpush2.msra.mxu0 0.0
        %1150 = vmatprep.subr.mxu0 0.0
        %1151 = vmatpush2.msra.mxu0 0.0
        %1152 = vmatprep.subr.mxu0 0.0
        %1153 = vmatpush2.msra.mxu0 0.0
        %1154 = vmatprep.subr.mxu0 0.0
        %1155 = vmatpush2.msra.mxu0 0.0
        %1156 = vmatprep.mubr.f32.mxu0 0.0
        %v1157 = vand.u32 %v661, 4294901760
        %1158 = vmatmul.mubr.f32.gmra.mxu0 %v1157
        %v1159 = vpop.f32.mrf.mxu0
        %v1160 = vadd.f32 %v1055, %v1159
        %v1161 = vpop.f32.mrf.mxu0
        %v1162 = vadd.f32 %v1057, %v1161
        %1163 = vmatprep.mubr.f32.mxu0 0.0
        %v1164 = vand.u32 %v664, 4294901760
        %1165 = vmatmul.mubr.f32.gmra.mxu0 %v1164
        %v1166 = vpop.f32.mrf.mxu0
        %v1167 = vadd.f32 %v1064, %v1166
        %v1168 = vpop.f32.mrf.mxu0
        %v1169 = vadd.f32 %v1066, %v1168
        %1170 = vdwg.mxu0
        %1171 = vmatprep.subr.mxu0 0.0
        %1172 = vmatpush1.msra.mxu0 0.0
        %1173 = vmatprep.subr.mxu0 0.0
        %1174 = vmatpush1.msra.mxu0 0.0
        %1175 = vmatprep.subr.mxu0 0.0
        %1176 = vmatpush1.msra.mxu0 0.0
        %1177 = vmatprep.subr.mxu0 0.0
        %1178 = vmatpush1.msra.mxu0 0.0
        %1179 = vmatprep.subr.mxu0 0.0
        %1180 = vmatpush1.msra.mxu0 0.0
        %1181 = vmatprep.subr.mxu0 0.0
        %1182 = vmatpush1.msra.mxu0 0.0
        %1183 = vmatprep.subr.mxu0 0.0
        %1184 = vmatpush1.msra.mxu0 0.0
        %1185 = vmatprep.subr.mxu0 0.0
        %1186 = vmatpush1.msra.mxu0 0.0
        %1187 = vmatprep.subr.mxu0 0.0
        %1188 = vmatpush1.msra.mxu0 0.0
        %1189 = vmatprep.subr.mxu0 0.0
        %1190 = vmatpush1.msra.mxu0 0.0
        %1191 = vmatprep.subr.mxu0 0.0
        %1192 = vmatpush1.msra.mxu0 0.0
        %1193 = vmatprep.subr.mxu0 0.0
        %1194 = vmatpush1.msra.mxu0 0.0
        %v1195 = vand.u32 %v652, 4294901760
        %1196 = vmatprep.subr.mxu0 %v1195
        %v1197 = vand.u32 %v651, 4294901760
        %1198 = vmatpush1.msra.mxu0 %v1197
        %v1199 = vand.u32 %v644, 4294901760
        %1200 = vmatprep.subr.mxu0 %v1199
        %v1201 = vand.u32 %v643, 4294901760
        %1202 = vmatpush1.msra.mxu0 %v1201
        %v1203 = vand.u32 %v636, 4294901760
        %1204 = vmatprep.subr.mxu0 %v1203
        %v1205 = vand.u32 %v635, 4294901760
        %1206 = vmatpush1.msra.mxu0 %v1205
        %v1207 = vand.u32 %v628, 4294901760
        %1208 = vmatprep.subr.mxu0 %v1207
        %v1209 = vand.u32 %v627, 4294901760
        %1210 = vmatpush1.msra.mxu0 %v1209
        %1211 = vmatprep.subr.mxu0 0.0
        %1212 = vmatpush2.msra.mxu0 0.0
        %1213 = vmatprep.subr.mxu0 0.0
        %1214 = vmatpush2.msra.mxu0 0.0
        %1215 = vmatprep.subr.mxu0 0.0
        %1216 = vmatpush2.msra.mxu0 0.0
        %1217 = vmatprep.subr.mxu0 0.0
        %1218 = vmatpush2.msra.mxu0 0.0
        %1219 = vmatprep.subr.mxu0 0.0
        %1220 = vmatpush2.msra.mxu0 0.0
        %1221 = vmatprep.subr.mxu0 0.0
        %1222 = vmatpush2.msra.mxu0 0.0
        %1223 = vmatprep.subr.mxu0 0.0
        %1224 = vmatpush2.msra.mxu0 0.0
        %1225 = vmatprep.subr.mxu0 0.0
        %1226 = vmatpush2.msra.mxu0 0.0
        %1227 = vmatprep.subr.mxu0 0.0
        %1228 = vmatpush2.msra.mxu0 0.0
        %1229 = vmatprep.subr.mxu0 0.0
        %1230 = vmatpush2.msra.mxu0 0.0
        %1231 = vmatprep.subr.mxu0 0.0
        %1232 = vmatpush2.msra.mxu0 0.0
        %1233 = vmatprep.subr.mxu0 0.0
        %1234 = vmatpush2.msra.mxu0 0.0
        %1235 = vmatprep.subr.mxu0 0.0
        %1236 = vmatpush2.msra.mxu0 0.0
        %1237 = vmatprep.subr.mxu0 0.0
        %1238 = vmatpush2.msra.mxu0 0.0
        %1239 = vmatprep.subr.mxu0 0.0
        %1240 = vmatpush2.msra.mxu0 0.0
        %1241 = vmatprep.subr.mxu0 0.0
        %1242 = vmatpush2.msra.mxu0 0.0
        %1243 = vmatprep.mubr.f32.mxu0 0.0
        %v1244 = vand.u32 %v661, 4294901760
        %1245 = vmatmul.mubr.f32.gmra.mxu0 %v1244
        %v1246 = vpop.f32.mrf.mxu0
        %v1247 = vadd.f32 %v1160, %v1246
        %v1248 = vpop.f32.mrf.mxu0
        %v1249 = vadd.f32 %v1162, %v1248
        %1250 = vmatprep.mubr.f32.mxu0 0.0
        %v1251 = vand.u32 %v664, 4294901760
        %1252 = vmatmul.mubr.f32.gmra.mxu0 %v1251
        %v1253 = vpop.f32.mrf.mxu0
        %v1254 = vadd.f32 %v1167, %v1253
        %v1255 = vpop.f32.mrf.mxu0
        %v1256 = vadd.f32 %v1169, %v1255
        %1257 = vdwg.mxu0
        %1258 = vmatprep.subr.mxu0 0.0
        %1259 = vmatpush1.msra.mxu0 0.0
        %1260 = vmatprep.subr.mxu0 0.0
        %1261 = vmatpush1.msra.mxu0 0.0
        %1262 = vmatprep.subr.mxu0 0.0
        %1263 = vmatpush1.msra.mxu0 0.0
        %1264 = vmatprep.subr.mxu0 0.0
        %1265 = vmatpush1.msra.mxu0 0.0
        %1266 = vmatprep.subr.mxu0 0.0
        %1267 = vmatpush1.msra.mxu0 0.0
        %1268 = vmatprep.subr.mxu0 0.0
        %1269 = vmatpush1.msra.mxu0 0.0
        %1270 = vmatprep.subr.mxu0 0.0
        %1271 = vmatpush1.msra.mxu0 0.0
        %1272 = vmatprep.subr.mxu0 0.0
        %1273 = vmatpush1.msra.mxu0 0.0
        %1274 = vmatprep.subr.mxu0 0.0
        %1275 = vmatpush1.msra.mxu0 0.0
        %1276 = vmatprep.subr.mxu0 0.0
        %1277 = vmatpush1.msra.mxu0 0.0
        %1278 = vmatprep.subr.mxu0 0.0
        %1279 = vmatpush1.msra.mxu0 0.0
        %1280 = vmatprep.subr.mxu0 0.0
        %1281 = vmatpush1.msra.mxu0 0.0
        %v1282 = vand.u32 %v654, 4294901760
        %1283 = vmatprep.subr.mxu0 %v1282
        %v1284 = vand.u32 %v653, 4294901760
        %1285 = vmatpush1.msra.mxu0 %v1284
        %v1286 = vand.u32 %v646, 4294901760
        %1287 = vmatprep.subr.mxu0 %v1286
        %v1288 = vand.u32 %v645, 4294901760
        %1289 = vmatpush1.msra.mxu0 %v1288
        %v1290 = vand.u32 %v638, 4294901760
        %1291 = vmatprep.subr.mxu0 %v1290
        %v1292 = vand.u32 %v637, 4294901760
        %1293 = vmatpush1.msra.mxu0 %v1292
        %v1294 = vand.u32 %v630, 4294901760
        %1295 = vmatprep.subr.mxu0 %v1294
        %v1296 = vand.u32 %v629, 4294901760
        %1297 = vmatpush1.msra.mxu0 %v1296
        %1298 = vmatprep.subr.mxu0 0.0
        %1299 = vmatpush2.msra.mxu0 0.0
        %1300 = vmatprep.subr.mxu0 0.0
        %1301 = vmatpush2.msra.mxu0 0.0
        %1302 = vmatprep.subr.mxu0 0.0
        %1303 = vmatpush2.msra.mxu0 0.0
        %1304 = vmatprep.subr.mxu0 0.0
        %1305 = vmatpush2.msra.mxu0 0.0
        %1306 = vmatprep.subr.mxu0 0.0
        %1307 = vmatpush2.msra.mxu0 0.0
        %1308 = vmatprep.subr.mxu0 0.0
        %1309 = vmatpush2.msra.mxu0 0.0
        %1310 = vmatprep.subr.mxu0 0.0
        %1311 = vmatpush2.msra.mxu0 0.0
        %1312 = vmatprep.subr.mxu0 0.0
        %1313 = vmatpush2.msra.mxu0 0.0
        %1314 = vmatprep.subr.mxu0 0.0
        %1315 = vmatpush2.msra.mxu0 0.0
        %1316 = vmatprep.subr.mxu0 0.0
        %1317 = vmatpush2.msra.mxu0 0.0
        %1318 = vmatprep.subr.mxu0 0.0
        %1319 = vmatpush2.msra.mxu0 0.0
        %1320 = vmatprep.subr.mxu0 0.0
        %1321 = vmatpush2.msra.mxu0 0.0
        %1322 = vmatprep.subr.mxu0 0.0
        %1323 = vmatpush2.msra.mxu0 0.0
        %1324 = vmatprep.subr.mxu0 0.0
        %1325 = vmatpush2.msra.mxu0 0.0
        %1326 = vmatprep.subr.mxu0 0.0
        %1327 = vmatpush2.msra.mxu0 0.0
        %1328 = vmatprep.subr.mxu0 0.0
        %1329 = vmatpush2.msra.mxu0 0.0
        %1330 = vmatprep.mubr.f32.mxu0 0.0
        %v1331 = vand.u32 %v661, 4294901760
        %v1332 = vsub.f32 %v661, %v1331
        %v1333 = vand.u32 %v1332, 4294901760
        %v1334 = vsub.f32 %v1332, %v1333
        %v1335 = vand.u32 %v1334, 4294901760
        %1336 = vmatmul.mubr.f32.gmra.mxu0 %v1335
        %v1337 = vpop.f32.mrf.mxu0
        %v1338 = vadd.f32 0.0, %v1337
        %v1339 = vpop.f32.mrf.mxu0
        %v1340 = vadd.f32 0.0, %v1339
        %1341 = vmatprep.mubr.f32.mxu0 0.0
        %v1342 = vand.u32 %v664, 4294901760
        %v1343 = vsub.f32 %v664, %v1342
        %v1344 = vand.u32 %v1343, 4294901760
        %v1345 = vsub.f32 %v1343, %v1344
        %v1346 = vand.u32 %v1345, 4294901760
        %1347 = vmatmul.mubr.f32.gmra.mxu0 %v1346
        %v1348 = vpop.f32.mrf.mxu0
        %v1349 = vadd.f32 0.0, %v1348
        %v1350 = vpop.f32.mrf.mxu0
        %v1351 = vadd.f32 0.0, %v1350
        %1352 = vdwg.mxu0
        %1353 = vmatprep.subr.mxu0 0.0
        %1354 = vmatpush1.msra.mxu0 0.0
        %1355 = vmatprep.subr.mxu0 0.0
        %1356 = vmatpush1.msra.mxu0 0.0
        %1357 = vmatprep.subr.mxu0 0.0
        %1358 = vmatpush1.msra.mxu0 0.0
        %1359 = vmatprep.subr.mxu0 0.0
        %1360 = vmatpush1.msra.mxu0 0.0
        %1361 = vmatprep.subr.mxu0 0.0
        %1362 = vmatpush1.msra.mxu0 0.0
        %1363 = vmatprep.subr.mxu0 0.0
        %1364 = vmatpush1.msra.mxu0 0.0
        %1365 = vmatprep.subr.mxu0 0.0
        %1366 = vmatpush1.msra.mxu0 0.0
        %1367 = vmatprep.subr.mxu0 0.0
        %1368 = vmatpush1.msra.mxu0 0.0
        %1369 = vmatprep.subr.mxu0 0.0
        %1370 = vmatpush1.msra.mxu0 0.0
        %1371 = vmatprep.subr.mxu0 0.0
        %1372 = vmatpush1.msra.mxu0 0.0
        %1373 = vmatprep.subr.mxu0 0.0
        %1374 = vmatpush1.msra.mxu0 0.0
        %1375 = vmatprep.subr.mxu0 0.0
        %1376 = vmatpush1.msra.mxu0 0.0
        %v1377 = vand.u32 %v654, 4294901760
        %v1378 = vsub.f32 %v654, %v1377
        %v1379 = vand.u32 %v1378, 4294901760
        %v1380 = vsub.f32 %v1378, %v1379
        %v1381 = vand.u32 %v1380, 4294901760
        %1382 = vmatprep.subr.mxu0 %v1381
        %v1383 = vand.u32 %v653, 4294901760
        %v1384 = vsub.f32 %v653, %v1383
        %v1385 = vand.u32 %v1384, 4294901760
        %v1386 = vsub.f32 %v1384, %v1385
        %v1387 = vand.u32 %v1386, 4294901760
        %1388 = vmatpush1.msra.mxu0 %v1387
        %v1389 = vand.u32 %v646, 4294901760
        %v1390 = vsub.f32 %v646, %v1389
        %v1391 = vand.u32 %v1390, 4294901760
        %v1392 = vsub.f32 %v1390, %v1391
        %v1393 = vand.u32 %v1392, 4294901760
        %1394 = vmatprep.subr.mxu0 %v1393
        %v1395 = vand.u32 %v645, 4294901760
        %v1396 = vsub.f32 %v645, %v1395
        %v1397 = vand.u32 %v1396, 4294901760
        %v1398 = vsub.f32 %v1396, %v1397
        %v1399 = vand.u32 %v1398, 4294901760
        %1400 = vmatpush1.msra.mxu0 %v1399
        %v1401 = vand.u32 %v638, 4294901760
        %v1402 = vsub.f32 %v638, %v1401
        %v1403 = vand.u32 %v1402, 4294901760
        %v1404 = vsub.f32 %v1402, %v1403
        %v1405 = vand.u32 %v1404, 4294901760
        %1406 = vmatprep.subr.mxu0 %v1405
        %v1407 = vand.u32 %v637, 4294901760
        %v1408 = vsub.f32 %v637, %v1407
        %v1409 = vand.u32 %v1408, 4294901760
        %v1410 = vsub.f32 %v1408, %v1409
        %v1411 = vand.u32 %v1410, 4294901760
        %1412 = vmatpush1.msra.mxu0 %v1411
        %v1413 = vand.u32 %v630, 4294901760
        %v1414 = vsub.f32 %v630, %v1413
        %v1415 = vand.u32 %v1414, 4294901760
        %v1416 = vsub.f32 %v1414, %v1415
        %v1417 = vand.u32 %v1416, 4294901760
        %1418 = vmatprep.subr.mxu0 %v1417
        %v1419 = vand.u32 %v629, 4294901760
        %v1420 = vsub.f32 %v629, %v1419
        %v1421 = vand.u32 %v1420, 4294901760
        %v1422 = vsub.f32 %v1420, %v1421
        %v1423 = vand.u32 %v1422, 4294901760
        %1424 = vmatpush1.msra.mxu0 %v1423
        %1425 = vmatprep.subr.mxu0 0.0
        %1426 = vmatpush2.msra.mxu0 0.0
        %1427 = vmatprep.subr.mxu0 0.0
        %1428 = vmatpush2.msra.mxu0 0.0
        %1429 = vmatprep.subr.mxu0 0.0
        %1430 = vmatpush2.msra.mxu0 0.0
        %1431 = vmatprep.subr.mxu0 0.0
        %1432 = vmatpush2.msra.mxu0 0.0
        %1433 = vmatprep.subr.mxu0 0.0
        %1434 = vmatpush2.msra.mxu0 0.0
        %1435 = vmatprep.subr.mxu0 0.0
        %1436 = vmatpush2.msra.mxu0 0.0
        %1437 = vmatprep.subr.mxu0 0.0
        %1438 = vmatpush2.msra.mxu0 0.0
        %1439 = vmatprep.subr.mxu0 0.0
        %1440 = vmatpush2.msra.mxu0 0.0
        %1441 = vmatprep.subr.mxu0 0.0
        %1442 = vmatpush2.msra.mxu0 0.0
        %1443 = vmatprep.subr.mxu0 0.0
        %1444 = vmatpush2.msra.mxu0 0.0
        %1445 = vmatprep.subr.mxu0 0.0
        %1446 = vmatpush2.msra.mxu0 0.0
        %1447 = vmatprep.subr.mxu0 0.0
        %1448 = vmatpush2.msra.mxu0 0.0
        %1449 = vmatprep.subr.mxu0 0.0
        %1450 = vmatpush2.msra.mxu0 0.0
        %1451 = vmatprep.subr.mxu0 0.0
        %1452 = vmatpush2.msra.mxu0 0.0
        %1453 = vmatprep.subr.mxu0 0.0
        %1454 = vmatpush2.msra.mxu0 0.0
        %1455 = vmatprep.subr.mxu0 0.0
        %1456 = vmatpush2.msra.mxu0 0.0
        %1457 = vmatprep.mubr.f32.mxu0 0.0
        %v1458 = vand.u32 %v661, 4294901760
        %1459 = vmatmul.mubr.f32.gmra.mxu0 %v1458
        %v1460 = vpop.f32.mrf.mxu0
        %v1461 = vadd.f32 %v1338, %v1460
        %v1462 = vpop.f32.mrf.mxu0
        %v1463 = vadd.f32 %v1340, %v1462
        %1464 = vmatprep.mubr.f32.mxu0 0.0
        %v1465 = vand.u32 %v664, 4294901760
        %1466 = vmatmul.mubr.f32.gmra.mxu0 %v1465
        %v1467 = vpop.f32.mrf.mxu0
        %v1468 = vadd.f32 %v1349, %v1467
        %v1469 = vpop.f32.mrf.mxu0
        %v1470 = vadd.f32 %v1351, %v1469
        %1471 = vdwg.mxu0
        %1472 = vmatprep.subr.mxu0 0.0
        %1473 = vmatpush1.msra.mxu0 0.0
        %1474 = vmatprep.subr.mxu0 0.0
        %1475 = vmatpush1.msra.mxu0 0.0
        %1476 = vmatprep.subr.mxu0 0.0
        %1477 = vmatpush1.msra.mxu0 0.0
        %1478 = vmatprep.subr.mxu0 0.0
        %1479 = vmatpush1.msra.mxu0 0.0
        %1480 = vmatprep.subr.mxu0 0.0
        %1481 = vmatpush1.msra.mxu0 0.0
        %1482 = vmatprep.subr.mxu0 0.0
        %1483 = vmatpush1.msra.mxu0 0.0
        %1484 = vmatprep.subr.mxu0 0.0
        %1485 = vmatpush1.msra.mxu0 0.0
        %1486 = vmatprep.subr.mxu0 0.0
        %1487 = vmatpush1.msra.mxu0 0.0
        %1488 = vmatprep.subr.mxu0 0.0
        %1489 = vmatpush1.msra.mxu0 0.0
        %1490 = vmatprep.subr.mxu0 0.0
        %1491 = vmatpush1.msra.mxu0 0.0
        %1492 = vmatprep.subr.mxu0 0.0
        %1493 = vmatpush1.msra.mxu0 0.0
        %1494 = vmatprep.subr.mxu0 0.0
        %1495 = vmatpush1.msra.mxu0 0.0
        %v1496 = vand.u32 %v654, 4294901760
        %v1497 = vsub.f32 %v654, %v1496
        %1498 = vmatprep.subr.mxu0 %v1497
        %v1499 = vand.u32 %v653, 4294901760
        %v1500 = vsub.f32 %v653, %v1499
        %1501 = vmatpush1.msra.mxu0 %v1500
        %v1502 = vand.u32 %v646, 4294901760
        %v1503 = vsub.f32 %v646, %v1502
        %1504 = vmatprep.subr.mxu0 %v1503
        %v1505 = vand.u32 %v645, 4294901760
        %v1506 = vsub.f32 %v645, %v1505
        %1507 = vmatpush1.msra.mxu0 %v1506
        %v1508 = vand.u32 %v638, 4294901760
        %v1509 = vsub.f32 %v638, %v1508
        %1510 = vmatprep.subr.mxu0 %v1509
        %v1511 = vand.u32 %v637, 4294901760
        %v1512 = vsub.f32 %v637, %v1511
        %1513 = vmatpush1.msra.mxu0 %v1512
        %v1514 = vand.u32 %v630, 4294901760
        %v1515 = vsub.f32 %v630, %v1514
        %1516 = vmatprep.subr.mxu0 %v1515
        %v1517 = vand.u32 %v629, 4294901760
        %v1518 = vsub.f32 %v629, %v1517
        %1519 = vmatpush1.msra.mxu0 %v1518
        %1520 = vmatprep.subr.mxu0 0.0
        %1521 = vmatpush2.msra.mxu0 0.0
        %1522 = vmatprep.subr.mxu0 0.0
        %1523 = vmatpush2.msra.mxu0 0.0
        %1524 = vmatprep.subr.mxu0 0.0
        %1525 = vmatpush2.msra.mxu0 0.0
        %1526 = vmatprep.subr.mxu0 0.0
        %1527 = vmatpush2.msra.mxu0 0.0
        %1528 = vmatprep.subr.mxu0 0.0
        %1529 = vmatpush2.msra.mxu0 0.0
        %1530 = vmatprep.subr.mxu0 0.0
        %1531 = vmatpush2.msra.mxu0 0.0
        %1532 = vmatprep.subr.mxu0 0.0
        %1533 = vmatpush2.msra.mxu0 0.0
        %1534 = vmatprep.subr.mxu0 0.0
        %1535 = vmatpush2.msra.mxu0 0.0
        %1536 = vmatprep.subr.mxu0 0.0
        %1537 = vmatpush2.msra.mxu0 0.0
        %1538 = vmatprep.subr.mxu0 0.0
        %1539 = vmatpush2.msra.mxu0 0.0
        %1540 = vmatprep.subr.mxu0 0.0
        %1541 = vmatpush2.msra.mxu0 0.0
        %1542 = vmatprep.subr.mxu0 0.0
        %1543 = vmatpush2.msra.mxu0 0.0
        %1544 = vmatprep.subr.mxu0 0.0
        %1545 = vmatpush2.msra.mxu0 0.0
        %1546 = vmatprep.subr.mxu0 0.0
        %1547 = vmatpush2.msra.mxu0 0.0
        %1548 = vmatprep.subr.mxu0 0.0
        %1549 = vmatpush2.msra.mxu0 0.0
        %1550 = vmatprep.subr.mxu0 0.0
        %1551 = vmatpush2.msra.mxu0 0.0
        %1552 = vmatprep.mubr.f32.mxu0 0.0
        %v1553 = vand.u32 %v661, 4294901760
        %v1554 = vsub.f32 %v661, %v1553
        %1555 = vmatmul.mubr.f32.gmra.mxu0 %v1554
        %v1556 = vpop.f32.mrf.mxu0
        %v1557 = vadd.f32 %v1461, %v1556
        %v1558 = vpop.f32.mrf.mxu0
        %v1559 = vadd.f32 %v1463, %v1558
        %1560 = vmatprep.mubr.f32.mxu0 0.0
        %v1561 = vand.u32 %v664, 4294901760
        %v1562 = vsub.f32 %v664, %v1561
        %1563 = vmatmul.mubr.f32.gmra.mxu0 %v1562
        %v1564 = vpop.f32.mrf.mxu0
        %v1565 = vadd.f32 %v1468, %v1564
        %v1566 = vpop.f32.mrf.mxu0
        %v1567 = vadd.f32 %v1470, %v1566
        %1568 = vdwg.mxu0
        %1569 = vmatprep.subr.mxu0 0.0
        %1570 = vmatpush1.msra.mxu0 0.0
        %1571 = vmatprep.subr.mxu0 0.0
        %1572 = vmatpush1.msra.mxu0 0.0
        %1573 = vmatprep.subr.mxu0 0.0
        %1574 = vmatpush1.msra.mxu0 0.0
        %1575 = vmatprep.subr.mxu0 0.0
        %1576 = vmatpush1.msra.mxu0 0.0
        %1577 = vmatprep.subr.mxu0 0.0
        %1578 = vmatpush1.msra.mxu0 0.0
        %1579 = vmatprep.subr.mxu0 0.0
        %1580 = vmatpush1.msra.mxu0 0.0
        %1581 = vmatprep.subr.mxu0 0.0
        %1582 = vmatpush1.msra.mxu0 0.0
        %1583 = vmatprep.subr.mxu0 0.0
        %1584 = vmatpush1.msra.mxu0 0.0
        %1585 = vmatprep.subr.mxu0 0.0
        %1586 = vmatpush1.msra.mxu0 0.0
        %1587 = vmatprep.subr.mxu0 0.0
        %1588 = vmatpush1.msra.mxu0 0.0
        %1589 = vmatprep.subr.mxu0 0.0
        %1590 = vmatpush1.msra.mxu0 0.0
        %1591 = vmatprep.subr.mxu0 0.0
        %1592 = vmatpush1.msra.mxu0 0.0
        %v1593 = vand.u32 %v654, 4294901760
        %1594 = vmatprep.subr.mxu0 %v1593
        %v1595 = vand.u32 %v653, 4294901760
        %1596 = vmatpush1.msra.mxu0 %v1595
        %v1597 = vand.u32 %v646, 4294901760
        %1598 = vmatprep.subr.mxu0 %v1597
        %v1599 = vand.u32 %v645, 4294901760
        %1600 = vmatpush1.msra.mxu0 %v1599
        %v1601 = vand.u32 %v638, 4294901760
        %1602 = vmatprep.subr.mxu0 %v1601
        %v1603 = vand.u32 %v637, 4294901760
        %1604 = vmatpush1.msra.mxu0 %v1603
        %v1605 = vand.u32 %v630, 4294901760
        %1606 = vmatprep.subr.mxu0 %v1605
        %v1607 = vand.u32 %v629, 4294901760
        %1608 = vmatpush1.msra.mxu0 %v1607
        %1609 = vmatprep.subr.mxu0 0.0
        %1610 = vmatpush2.msra.mxu0 0.0
        %1611 = vmatprep.subr.mxu0 0.0
        %1612 = vmatpush2.msra.mxu0 0.0
        %1613 = vmatprep.subr.mxu0 0.0
        %1614 = vmatpush2.msra.mxu0 0.0
        %1615 = vmatprep.subr.mxu0 0.0
        %1616 = vmatpush2.msra.mxu0 0.0
        %1617 = vmatprep.subr.mxu0 0.0
        %1618 = vmatpush2.msra.mxu0 0.0
        %1619 = vmatprep.subr.mxu0 0.0
        %1620 = vmatpush2.msra.mxu0 0.0
        %1621 = vmatprep.subr.mxu0 0.0
        %1622 = vmatpush2.msra.mxu0 0.0
        %1623 = vmatprep.subr.mxu0 0.0
        %1624 = vmatpush2.msra.mxu0 0.0
        %1625 = vmatprep.subr.mxu0 0.0
        %1626 = vmatpush2.msra.mxu0 0.0
        %1627 = vmatprep.subr.mxu0 0.0
        %1628 = vmatpush2.msra.mxu0 0.0
        %1629 = vmatprep.subr.mxu0 0.0
        %1630 = vmatpush2.msra.mxu0 0.0
        %1631 = vmatprep.subr.mxu0 0.0
        %1632 = vmatpush2.msra.mxu0 0.0
        %1633 = vmatprep.subr.mxu0 0.0
        %1634 = vmatpush2.msra.mxu0 0.0
        %1635 = vmatprep.subr.mxu0 0.0
        %1636 = vmatpush2.msra.mxu0 0.0
        %1637 = vmatprep.subr.mxu0 0.0
        %1638 = vmatpush2.msra.mxu0 0.0
        %1639 = vmatprep.subr.mxu0 0.0
        %1640 = vmatpush2.msra.mxu0 0.0
        %1641 = vmatprep.mubr.f32.mxu0 0.0
        %v1642 = vand.u32 %v661, 4294901760
        %v1643 = vsub.f32 %v661, %v1642
        %v1644 = vand.u32 %v1643, 4294901760
        %1645 = vmatmul.mubr.f32.gmra.mxu0 %v1644
        %v1646 = vpop.f32.mrf.mxu0
        %v1647 = vadd.f32 %v1557, %v1646
        %v1648 = vpop.f32.mrf.mxu0
        %v1649 = vadd.f32 %v1559, %v1648
        %1650 = vmatprep.mubr.f32.mxu0 0.0
        %v1651 = vand.u32 %v664, 4294901760
        %v1652 = vsub.f32 %v664, %v1651
        %v1653 = vand.u32 %v1652, 4294901760
        %1654 = vmatmul.mubr.f32.gmra.mxu0 %v1653
        %v1655 = vpop.f32.mrf.mxu0
        %v1656 = vadd.f32 %v1565, %v1655
        %v1657 = vpop.f32.mrf.mxu0
        %v1658 = vadd.f32 %v1567, %v1657
        %1659 = vdwg.mxu0
        %1660 = vmatprep.subr.mxu0 0.0
        %1661 = vmatpush1.msra.mxu0 0.0
        %1662 = vmatprep.subr.mxu0 0.0
        %1663 = vmatpush1.msra.mxu0 0.0
        %1664 = vmatprep.subr.mxu0 0.0
        %1665 = vmatpush1.msra.mxu0 0.0
        %1666 = vmatprep.subr.mxu0 0.0
        %1667 = vmatpush1.msra.mxu0 0.0
        %1668 = vmatprep.subr.mxu0 0.0
        %1669 = vmatpush1.msra.mxu0 0.0
        %1670 = vmatprep.subr.mxu0 0.0
        %1671 = vmatpush1.msra.mxu0 0.0
        %1672 = vmatprep.subr.mxu0 0.0
        %1673 = vmatpush1.msra.mxu0 0.0
        %1674 = vmatprep.subr.mxu0 0.0
        %1675 = vmatpush1.msra.mxu0 0.0
        %1676 = vmatprep.subr.mxu0 0.0
        %1677 = vmatpush1.msra.mxu0 0.0
        %1678 = vmatprep.subr.mxu0 0.0
        %1679 = vmatpush1.msra.mxu0 0.0
        %1680 = vmatprep.subr.mxu0 0.0
        %1681 = vmatpush1.msra.mxu0 0.0
        %1682 = vmatprep.subr.mxu0 0.0
        %1683 = vmatpush1.msra.mxu0 0.0
        %v1684 = vand.u32 %v654, 4294901760
        %v1685 = vsub.f32 %v654, %v1684
        %v1686 = vand.u32 %v1685, 4294901760
        %1687 = vmatprep.subr.mxu0 %v1686
        %v1688 = vand.u32 %v653, 4294901760
        %v1689 = vsub.f32 %v653, %v1688
        %v1690 = vand.u32 %v1689, 4294901760
        %1691 = vmatpush1.msra.mxu0 %v1690
        %v1692 = vand.u32 %v646, 4294901760
        %v1693 = vsub.f32 %v646, %v1692
        %v1694 = vand.u32 %v1693, 4294901760
        %1695 = vmatprep.subr.mxu0 %v1694
        %v1696 = vand.u32 %v645, 4294901760
        %v1697 = vsub.f32 %v645, %v1696
        %v1698 = vand.u32 %v1697, 4294901760
        %1699 = vmatpush1.msra.mxu0 %v1698
        %v1700 = vand.u32 %v638, 4294901760
        %v1701 = vsub.f32 %v638, %v1700
        %v1702 = vand.u32 %v1701, 4294901760
        %1703 = vmatprep.subr.mxu0 %v1702
        %v1704 = vand.u32 %v637, 4294901760
        %v1705 = vsub.f32 %v637, %v1704
        %v1706 = vand.u32 %v1705, 4294901760
        %1707 = vmatpush1.msra.mxu0 %v1706
        %v1708 = vand.u32 %v630, 4294901760
        %v1709 = vsub.f32 %v630, %v1708
        %v1710 = vand.u32 %v1709, 4294901760
        %1711 = vmatprep.subr.mxu0 %v1710
        %v1712 = vand.u32 %v629, 4294901760
        %v1713 = vsub.f32 %v629, %v1712
        %v1714 = vand.u32 %v1713, 4294901760
        %1715 = vmatpush1.msra.mxu0 %v1714
        %1716 = vmatprep.subr.mxu0 0.0
        %1717 = vmatpush2.msra.mxu0 0.0
        %1718 = vmatprep.subr.mxu0 0.0
        %1719 = vmatpush2.msra.mxu0 0.0
        %1720 = vmatprep.subr.mxu0 0.0
        %1721 = vmatpush2.msra.mxu0 0.0
        %1722 = vmatprep.subr.mxu0 0.0
        %1723 = vmatpush2.msra.mxu0 0.0
        %1724 = vmatprep.subr.mxu0 0.0
        %1725 = vmatpush2.msra.mxu0 0.0
        %1726 = vmatprep.subr.mxu0 0.0
        %1727 = vmatpush2.msra.mxu0 0.0
        %1728 = vmatprep.subr.mxu0 0.0
        %1729 = vmatpush2.msra.mxu0 0.0
        %1730 = vmatprep.subr.mxu0 0.0
        %1731 = vmatpush2.msra.mxu0 0.0
        %1732 = vmatprep.subr.mxu0 0.0
        %1733 = vmatpush2.msra.mxu0 0.0
        %1734 = vmatprep.subr.mxu0 0.0
        %1735 = vmatpush2.msra.mxu0 0.0
        %1736 = vmatprep.subr.mxu0 0.0
        %1737 = vmatpush2.msra.mxu0 0.0
        %1738 = vmatprep.subr.mxu0 0.0
        %1739 = vmatpush2.msra.mxu0 0.0
        %1740 = vmatprep.subr.mxu0 0.0
        %1741 = vmatpush2.msra.mxu0 0.0
        %1742 = vmatprep.subr.mxu0 0.0
        %1743 = vmatpush2.msra.mxu0 0.0
        %1744 = vmatprep.subr.mxu0 0.0
        %1745 = vmatpush2.msra.mxu0 0.0
        %1746 = vmatprep.subr.mxu0 0.0
        %1747 = vmatpush2.msra.mxu0 0.0
        %1748 = vmatprep.mubr.f32.mxu0 0.0
        %v1749 = vand.u32 %v661, 4294901760
        %1750 = vmatmul.mubr.f32.gmra.mxu0 %v1749
        %v1751 = vpop.f32.mrf.mxu0
        %v1752 = vadd.f32 %v1647, %v1751
        %v1753 = vpop.f32.mrf.mxu0
        %v1754 = vadd.f32 %v1649, %v1753
        %1755 = vmatprep.mubr.f32.mxu0 0.0
        %v1756 = vand.u32 %v664, 4294901760
        %1757 = vmatmul.mubr.f32.gmra.mxu0 %v1756
        %v1758 = vpop.f32.mrf.mxu0
        %v1759 = vadd.f32 %v1656, %v1758
        %v1760 = vpop.f32.mrf.mxu0
        %v1761 = vadd.f32 %v1658, %v1760
        %1762 = vdwg.mxu0
        %1763 = vmatprep.subr.mxu0 0.0
        %1764 = vmatpush1.msra.mxu0 0.0
        %1765 = vmatprep.subr.mxu0 0.0
        %1766 = vmatpush1.msra.mxu0 0.0
        %1767 = vmatprep.subr.mxu0 0.0
        %1768 = vmatpush1.msra.mxu0 0.0
        %1769 = vmatprep.subr.mxu0 0.0
        %1770 = vmatpush1.msra.mxu0 0.0
        %1771 = vmatprep.subr.mxu0 0.0
        %1772 = vmatpush1.msra.mxu0 0.0
        %1773 = vmatprep.subr.mxu0 0.0
        %1774 = vmatpush1.msra.mxu0 0.0
        %1775 = vmatprep.subr.mxu0 0.0
        %1776 = vmatpush1.msra.mxu0 0.0
        %1777 = vmatprep.subr.mxu0 0.0
        %1778 = vmatpush1.msra.mxu0 0.0
        %1779 = vmatprep.subr.mxu0 0.0
        %1780 = vmatpush1.msra.mxu0 0.0
        %1781 = vmatprep.subr.mxu0 0.0
        %1782 = vmatpush1.msra.mxu0 0.0
        %1783 = vmatprep.subr.mxu0 0.0
        %1784 = vmatpush1.msra.mxu0 0.0
        %1785 = vmatprep.subr.mxu0 0.0
        %1786 = vmatpush1.msra.mxu0 0.0
        %v1787 = vand.u32 %v654, 4294901760
        %1788 = vmatprep.subr.mxu0 %v1787
        %v1789 = vand.u32 %v653, 4294901760
        %1790 = vmatpush1.msra.mxu0 %v1789
        %v1791 = vand.u32 %v646, 4294901760
        %1792 = vmatprep.subr.mxu0 %v1791
        %v1793 = vand.u32 %v645, 4294901760
        %1794 = vmatpush1.msra.mxu0 %v1793
        %v1795 = vand.u32 %v638, 4294901760
        %1796 = vmatprep.subr.mxu0 %v1795
        %v1797 = vand.u32 %v637, 4294901760
        %1798 = vmatpush1.msra.mxu0 %v1797
        %v1799 = vand.u32 %v630, 4294901760
        %1800 = vmatprep.subr.mxu0 %v1799
        %v1801 = vand.u32 %v629, 4294901760
        %1802 = vmatpush1.msra.mxu0 %v1801
        %1803 = vmatprep.subr.mxu0 0.0
        %1804 = vmatpush2.msra.mxu0 0.0
        %1805 = vmatprep.subr.mxu0 0.0
        %1806 = vmatpush2.msra.mxu0 0.0
        %1807 = vmatprep.subr.mxu0 0.0
        %1808 = vmatpush2.msra.mxu0 0.0
        %1809 = vmatprep.subr.mxu0 0.0
        %1810 = vmatpush2.msra.mxu0 0.0
        %1811 = vmatprep.subr.mxu0 0.0
        %1812 = vmatpush2.msra.mxu0 0.0
        %1813 = vmatprep.subr.mxu0 0.0
        %1814 = vmatpush2.msra.mxu0 0.0
        %1815 = vmatprep.subr.mxu0 0.0
        %1816 = vmatpush2.msra.mxu0 0.0
        %1817 = vmatprep.subr.mxu0 0.0
        %1818 = vmatpush2.msra.mxu0 0.0
        %1819 = vmatprep.subr.mxu0 0.0
        %1820 = vmatpush2.msra.mxu0 0.0
        %1821 = vmatprep.subr.mxu0 0.0
        %1822 = vmatpush2.msra.mxu0 0.0
        %1823 = vmatprep.subr.mxu0 0.0
        %1824 = vmatpush2.msra.mxu0 0.0
        %1825 = vmatprep.subr.mxu0 0.0
        %1826 = vmatpush2.msra.mxu0 0.0
        %1827 = vmatprep.subr.mxu0 0.0
        %1828 = vmatpush2.msra.mxu0 0.0
        %1829 = vmatprep.subr.mxu0 0.0
        %1830 = vmatpush2.msra.mxu0 0.0
        %1831 = vmatprep.subr.mxu0 0.0
        %1832 = vmatpush2.msra.mxu0 0.0
        %1833 = vmatprep.subr.mxu0 0.0
        %1834 = vmatpush2.msra.mxu0 0.0
        %1835 = vmatprep.mubr.f32.mxu0 0.0
        %v1836 = vand.u32 %v661, 4294901760
        %1837 = vmatmul.mubr.f32.gmra.mxu0 %v1836
        %v1838 = vpop.f32.mrf.mxu0
        %v1839 = vadd.f32 %v1752, %v1838
        %v1840 = vpop.f32.mrf.mxu0
        %v1841 = vadd.f32 %v1754, %v1840
        %1842 = vmatprep.mubr.f32.mxu0 0.0
        %v1843 = vand.u32 %v664, 4294901760
        %1844 = vmatmul.mubr.f32.gmra.mxu0 %v1843
        %v1845 = vpop.f32.mrf.mxu0
        %v1846 = vadd.f32 %v1759, %v1845
        %v1847 = vpop.f32.mrf.mxu0
        %v1848 = vadd.f32 %v1761, %v1847
        %1849 = vdwg.mxu0
        %1850 = vmatprep.subr.mxu0 0.0
        %1851 = vmatpush1.msra.mxu0 0.0
        %1852 = vmatprep.subr.mxu0 0.0
        %1853 = vmatpush1.msra.mxu0 0.0
        %1854 = vmatprep.subr.mxu0 0.0
        %1855 = vmatpush1.msra.mxu0 0.0
        %1856 = vmatprep.subr.mxu0 0.0
        %1857 = vmatpush1.msra.mxu0 0.0
        %1858 = vmatprep.subr.mxu0 0.0
        %1859 = vmatpush1.msra.mxu0 0.0
        %1860 = vmatprep.subr.mxu0 0.0
        %1861 = vmatpush1.msra.mxu0 0.0
        %1862 = vmatprep.subr.mxu0 0.0
        %1863 = vmatpush1.msra.mxu0 0.0
        %1864 = vmatprep.subr.mxu0 0.0
        %1865 = vmatpush1.msra.mxu0 0.0
        %1866 = vmatprep.subr.mxu0 0.0
        %1867 = vmatpush1.msra.mxu0 0.0
        %1868 = vmatprep.subr.mxu0 0.0
        %1869 = vmatpush1.msra.mxu0 0.0
        %1870 = vmatprep.subr.mxu0 0.0
        %1871 = vmatpush1.msra.mxu0 0.0
        %1872 = vmatprep.subr.mxu0 0.0
        %1873 = vmatpush1.msra.mxu0 0.0
        %v1874 = vand.u32 %v656, 4294901760
        %1875 = vmatprep.subr.mxu0 %v1874
        %v1876 = vand.u32 %v655, 4294901760
        %1877 = vmatpush1.msra.mxu0 %v1876
        %v1878 = vand.u32 %v648, 4294901760
        %1879 = vmatprep.subr.mxu0 %v1878
        %v1880 = vand.u32 %v647, 4294901760
        %1881 = vmatpush1.msra.mxu0 %v1880
        %v1882 = vand.u32 %v640, 4294901760
        %1883 = vmatprep.subr.mxu0 %v1882
        %v1884 = vand.u32 %v639, 4294901760
        %1885 = vmatpush1.msra.mxu0 %v1884
        %v1886 = vand.u32 %v632, 4294901760
        %1887 = vmatprep.subr.mxu0 %v1886
        %v1888 = vand.u32 %v631, 4294901760
        %1889 = vmatpush1.msra.mxu0 %v1888
        %1890 = vmatprep.subr.mxu0 0.0
        %1891 = vmatpush2.msra.mxu0 0.0
        %1892 = vmatprep.subr.mxu0 0.0
        %1893 = vmatpush2.msra.mxu0 0.0
        %1894 = vmatprep.subr.mxu0 0.0
        %1895 = vmatpush2.msra.mxu0 0.0
        %1896 = vmatprep.subr.mxu0 0.0
        %1897 = vmatpush2.msra.mxu0 0.0
        %1898 = vmatprep.subr.mxu0 0.0
        %1899 = vmatpush2.msra.mxu0 0.0
        %1900 = vmatprep.subr.mxu0 0.0
        %1901 = vmatpush2.msra.mxu0 0.0
        %1902 = vmatprep.subr.mxu0 0.0
        %1903 = vmatpush2.msra.mxu0 0.0
        %1904 = vmatprep.subr.mxu0 0.0
        %1905 = vmatpush2.msra.mxu0 0.0
        %1906 = vmatprep.subr.mxu0 0.0
        %1907 = vmatpush2.msra.mxu0 0.0
        %1908 = vmatprep.subr.mxu0 0.0
        %1909 = vmatpush2.msra.mxu0 0.0
        %1910 = vmatprep.subr.mxu0 0.0
        %1911 = vmatpush2.msra.mxu0 0.0
        %1912 = vmatprep.subr.mxu0 0.0
        %1913 = vmatpush2.msra.mxu0 0.0
        %1914 = vmatprep.subr.mxu0 0.0
        %1915 = vmatpush2.msra.mxu0 0.0
        %1916 = vmatprep.subr.mxu0 0.0
        %1917 = vmatpush2.msra.mxu0 0.0
        %1918 = vmatprep.subr.mxu0 0.0
        %1919 = vmatpush2.msra.mxu0 0.0
        %1920 = vmatprep.subr.mxu0 0.0
        %1921 = vmatpush2.msra.mxu0 0.0
        %1922 = vmatprep.mubr.f32.mxu0 0.0
        %v1923 = vand.u32 %v661, 4294901760
        %v1924 = vsub.f32 %v661, %v1923
        %v1925 = vand.u32 %v1924, 4294901760
        %v1926 = vsub.f32 %v1924, %v1925
        %v1927 = vand.u32 %v1926, 4294901760
        %1928 = vmatmul.mubr.f32.gmra.mxu0 %v1927
        %v1929 = vpop.f32.mrf.mxu0
        %v1930 = vadd.f32 0.0, %v1929
        %v1931 = vpop.f32.mrf.mxu0
        %v1932 = vadd.f32 0.0, %v1931
        %1933 = vmatprep.mubr.f32.mxu0 0.0
        %v1934 = vand.u32 %v664, 4294901760
        %v1935 = vsub.f32 %v664, %v1934
        %v1936 = vand.u32 %v1935, 4294901760
        %v1937 = vsub.f32 %v1935, %v1936
        %v1938 = vand.u32 %v1937, 4294901760
        %1939 = vmatmul.mubr.f32.gmra.mxu0 %v1938
        %v1940 = vpop.f32.mrf.mxu0
        %v1941 = vadd.f32 0.0, %v1940
        %v1942 = vpop.f32.mrf.mxu0
        %v1943 = vadd.f32 0.0, %v1942
        %1944 = vdwg.mxu0
        %1945 = vmatprep.subr.mxu0 0.0
        %1946 = vmatpush1.msra.mxu0 0.0
        %1947 = vmatprep.subr.mxu0 0.0
        %1948 = vmatpush1.msra.mxu0 0.0
        %1949 = vmatprep.subr.mxu0 0.0
        %1950 = vmatpush1.msra.mxu0 0.0
        %1951 = vmatprep.subr.mxu0 0.0
        %1952 = vmatpush1.msra.mxu0 0.0
        %1953 = vmatprep.subr.mxu0 0.0
        %1954 = vmatpush1.msra.mxu0 0.0
        %1955 = vmatprep.subr.mxu0 0.0
        %1956 = vmatpush1.msra.mxu0 0.0
        %1957 = vmatprep.subr.mxu0 0.0
        %1958 = vmatpush1.msra.mxu0 0.0
        %1959 = vmatprep.subr.mxu0 0.0
        %1960 = vmatpush1.msra.mxu0 0.0
        %1961 = vmatprep.subr.mxu0 0.0
        %1962 = vmatpush1.msra.mxu0 0.0
        %1963 = vmatprep.subr.mxu0 0.0
        %1964 = vmatpush1.msra.mxu0 0.0
        %1965 = vmatprep.subr.mxu0 0.0
        %1966 = vmatpush1.msra.mxu0 0.0
        %1967 = vmatprep.subr.mxu0 0.0
        %1968 = vmatpush1.msra.mxu0 0.0
        %v1969 = vand.u32 %v656, 4294901760
        %v1970 = vsub.f32 %v656, %v1969
        %v1971 = vand.u32 %v1970, 4294901760
        %v1972 = vsub.f32 %v1970, %v1971
        %v1973 = vand.u32 %v1972, 4294901760
        %1974 = vmatprep.subr.mxu0 %v1973
        %v1975 = vand.u32 %v655, 4294901760
        %v1976 = vsub.f32 %v655, %v1975
        %v1977 = vand.u32 %v1976, 4294901760
        %v1978 = vsub.f32 %v1976, %v1977
        %v1979 = vand.u32 %v1978, 4294901760
        %1980 = vmatpush1.msra.mxu0 %v1979
        %v1981 = vand.u32 %v648, 4294901760
        %v1982 = vsub.f32 %v648, %v1981
        %v1983 = vand.u32 %v1982, 4294901760
        %v1984 = vsub.f32 %v1982, %v1983
        %v1985 = vand.u32 %v1984, 4294901760
        %1986 = vmatprep.subr.mxu0 %v1985
        %v1987 = vand.u32 %v647, 4294901760
        %v1988 = vsub.f32 %v647, %v1987
        %v1989 = vand.u32 %v1988, 4294901760
        %v1990 = vsub.f32 %v1988, %v1989
        %v1991 = vand.u32 %v1990, 4294901760
        %1992 = vmatpush1.msra.mxu0 %v1991
        %v1993 = vand.u32 %v640, 4294901760
        %v1994 = vsub.f32 %v640, %v1993
        %v1995 = vand.u32 %v1994, 4294901760
        %v1996 = vsub.f32 %v1994, %v1995
        %v1997 = vand.u32 %v1996, 4294901760
        %1998 = vmatprep.subr.mxu0 %v1997
        %v1999 = vand.u32 %v639, 4294901760
        %v2000 = vsub.f32 %v639, %v1999
        %v2001 = vand.u32 %v2000, 4294901760
        %v2002 = vsub.f32 %v2000, %v2001
        %v2003 = vand.u32 %v2002, 4294901760
        %2004 = vmatpush1.msra.mxu0 %v2003
        %v2005 = vand.u32 %v632, 4294901760
        %v2006 = vsub.f32 %v632, %v2005
        %v2007 = vand.u32 %v2006, 4294901760
        %v2008 = vsub.f32 %v2006, %v2007
        %v2009 = vand.u32 %v2008, 4294901760
        %2010 = vmatprep.subr.mxu0 %v2009
        %v2011 = vand.u32 %v631, 4294901760
        %v2012 = vsub.f32 %v631, %v2011
        %v2013 = vand.u32 %v2012, 4294901760
        %v2014 = vsub.f32 %v2012, %v2013
        %v2015 = vand.u32 %v2014, 4294901760
        %2016 = vmatpush1.msra.mxu0 %v2015
        %2017 = vmatprep.subr.mxu0 0.0
        %2018 = vmatpush2.msra.mxu0 0.0
        %2019 = vmatprep.subr.mxu0 0.0
        %2020 = vmatpush2.msra.mxu0 0.0
        %2021 = vmatprep.subr.mxu0 0.0
        %2022 = vmatpush2.msra.mxu0 0.0
        %2023 = vmatprep.subr.mxu0 0.0
        %2024 = vmatpush2.msra.mxu0 0.0
        %2025 = vmatprep.subr.mxu0 0.0
        %2026 = vmatpush2.msra.mxu0 0.0
        %2027 = vmatprep.subr.mxu0 0.0
        %2028 = vmatpush2.msra.mxu0 0.0
        %2029 = vmatprep.subr.mxu0 0.0
        %2030 = vmatpush2.msra.mxu0 0.0
        %2031 = vmatprep.subr.mxu0 0.0
        %2032 = vmatpush2.msra.mxu0 0.0
        %2033 = vmatprep.subr.mxu0 0.0
        %2034 = vmatpush2.msra.mxu0 0.0
        %2035 = vmatprep.subr.mxu0 0.0
        %2036 = vmatpush2.msra.mxu0 0.0
        %2037 = vmatprep.subr.mxu0 0.0
        %2038 = vmatpush2.msra.mxu0 0.0
        %2039 = vmatprep.subr.mxu0 0.0
        %2040 = vmatpush2.msra.mxu0 0.0
        %2041 = vmatprep.subr.mxu0 0.0
        %2042 = vmatpush2.msra.mxu0 0.0
        %2043 = vmatprep.subr.mxu0 0.0
        %2044 = vmatpush2.msra.mxu0 0.0
        %2045 = vmatprep.subr.mxu0 0.0
        %2046 = vmatpush2.msra.mxu0 0.0
        %2047 = vmatprep.subr.mxu0 0.0
        %2048 = vmatpush2.msra.mxu0 0.0
        %2049 = vmatprep.mubr.f32.mxu0 0.0
        %v2050 = vand.u32 %v661, 4294901760
        %2051 = vmatmul.mubr.f32.gmra.mxu0 %v2050
        %v2052 = vpop.f32.mrf.mxu0
        %v2053 = vadd.f32 %v1930, %v2052
        %v2054 = vpop.f32.mrf.mxu0
        %v2055 = vadd.f32 %v1932, %v2054
        %2056 = vmatprep.mubr.f32.mxu0 0.0
        %v2057 = vand.u32 %v664, 4294901760
        %2058 = vmatmul.mubr.f32.gmra.mxu0 %v2057
        %v2059 = vpop.f32.mrf.mxu0
        %v2060 = vadd.f32 %v1941, %v2059
        %v2061 = vpop.f32.mrf.mxu0
        %v2062 = vadd.f32 %v1943, %v2061
        %2063 = vdwg.mxu0
        %2064 = vmatprep.subr.mxu0 0.0
        %2065 = vmatpush1.msra.mxu0 0.0
        %2066 = vmatprep.subr.mxu0 0.0
        %2067 = vmatpush1.msra.mxu0 0.0
        %2068 = vmatprep.subr.mxu0 0.0
        %2069 = vmatpush1.msra.mxu0 0.0
        %2070 = vmatprep.subr.mxu0 0.0
        %2071 = vmatpush1.msra.mxu0 0.0
        %2072 = vmatprep.subr.mxu0 0.0
        %2073 = vmatpush1.msra.mxu0 0.0
        %2074 = vmatprep.subr.mxu0 0.0
        %2075 = vmatpush1.msra.mxu0 0.0
        %2076 = vmatprep.subr.mxu0 0.0
        %2077 = vmatpush1.msra.mxu0 0.0
        %2078 = vmatprep.subr.mxu0 0.0
        %2079 = vmatpush1.msra.mxu0 0.0
        %2080 = vmatprep.subr.mxu0 0.0
        %2081 = vmatpush1.msra.mxu0 0.0
        %2082 = vmatprep.subr.mxu0 0.0
        %2083 = vmatpush1.msra.mxu0 0.0
        %2084 = vmatprep.subr.mxu0 0.0
        %2085 = vmatpush1.msra.mxu0 0.0
        %2086 = vmatprep.subr.mxu0 0.0
        %2087 = vmatpush1.msra.mxu0 0.0
        %v2088 = vand.u32 %v656, 4294901760
        %v2089 = vsub.f32 %v656, %v2088
        %2090 = vmatprep.subr.mxu0 %v2089
        %v2091 = vand.u32 %v655, 4294901760
        %v2092 = vsub.f32 %v655, %v2091
        %2093 = vmatpush1.msra.mxu0 %v2092
        %v2094 = vand.u32 %v648, 4294901760
        %v2095 = vsub.f32 %v648, %v2094
        %2096 = vmatprep.subr.mxu0 %v2095
        %v2097 = vand.u32 %v647, 4294901760
        %v2098 = vsub.f32 %v647, %v2097
        %2099 = vmatpush1.msra.mxu0 %v2098
        %v2100 = vand.u32 %v640, 4294901760
        %v2101 = vsub.f32 %v640, %v2100
        %2102 = vmatprep.subr.mxu0 %v2101
        %v2103 = vand.u32 %v639, 4294901760
        %v2104 = vsub.f32 %v639, %v2103
        %2105 = vmatpush1.msra.mxu0 %v2104
        %v2106 = vand.u32 %v632, 4294901760
        %v2107 = vsub.f32 %v632, %v2106
        %2108 = vmatprep.subr.mxu0 %v2107
        %v2109 = vand.u32 %v631, 4294901760
        %v2110 = vsub.f32 %v631, %v2109
        %2111 = vmatpush1.msra.mxu0 %v2110
        %2112 = vmatprep.subr.mxu0 0.0
        %2113 = vmatpush2.msra.mxu0 0.0
        %2114 = vmatprep.subr.mxu0 0.0
        %2115 = vmatpush2.msra.mxu0 0.0
        %2116 = vmatprep.subr.mxu0 0.0
        %2117 = vmatpush2.msra.mxu0 0.0
        %2118 = vmatprep.subr.mxu0 0.0
        %2119 = vmatpush2.msra.mxu0 0.0
        %2120 = vmatprep.subr.mxu0 0.0
        %2121 = vmatpush2.msra.mxu0 0.0
        %2122 = vmatprep.subr.mxu0 0.0
        %2123 = vmatpush2.msra.mxu0 0.0
        %2124 = vmatprep.subr.mxu0 0.0
        %2125 = vmatpush2.msra.mxu0 0.0
        %2126 = vmatprep.subr.mxu0 0.0
        %2127 = vmatpush2.msra.mxu0 0.0
        %2128 = vmatprep.subr.mxu0 0.0
        %2129 = vmatpush2.msra.mxu0 0.0
        %2130 = vmatprep.subr.mxu0 0.0
        %2131 = vmatpush2.msra.mxu0 0.0
        %2132 = vmatprep.subr.mxu0 0.0
        %2133 = vmatpush2.msra.mxu0 0.0
        %2134 = vmatprep.subr.mxu0 0.0
        %2135 = vmatpush2.msra.mxu0 0.0
        %2136 = vmatprep.subr.mxu0 0.0
        %2137 = vmatpush2.msra.mxu0 0.0
        %2138 = vmatprep.subr.mxu0 0.0
        %2139 = vmatpush2.msra.mxu0 0.0
        %2140 = vmatprep.subr.mxu0 0.0
        %2141 = vmatpush2.msra.mxu0 0.0
        %2142 = vmatprep.subr.mxu0 0.0
        %2143 = vmatpush2.msra.mxu0 0.0
        %2144 = vmatprep.mubr.f32.mxu0 0.0
        %v2145 = vand.u32 %v661, 4294901760
        %v2146 = vsub.f32 %v661, %v2145
        %2147 = vmatmul.mubr.f32.gmra.mxu0 %v2146
        %v2148 = vpop.f32.mrf.mxu0
        %v2149 = vadd.f32 %v2053, %v2148
        %v2150 = vpop.f32.mrf.mxu0
        %v2151 = vadd.f32 %v2055, %v2150
        %2152 = vmatprep.mubr.f32.mxu0 0.0
        %v2153 = vand.u32 %v664, 4294901760
        %v2154 = vsub.f32 %v664, %v2153
        %2155 = vmatmul.mubr.f32.gmra.mxu0 %v2154
        %v2156 = vpop.f32.mrf.mxu0
        %v2157 = vadd.f32 %v2060, %v2156
        %v2158 = vpop.f32.mrf.mxu0
        %v2159 = vadd.f32 %v2062, %v2158
        %2160 = vdwg.mxu0
        %2161 = vmatprep.subr.mxu0 0.0
        %2162 = vmatpush1.msra.mxu0 0.0
        %2163 = vmatprep.subr.mxu0 0.0
        %2164 = vmatpush1.msra.mxu0 0.0
        %2165 = vmatprep.subr.mxu0 0.0
        %2166 = vmatpush1.msra.mxu0 0.0
        %2167 = vmatprep.subr.mxu0 0.0
        %2168 = vmatpush1.msra.mxu0 0.0
        %2169 = vmatprep.subr.mxu0 0.0
        %2170 = vmatpush1.msra.mxu0 0.0
        %2171 = vmatprep.subr.mxu0 0.0
        %2172 = vmatpush1.msra.mxu0 0.0
        %2173 = vmatprep.subr.mxu0 0.0
        %2174 = vmatpush1.msra.mxu0 0.0
        %2175 = vmatprep.subr.mxu0 0.0
        %2176 = vmatpush1.msra.mxu0 0.0
        %2177 = vmatprep.subr.mxu0 0.0
        %2178 = vmatpush1.msra.mxu0 0.0
        %2179 = vmatprep.subr.mxu0 0.0
        %2180 = vmatpush1.msra.mxu0 0.0
        %2181 = vmatprep.subr.mxu0 0.0
        %2182 = vmatpush1.msra.mxu0 0.0
        %2183 = vmatprep.subr.mxu0 0.0
        %2184 = vmatpush1.msra.mxu0 0.0
        %v2185 = vand.u32 %v656, 4294901760
        %2186 = vmatprep.subr.mxu0 %v2185
        %v2187 = vand.u32 %v655, 4294901760
        %2188 = vmatpush1.msra.mxu0 %v2187
        %v2189 = vand.u32 %v648, 4294901760
        %2190 = vmatprep.subr.mxu0 %v2189
        %v2191 = vand.u32 %v647, 4294901760
        %2192 = vmatpush1.msra.mxu0 %v2191
        %v2193 = vand.u32 %v640, 4294901760
        %2194 = vmatprep.subr.mxu0 %v2193
        %v2195 = vand.u32 %v639, 4294901760
        %2196 = vmatpush1.msra.mxu0 %v2195
        %v2197 = vand.u32 %v632, 4294901760
        %2198 = vmatprep.subr.mxu0 %v2197
        %v2199 = vand.u32 %v631, 4294901760
        %2200 = vmatpush1.msra.mxu0 %v2199
        %2201 = vmatprep.subr.mxu0 0.0
        %2202 = vmatpush2.msra.mxu0 0.0
        %2203 = vmatprep.subr.mxu0 0.0
        %2204 = vmatpush2.msra.mxu0 0.0
        %2205 = vmatprep.subr.mxu0 0.0
        %2206 = vmatpush2.msra.mxu0 0.0
        %2207 = vmatprep.subr.mxu0 0.0
        %2208 = vmatpush2.msra.mxu0 0.0
        %2209 = vmatprep.subr.mxu0 0.0
        %2210 = vmatpush2.msra.mxu0 0.0
        %2211 = vmatprep.subr.mxu0 0.0
        %2212 = vmatpush2.msra.mxu0 0.0
        %2213 = vmatprep.subr.mxu0 0.0
        %2214 = vmatpush2.msra.mxu0 0.0
        %2215 = vmatprep.subr.mxu0 0.0
        %2216 = vmatpush2.msra.mxu0 0.0
        %2217 = vmatprep.subr.mxu0 0.0
        %2218 = vmatpush2.msra.mxu0 0.0
        %2219 = vmatprep.subr.mxu0 0.0
        %2220 = vmatpush2.msra.mxu0 0.0
        %2221 = vmatprep.subr.mxu0 0.0
        %2222 = vmatpush2.msra.mxu0 0.0
        %2223 = vmatprep.subr.mxu0 0.0
        %2224 = vmatpush2.msra.mxu0 0.0
        %2225 = vmatprep.subr.mxu0 0.0
        %2226 = vmatpush2.msra.mxu0 0.0
        %2227 = vmatprep.subr.mxu0 0.0
        %2228 = vmatpush2.msra.mxu0 0.0
        %2229 = vmatprep.subr.mxu0 0.0
        %2230 = vmatpush2.msra.mxu0 0.0
        %2231 = vmatprep.subr.mxu0 0.0
        %2232 = vmatpush2.msra.mxu0 0.0
        %2233 = vmatprep.mubr.f32.mxu0 0.0
        %v2234 = vand.u32 %v661, 4294901760
        %v2235 = vsub.f32 %v661, %v2234
        %v2236 = vand.u32 %v2235, 4294901760
        %2237 = vmatmul.mubr.f32.gmra.mxu0 %v2236
        %v2238 = vpop.f32.mrf.mxu0
        %v2239 = vadd.f32 %v2149, %v2238
        %v2240 = vpop.f32.mrf.mxu0
        %v2241 = vadd.f32 %v2151, %v2240
        %2242 = vmatprep.mubr.f32.mxu0 0.0
        %v2243 = vand.u32 %v664, 4294901760
        %v2244 = vsub.f32 %v664, %v2243
        %v2245 = vand.u32 %v2244, 4294901760
        %2246 = vmatmul.mubr.f32.gmra.mxu0 %v2245
        %v2247 = vpop.f32.mrf.mxu0
        %v2248 = vadd.f32 %v2157, %v2247
        %v2249 = vpop.f32.mrf.mxu0
        %v2250 = vadd.f32 %v2159, %v2249
        %2251 = vdwg.mxu0
        %2252 = vmatprep.subr.mxu0 0.0
        %2253 = vmatpush1.msra.mxu0 0.0
        %2254 = vmatprep.subr.mxu0 0.0
        %2255 = vmatpush1.msra.mxu0 0.0
        %2256 = vmatprep.subr.mxu0 0.0
        %2257 = vmatpush1.msra.mxu0 0.0
        %2258 = vmatprep.subr.mxu0 0.0
        %2259 = vmatpush1.msra.mxu0 0.0
        %2260 = vmatprep.subr.mxu0 0.0
        %2261 = vmatpush1.msra.mxu0 0.0
        %2262 = vmatprep.subr.mxu0 0.0
        %2263 = vmatpush1.msra.mxu0 0.0
        %2264 = vmatprep.subr.mxu0 0.0
        %2265 = vmatpush1.msra.mxu0 0.0
        %2266 = vmatprep.subr.mxu0 0.0
        %2267 = vmatpush1.msra.mxu0 0.0
        %2268 = vmatprep.subr.mxu0 0.0
        %2269 = vmatpush1.msra.mxu0 0.0
        %2270 = vmatprep.subr.mxu0 0.0
        %2271 = vmatpush1.msra.mxu0 0.0
        %2272 = vmatprep.subr.mxu0 0.0
        %2273 = vmatpush1.msra.mxu0 0.0
        %2274 = vmatprep.subr.mxu0 0.0
        %2275 = vmatpush1.msra.mxu0 0.0
        %v2276 = vand.u32 %v656, 4294901760
        %v2277 = vsub.f32 %v656, %v2276
        %v2278 = vand.u32 %v2277, 4294901760
        %2279 = vmatprep.subr.mxu0 %v2278
        %v2280 = vand.u32 %v655, 4294901760
        %v2281 = vsub.f32 %v655, %v2280
        %v2282 = vand.u32 %v2281, 4294901760
        %2283 = vmatpush1.msra.mxu0 %v2282
        %v2284 = vand.u32 %v648, 4294901760
        %v2285 = vsub.f32 %v648, %v2284
        %v2286 = vand.u32 %v2285, 4294901760
        %2287 = vmatprep.subr.mxu0 %v2286
        %v2288 = vand.u32 %v647, 4294901760
        %v2289 = vsub.f32 %v647, %v2288
        %v2290 = vand.u32 %v2289, 4294901760
        %2291 = vmatpush1.msra.mxu0 %v2290
        %v2292 = vand.u32 %v640, 4294901760
        %v2293 = vsub.f32 %v640, %v2292
        %v2294 = vand.u32 %v2293, 4294901760
        %2295 = vmatprep.subr.mxu0 %v2294
        %v2296 = vand.u32 %v639, 4294901760
        %v2297 = vsub.f32 %v639, %v2296
        %v2298 = vand.u32 %v2297, 4294901760
        %2299 = vmatpush1.msra.mxu0 %v2298
        %v2300 = vand.u32 %v632, 4294901760
        %v2301 = vsub.f32 %v632, %v2300
        %v2302 = vand.u32 %v2301, 4294901760
        %2303 = vmatprep.subr.mxu0 %v2302
        %v2304 = vand.u32 %v631, 4294901760
        %v2305 = vsub.f32 %v631, %v2304
        %v2306 = vand.u32 %v2305, 4294901760
        %2307 = vmatpush1.msra.mxu0 %v2306
        %2308 = vmatprep.subr.mxu0 0.0
        %2309 = vmatpush2.msra.mxu0 0.0
        %2310 = vmatprep.subr.mxu0 0.0
        %2311 = vmatpush2.msra.mxu0 0.0
        %2312 = vmatprep.subr.mxu0 0.0
        %2313 = vmatpush2.msra.mxu0 0.0
        %2314 = vmatprep.subr.mxu0 0.0
        %2315 = vmatpush2.msra.mxu0 0.0
        %2316 = vmatprep.subr.mxu0 0.0
        %2317 = vmatpush2.msra.mxu0 0.0
        %2318 = vmatprep.subr.mxu0 0.0
        %2319 = vmatpush2.msra.mxu0 0.0
        %2320 = vmatprep.subr.mxu0 0.0
        %2321 = vmatpush2.msra.mxu0 0.0
        %2322 = vmatprep.subr.mxu0 0.0
        %2323 = vmatpush2.msra.mxu0 0.0
        %2324 = vmatprep.subr.mxu0 0.0
        %2325 = vmatpush2.msra.mxu0 0.0
        %2326 = vmatprep.subr.mxu0 0.0
        %2327 = vmatpush2.msra.mxu0 0.0
        %2328 = vmatprep.subr.mxu0 0.0
        %2329 = vmatpush2.msra.mxu0 0.0
        %2330 = vmatprep.subr.mxu0 0.0
        %2331 = vmatpush2.msra.mxu0 0.0
        %2332 = vmatprep.subr.mxu0 0.0
        %2333 = vmatpush2.msra.mxu0 0.0
        %2334 = vmatprep.subr.mxu0 0.0
        %2335 = vmatpush2.msra.mxu0 0.0
        %2336 = vmatprep.subr.mxu0 0.0
        %2337 = vmatpush2.msra.mxu0 0.0
        %2338 = vmatprep.subr.mxu0 0.0
        %2339 = vmatpush2.msra.mxu0 0.0
        %2340 = vmatprep.mubr.f32.mxu0 0.0
        %v2341 = vand.u32 %v661, 4294901760
        %2342 = vmatmul.mubr.f32.gmra.mxu0 %v2341
        %v2343 = vpop.f32.mrf.mxu0
        %v2344 = vadd.f32 %v2239, %v2343
        %v2345 = vpop.f32.mrf.mxu0
        %v2346 = vadd.f32 %v2241, %v2345
        %2347 = vmatprep.mubr.f32.mxu0 0.0
        %v2348 = vand.u32 %v664, 4294901760
        %2349 = vmatmul.mubr.f32.gmra.mxu0 %v2348
        %v2350 = vpop.f32.mrf.mxu0
        %v2351 = vadd.f32 %v2248, %v2350
        %v2352 = vpop.f32.mrf.mxu0
        %v2353 = vadd.f32 %v2250, %v2352
        %2354 = vdwg.mxu0
        %2355 = vmatprep.subr.mxu0 0.0
        %2356 = vmatpush1.msra.mxu0 0.0
        %2357 = vmatprep.subr.mxu0 0.0
        %2358 = vmatpush1.msra.mxu0 0.0
        %2359 = vmatprep.subr.mxu0 0.0
        %2360 = vmatpush1.msra.mxu0 0.0
        %2361 = vmatprep.subr.mxu0 0.0
        %2362 = vmatpush1.msra.mxu0 0.0
        %2363 = vmatprep.subr.mxu0 0.0
        %2364 = vmatpush1.msra.mxu0 0.0
        %2365 = vmatprep.subr.mxu0 0.0
        %2366 = vmatpush1.msra.mxu0 0.0
        %2367 = vmatprep.subr.mxu0 0.0
        %2368 = vmatpush1.msra.mxu0 0.0
        %2369 = vmatprep.subr.mxu0 0.0
        %2370 = vmatpush1.msra.mxu0 0.0
        %2371 = vmatprep.subr.mxu0 0.0
        %2372 = vmatpush1.msra.mxu0 0.0
        %2373 = vmatprep.subr.mxu0 0.0
        %2374 = vmatpush1.msra.mxu0 0.0
        %2375 = vmatprep.subr.mxu0 0.0
        %2376 = vmatpush1.msra.mxu0 0.0
        %2377 = vmatprep.subr.mxu0 0.0
        %2378 = vmatpush1.msra.mxu0 0.0
        %v2379 = vand.u32 %v656, 4294901760
        %2380 = vmatprep.subr.mxu0 %v2379
        %v2381 = vand.u32 %v655, 4294901760
        %2382 = vmatpush1.msra.mxu0 %v2381
        %v2383 = vand.u32 %v648, 4294901760
        %2384 = vmatprep.subr.mxu0 %v2383
        %v2385 = vand.u32 %v647, 4294901760
        %2386 = vmatpush1.msra.mxu0 %v2385
        %v2387 = vand.u32 %v640, 4294901760
        %2388 = vmatprep.subr.mxu0 %v2387
        %v2389 = vand.u32 %v639, 4294901760
        %2390 = vmatpush1.msra.mxu0 %v2389
        %v2391 = vand.u32 %v632, 4294901760
        %2392 = vmatprep.subr.mxu0 %v2391
        %v2393 = vand.u32 %v631, 4294901760
        %2394 = vmatpush1.msra.mxu0 %v2393
        %2395 = vmatprep.subr.mxu0 0.0
        %2396 = vmatpush2.msra.mxu0 0.0
        %2397 = vmatprep.subr.mxu0 0.0
        %2398 = vmatpush2.msra.mxu0 0.0
        %2399 = vmatprep.subr.mxu0 0.0
        %2400 = vmatpush2.msra.mxu0 0.0
        %2401 = vmatprep.subr.mxu0 0.0
        %2402 = vmatpush2.msra.mxu0 0.0
        %2403 = vmatprep.subr.mxu0 0.0
        %2404 = vmatpush2.msra.mxu0 0.0
        %2405 = vmatprep.subr.mxu0 0.0
        %2406 = vmatpush2.msra.mxu0 0.0
        %2407 = vmatprep.subr.mxu0 0.0
        %2408 = vmatpush2.msra.mxu0 0.0
        %2409 = vmatprep.subr.mxu0 0.0
        %2410 = vmatpush2.msra.mxu0 0.0
        %2411 = vmatprep.subr.mxu0 0.0
        %2412 = vmatpush2.msra.mxu0 0.0
        %2413 = vmatprep.subr.mxu0 0.0
        %2414 = vmatpush2.msra.mxu0 0.0
        %2415 = vmatprep.subr.mxu0 0.0
        %2416 = vmatpush2.msra.mxu0 0.0
        %2417 = vmatprep.subr.mxu0 0.0
        %2418 = vmatpush2.msra.mxu0 0.0
        %2419 = vmatprep.subr.mxu0 0.0
        %2420 = vmatpush2.msra.mxu0 0.0
        %2421 = vmatprep.subr.mxu0 0.0
        %2422 = vmatpush2.msra.mxu0 0.0
        %2423 = vmatprep.subr.mxu0 0.0
        %2424 = vmatpush2.msra.mxu0 0.0
        %2425 = vmatprep.subr.mxu0 0.0
        %2426 = vmatpush2.msra.mxu0 0.0
        %2427 = vmatprep.mubr.f32.mxu0 0.0
        %v2428 = vand.u32 %v661, 4294901760
        %2429 = vmatmul.mubr.f32.gmra.mxu0 %v2428
        %v2430 = vpop.f32.mrf.mxu0
        %v2431 = vadd.f32 %v2344, %v2430
        %v2432 = vpop.f32.mrf.mxu0
        %v2433 = vadd.f32 %v2346, %v2432
        %2434 = vmatprep.mubr.f32.mxu0 0.0
        %v2435 = vand.u32 %v664, 4294901760
        %2436 = vmatmul.mubr.f32.gmra.mxu0 %v2435
        %v2437 = vpop.f32.mrf.mxu0
        %v2438 = vadd.f32 %v2351, %v2437
        %v2439 = vpop.f32.mrf.mxu0
        %v2440 = vadd.f32 %v2353, %v2439
        %2441 = vdwg.mxu0
        %2442 = vmatprep.subr.mxu0 0.0
        %2443 = vmatpush1.msra.mxu0 0.0
        %2444 = vmatprep.subr.mxu0 0.0
        %2445 = vmatpush1.msra.mxu0 0.0
        %2446 = vmatprep.subr.mxu0 0.0
        %2447 = vmatpush1.msra.mxu0 0.0
        %2448 = vmatprep.subr.mxu0 0.0
        %2449 = vmatpush1.msra.mxu0 0.0
        %2450 = vmatprep.subr.mxu0 0.0
        %2451 = vmatpush1.msra.mxu0 0.0
        %2452 = vmatprep.subr.mxu0 0.0
        %2453 = vmatpush1.msra.mxu0 0.0
        %2454 = vmatprep.subr.mxu0 0.0
        %2455 = vmatpush1.msra.mxu0 0.0
        %2456 = vmatprep.subr.mxu0 0.0
        %2457 = vmatpush1.msra.mxu0 0.0
        %2458 = vmatprep.subr.mxu0 0.0
        %2459 = vmatpush1.msra.mxu0 0.0
        %2460 = vmatprep.subr.mxu0 0.0
        %2461 = vmatpush1.msra.mxu0 0.0
        %2462 = vmatprep.subr.mxu0 0.0
        %2463 = vmatpush1.msra.mxu0 0.0
        %2464 = vmatprep.subr.mxu0 0.0
        %2465 = vmatpush1.msra.mxu0 0.0
        %v2466 = vand.u32 %v658, 4294901760
        %2467 = vmatprep.subr.mxu0 %v2466
        %v2468 = vand.u32 %v657, 4294901760
        %2469 = vmatpush1.msra.mxu0 %v2468
        %v2470 = vand.u32 %v650, 4294901760
        %2471 = vmatprep.subr.mxu0 %v2470
        %v2472 = vand.u32 %v649, 4294901760
        %2473 = vmatpush1.msra.mxu0 %v2472
        %v2474 = vand.u32 %v642, 4294901760
        %2475 = vmatprep.subr.mxu0 %v2474
        %v2476 = vand.u32 %v641, 4294901760
        %2477 = vmatpush1.msra.mxu0 %v2476
        %v2478 = vand.u32 %v634, 4294901760
        %2479 = vmatprep.subr.mxu0 %v2478
        %v2480 = vand.u32 %v633, 4294901760
        %2481 = vmatpush1.msra.mxu0 %v2480
        %2482 = vmatprep.subr.mxu0 0.0
        %2483 = vmatpush2.msra.mxu0 0.0
        %2484 = vmatprep.subr.mxu0 0.0
        %2485 = vmatpush2.msra.mxu0 0.0
        %2486 = vmatprep.subr.mxu0 0.0
        %2487 = vmatpush2.msra.mxu0 0.0
        %2488 = vmatprep.subr.mxu0 0.0
        %2489 = vmatpush2.msra.mxu0 0.0
        %2490 = vmatprep.subr.mxu0 0.0
        %2491 = vmatpush2.msra.mxu0 0.0
        %2492 = vmatprep.subr.mxu0 0.0
        %2493 = vmatpush2.msra.mxu0 0.0
        %2494 = vmatprep.subr.mxu0 0.0
        %2495 = vmatpush2.msra.mxu0 0.0
        %2496 = vmatprep.subr.mxu0 0.0
        %2497 = vmatpush2.msra.mxu0 0.0
        %2498 = vmatprep.subr.mxu0 0.0
        %2499 = vmatpush2.msra.mxu0 0.0
        %2500 = vmatprep.subr.mxu0 0.0
        %2501 = vmatpush2.msra.mxu0 0.0
        %2502 = vmatprep.subr.mxu0 0.0
        %2503 = vmatpush2.msra.mxu0 0.0
        %2504 = vmatprep.subr.mxu0 0.0
        %2505 = vmatpush2.msra.mxu0 0.0
        %2506 = vmatprep.subr.mxu0 0.0
        %2507 = vmatpush2.msra.mxu0 0.0
        %2508 = vmatprep.subr.mxu0 0.0
        %2509 = vmatpush2.msra.mxu0 0.0
        %2510 = vmatprep.subr.mxu0 0.0
        %2511 = vmatpush2.msra.mxu0 0.0
        %2512 = vmatprep.subr.mxu0 0.0
        %2513 = vmatpush2.msra.mxu0 0.0
        %2514 = vmatprep.mubr.f32.mxu0 0.0
        %v2515 = vand.u32 %v661, 4294901760
        %v2516 = vsub.f32 %v661, %v2515
        %v2517 = vand.u32 %v2516, 4294901760
        %v2518 = vsub.f32 %v2516, %v2517
        %v2519 = vand.u32 %v2518, 4294901760
        %2520 = vmatmul.mubr.f32.gmra.mxu0 %v2519
        %v2521 = vpop.f32.mrf.mxu0
        %v2522 = vadd.f32 0.0, %v2521
        %v2523 = vpop.f32.mrf.mxu0
        %v2524 = vadd.f32 0.0, %v2523
        %2525 = vmatprep.mubr.f32.mxu0 0.0
        %v2526 = vand.u32 %v664, 4294901760
        %v2527 = vsub.f32 %v664, %v2526
        %v2528 = vand.u32 %v2527, 4294901760
        %v2529 = vsub.f32 %v2527, %v2528
        %v2530 = vand.u32 %v2529, 4294901760
        %2531 = vmatmul.mubr.f32.gmra.mxu0 %v2530
        %v2532 = vpop.f32.mrf.mxu0
        %v2533 = vadd.f32 0.0, %v2532
        %v2534 = vpop.f32.mrf.mxu0
        %v2535 = vadd.f32 0.0, %v2534
        %2536 = vdwg.mxu0
        %2537 = vmatprep.subr.mxu0 0.0
        %2538 = vmatpush1.msra.mxu0 0.0
        %2539 = vmatprep.subr.mxu0 0.0
        %2540 = vmatpush1.msra.mxu0 0.0
        %2541 = vmatprep.subr.mxu0 0.0
        %2542 = vmatpush1.msra.mxu0 0.0
        %2543 = vmatprep.subr.mxu0 0.0
        %2544 = vmatpush1.msra.mxu0 0.0
        %2545 = vmatprep.subr.mxu0 0.0
        %2546 = vmatpush1.msra.mxu0 0.0
        %2547 = vmatprep.subr.mxu0 0.0
        %2548 = vmatpush1.msra.mxu0 0.0
        %2549 = vmatprep.subr.mxu0 0.0
        %2550 = vmatpush1.msra.mxu0 0.0
        %2551 = vmatprep.subr.mxu0 0.0
        %2552 = vmatpush1.msra.mxu0 0.0
        %2553 = vmatprep.subr.mxu0 0.0
        %2554 = vmatpush1.msra.mxu0 0.0
        %2555 = vmatprep.subr.mxu0 0.0
        %2556 = vmatpush1.msra.mxu0 0.0
        %2557 = vmatprep.subr.mxu0 0.0
        %2558 = vmatpush1.msra.mxu0 0.0
        %2559 = vmatprep.subr.mxu0 0.0
        %2560 = vmatpush1.msra.mxu0 0.0
        %v2561 = vand.u32 %v658, 4294901760
        %v2562 = vsub.f32 %v658, %v2561
        %v2563 = vand.u32 %v2562, 4294901760
        %v2564 = vsub.f32 %v2562, %v2563
        %v2565 = vand.u32 %v2564, 4294901760
        %2566 = vmatprep.subr.mxu0 %v2565
        %v2567 = vand.u32 %v657, 4294901760
        %v2568 = vsub.f32 %v657, %v2567
        %v2569 = vand.u32 %v2568, 4294901760
        %v2570 = vsub.f32 %v2568, %v2569
        %v2571 = vand.u32 %v2570, 4294901760
        %2572 = vmatpush1.msra.mxu0 %v2571
        %v2573 = vand.u32 %v650, 4294901760
        %v2574 = vsub.f32 %v650, %v2573
        %v2575 = vand.u32 %v2574, 4294901760
        %v2576 = vsub.f32 %v2574, %v2575
        %v2577 = vand.u32 %v2576, 4294901760
        %2578 = vmatprep.subr.mxu0 %v2577
        %v2579 = vand.u32 %v649, 4294901760
        %v2580 = vsub.f32 %v649, %v2579
        %v2581 = vand.u32 %v2580, 4294901760
        %v2582 = vsub.f32 %v2580, %v2581
        %v2583 = vand.u32 %v2582, 4294901760
        %2584 = vmatpush1.msra.mxu0 %v2583
        %v2585 = vand.u32 %v642, 4294901760
        %v2586 = vsub.f32 %v642, %v2585
        %v2587 = vand.u32 %v2586, 4294901760
        %v2588 = vsub.f32 %v2586, %v2587
        %v2589 = vand.u32 %v2588, 4294901760
        %2590 = vmatprep.subr.mxu0 %v2589
        %v2591 = vand.u32 %v641, 4294901760
        %v2592 = vsub.f32 %v641, %v2591
        %v2593 = vand.u32 %v2592, 4294901760
        %v2594 = vsub.f32 %v2592, %v2593
        %v2595 = vand.u32 %v2594, 4294901760
        %2596 = vmatpush1.msra.mxu0 %v2595
        %v2597 = vand.u32 %v634, 4294901760
        %v2598 = vsub.f32 %v634, %v2597
        %v2599 = vand.u32 %v2598, 4294901760
        %v2600 = vsub.f32 %v2598, %v2599
        %v2601 = vand.u32 %v2600, 4294901760
        %2602 = vmatprep.subr.mxu0 %v2601
        %v2603 = vand.u32 %v633, 4294901760
        %v2604 = vsub.f32 %v633, %v2603
        %v2605 = vand.u32 %v2604, 4294901760
        %v2606 = vsub.f32 %v2604, %v2605
        %v2607 = vand.u32 %v2606, 4294901760
        %2608 = vmatpush1.msra.mxu0 %v2607
        %2609 = vmatprep.subr.mxu0 0.0
        %2610 = vmatpush2.msra.mxu0 0.0
        %2611 = vmatprep.subr.mxu0 0.0
        %2612 = vmatpush2.msra.mxu0 0.0
        %2613 = vmatprep.subr.mxu0 0.0
        %2614 = vmatpush2.msra.mxu0 0.0
        %2615 = vmatprep.subr.mxu0 0.0
        %2616 = vmatpush2.msra.mxu0 0.0
        %2617 = vmatprep.subr.mxu0 0.0
        %2618 = vmatpush2.msra.mxu0 0.0
        %2619 = vmatprep.subr.mxu0 0.0
        %2620 = vmatpush2.msra.mxu0 0.0
        %2621 = vmatprep.subr.mxu0 0.0
        %2622 = vmatpush2.msra.mxu0 0.0
        %2623 = vmatprep.subr.mxu0 0.0
        %2624 = vmatpush2.msra.mxu0 0.0
        %2625 = vmatprep.subr.mxu0 0.0
        %2626 = vmatpush2.msra.mxu0 0.0
        %2627 = vmatprep.subr.mxu0 0.0
        %2628 = vmatpush2.msra.mxu0 0.0
        %2629 = vmatprep.subr.mxu0 0.0
        %2630 = vmatpush2.msra.mxu0 0.0
        %2631 = vmatprep.subr.mxu0 0.0
        %2632 = vmatpush2.msra.mxu0 0.0
        %2633 = vmatprep.subr.mxu0 0.0
        %2634 = vmatpush2.msra.mxu0 0.0
        %2635 = vmatprep.subr.mxu0 0.0
        %2636 = vmatpush2.msra.mxu0 0.0
        %2637 = vmatprep.subr.mxu0 0.0
        %2638 = vmatpush2.msra.mxu0 0.0
        %2639 = vmatprep.subr.mxu0 0.0
        %2640 = vmatpush2.msra.mxu0 0.0
        %2641 = vmatprep.mubr.f32.mxu0 0.0
        %v2642 = vand.u32 %v661, 4294901760
        %2643 = vmatmul.mubr.f32.gmra.mxu0 %v2642
        %v2644 = vpop.f32.mrf.mxu0
        %v2645 = vadd.f32 %v2522, %v2644
        %v2646 = vpop.f32.mrf.mxu0
        %v2647 = vadd.f32 %v2524, %v2646
        %2648 = vmatprep.mubr.f32.mxu0 0.0
        %v2649 = vand.u32 %v664, 4294901760
        %2650 = vmatmul.mubr.f32.gmra.mxu0 %v2649
        %v2651 = vpop.f32.mrf.mxu0
        %v2652 = vadd.f32 %v2533, %v2651
        %v2653 = vpop.f32.mrf.mxu0
        %v2654 = vadd.f32 %v2535, %v2653
        %2655 = vdwg.mxu0
        %2656 = vmatprep.subr.mxu0 0.0
        %2657 = vmatpush1.msra.mxu0 0.0
        %2658 = vmatprep.subr.mxu0 0.0
        %2659 = vmatpush1.msra.mxu0 0.0
        %2660 = vmatprep.subr.mxu0 0.0
        %2661 = vmatpush1.msra.mxu0 0.0
        %2662 = vmatprep.subr.mxu0 0.0
        %2663 = vmatpush1.msra.mxu0 0.0
        %2664 = vmatprep.subr.mxu0 0.0
        %2665 = vmatpush1.msra.mxu0 0.0
        %2666 = vmatprep.subr.mxu0 0.0
        %2667 = vmatpush1.msra.mxu0 0.0
        %2668 = vmatprep.subr.mxu0 0.0
        %2669 = vmatpush1.msra.mxu0 0.0
        %2670 = vmatprep.subr.mxu0 0.0
        %2671 = vmatpush1.msra.mxu0 0.0
        %2672 = vmatprep.subr.mxu0 0.0
        %2673 = vmatpush1.msra.mxu0 0.0
        %2674 = vmatprep.subr.mxu0 0.0
        %2675 = vmatpush1.msra.mxu0 0.0
        %2676 = vmatprep.subr.mxu0 0.0
        %2677 = vmatpush1.msra.mxu0 0.0
        %2678 = vmatprep.subr.mxu0 0.0
        %2679 = vmatpush1.msra.mxu0 0.0
        %v2680 = vand.u32 %v658, 4294901760
        %v2681 = vsub.f32 %v658, %v2680
        %2682 = vmatprep.subr.mxu0 %v2681
        %v2683 = vand.u32 %v657, 4294901760
        %v2684 = vsub.f32 %v657, %v2683
        %2685 = vmatpush1.msra.mxu0 %v2684
        %v2686 = vand.u32 %v650, 4294901760
        %v2687 = vsub.f32 %v650, %v2686
        %2688 = vmatprep.subr.mxu0 %v2687
        %v2689 = vand.u32 %v649, 4294901760
        %v2690 = vsub.f32 %v649, %v2689
        %2691 = vmatpush1.msra.mxu0 %v2690
        %v2692 = vand.u32 %v642, 4294901760
        %v2693 = vsub.f32 %v642, %v2692
        %2694 = vmatprep.subr.mxu0 %v2693
        %v2695 = vand.u32 %v641, 4294901760
        %v2696 = vsub.f32 %v641, %v2695
        %2697 = vmatpush1.msra.mxu0 %v2696
        %v2698 = vand.u32 %v634, 4294901760
        %v2699 = vsub.f32 %v634, %v2698
        %2700 = vmatprep.subr.mxu0 %v2699
        %v2701 = vand.u32 %v633, 4294901760
        %v2702 = vsub.f32 %v633, %v2701
        %2703 = vmatpush1.msra.mxu0 %v2702
        %2704 = vmatprep.subr.mxu0 0.0
        %2705 = vmatpush2.msra.mxu0 0.0
        %2706 = vmatprep.subr.mxu0 0.0
        %2707 = vmatpush2.msra.mxu0 0.0
        %2708 = vmatprep.subr.mxu0 0.0
        %2709 = vmatpush2.msra.mxu0 0.0
        %2710 = vmatprep.subr.mxu0 0.0
        %2711 = vmatpush2.msra.mxu0 0.0
        %2712 = vmatprep.subr.mxu0 0.0
        %2713 = vmatpush2.msra.mxu0 0.0
        %2714 = vmatprep.subr.mxu0 0.0
        %2715 = vmatpush2.msra.mxu0 0.0
        %2716 = vmatprep.subr.mxu0 0.0
        %2717 = vmatpush2.msra.mxu0 0.0
        %2718 = vmatprep.subr.mxu0 0.0
        %2719 = vmatpush2.msra.mxu0 0.0
        %2720 = vmatprep.subr.mxu0 0.0
        %2721 = vmatpush2.msra.mxu0 0.0
        %2722 = vmatprep.subr.mxu0 0.0
        %2723 = vmatpush2.msra.mxu0 0.0
        %2724 = vmatprep.subr.mxu0 0.0
        %2725 = vmatpush2.msra.mxu0 0.0
        %2726 = vmatprep.subr.mxu0 0.0
        %2727 = vmatpush2.msra.mxu0 0.0
        %2728 = vmatprep.subr.mxu0 0.0
        %2729 = vmatpush2.msra.mxu0 0.0
        %2730 = vmatprep.subr.mxu0 0.0
        %2731 = vmatpush2.msra.mxu0 0.0
        %2732 = vmatprep.subr.mxu0 0.0
        %2733 = vmatpush2.msra.mxu0 0.0
        %2734 = vmatprep.subr.mxu0 0.0
        %2735 = vmatpush2.msra.mxu0 0.0
        %2736 = vmatprep.mubr.f32.mxu0 0.0
        %v2737 = vand.u32 %v661, 4294901760
        %v2738 = vsub.f32 %v661, %v2737
        %2739 = vmatmul.mubr.f32.gmra.mxu0 %v2738
        %v2740 = vpop.f32.mrf.mxu0
        %v2741 = vadd.f32 %v2645, %v2740
        %v2742 = vpop.f32.mrf.mxu0
        %v2743 = vadd.f32 %v2647, %v2742
        %2744 = vmatprep.mubr.f32.mxu0 0.0
        %v2745 = vand.u32 %v664, 4294901760
        %v2746 = vsub.f32 %v664, %v2745
        %2747 = vmatmul.mubr.f32.gmra.mxu0 %v2746
        %v2748 = vpop.f32.mrf.mxu0
        %v2749 = vadd.f32 %v2652, %v2748
        %v2750 = vpop.f32.mrf.mxu0
        %v2751 = vadd.f32 %v2654, %v2750
        %2752 = vdwg.mxu0
        %2753 = vmatprep.subr.mxu0 0.0
        %2754 = vmatpush1.msra.mxu0 0.0
        %2755 = vmatprep.subr.mxu0 0.0
        %2756 = vmatpush1.msra.mxu0 0.0
        %2757 = vmatprep.subr.mxu0 0.0
        %2758 = vmatpush1.msra.mxu0 0.0
        %2759 = vmatprep.subr.mxu0 0.0
        %2760 = vmatpush1.msra.mxu0 0.0
        %2761 = vmatprep.subr.mxu0 0.0
        %2762 = vmatpush1.msra.mxu0 0.0
        %2763 = vmatprep.subr.mxu0 0.0
        %2764 = vmatpush1.msra.mxu0 0.0
        %2765 = vmatprep.subr.mxu0 0.0
        %2766 = vmatpush1.msra.mxu0 0.0
        %2767 = vmatprep.subr.mxu0 0.0
        %2768 = vmatpush1.msra.mxu0 0.0
        %2769 = vmatprep.subr.mxu0 0.0
        %2770 = vmatpush1.msra.mxu0 0.0
        %2771 = vmatprep.subr.mxu0 0.0
        %2772 = vmatpush1.msra.mxu0 0.0
        %2773 = vmatprep.subr.mxu0 0.0
        %2774 = vmatpush1.msra.mxu0 0.0
        %2775 = vmatprep.subr.mxu0 0.0
        %2776 = vmatpush1.msra.mxu0 0.0
        %v2777 = vand.u32 %v658, 4294901760
        %2778 = vmatprep.subr.mxu0 %v2777
        %v2779 = vand.u32 %v657, 4294901760
        %2780 = vmatpush1.msra.mxu0 %v2779
        %v2781 = vand.u32 %v650, 4294901760
        %2782 = vmatprep.subr.mxu0 %v2781
        %v2783 = vand.u32 %v649, 4294901760
        %2784 = vmatpush1.msra.mxu0 %v2783
        %v2785 = vand.u32 %v642, 4294901760
        %2786 = vmatprep.subr.mxu0 %v2785
        %v2787 = vand.u32 %v641, 4294901760
        %2788 = vmatpush1.msra.mxu0 %v2787
        %v2789 = vand.u32 %v634, 4294901760
        %2790 = vmatprep.subr.mxu0 %v2789
        %v2791 = vand.u32 %v633, 4294901760
        %2792 = vmatpush1.msra.mxu0 %v2791
        %2793 = vmatprep.subr.mxu0 0.0
        %2794 = vmatpush2.msra.mxu0 0.0
        %2795 = vmatprep.subr.mxu0 0.0
        %2796 = vmatpush2.msra.mxu0 0.0
        %2797 = vmatprep.subr.mxu0 0.0
        %2798 = vmatpush2.msra.mxu0 0.0
        %2799 = vmatprep.subr.mxu0 0.0
        %2800 = vmatpush2.msra.mxu0 0.0
        %2801 = vmatprep.subr.mxu0 0.0
        %2802 = vmatpush2.msra.mxu0 0.0
        %2803 = vmatprep.subr.mxu0 0.0
        %2804 = vmatpush2.msra.mxu0 0.0
        %2805 = vmatprep.subr.mxu0 0.0
        %2806 = vmatpush2.msra.mxu0 0.0
        %2807 = vmatprep.subr.mxu0 0.0
        %2808 = vmatpush2.msra.mxu0 0.0
        %2809 = vmatprep.subr.mxu0 0.0
        %2810 = vmatpush2.msra.mxu0 0.0
        %2811 = vmatprep.subr.mxu0 0.0
        %2812 = vmatpush2.msra.mxu0 0.0
        %2813 = vmatprep.subr.mxu0 0.0
        %2814 = vmatpush2.msra.mxu0 0.0
        %2815 = vmatprep.subr.mxu0 0.0
        %2816 = vmatpush2.msra.mxu0 0.0
        %2817 = vmatprep.subr.mxu0 0.0
        %2818 = vmatpush2.msra.mxu0 0.0
        %2819 = vmatprep.subr.mxu0 0.0
        %2820 = vmatpush2.msra.mxu0 0.0
        %2821 = vmatprep.subr.mxu0 0.0
        %2822 = vmatpush2.msra.mxu0 0.0
        %2823 = vmatprep.subr.mxu0 0.0
        %2824 = vmatpush2.msra.mxu0 0.0
        %2825 = vmatprep.mubr.f32.mxu0 0.0
        %v2826 = vand.u32 %v661, 4294901760
        %v2827 = vsub.f32 %v661, %v2826
        %v2828 = vand.u32 %v2827, 4294901760
        %2829 = vmatmul.mubr.f32.gmra.mxu0 %v2828
        %v2830 = vpop.f32.mrf.mxu0
        %v2831 = vadd.f32 %v2741, %v2830
        %v2832 = vpop.f32.mrf.mxu0
        %v2833 = vadd.f32 %v2743, %v2832
        %2834 = vmatprep.mubr.f32.mxu0 0.0
        %v2835 = vand.u32 %v664, 4294901760
        %v2836 = vsub.f32 %v664, %v2835
        %v2837 = vand.u32 %v2836, 4294901760
        %2838 = vmatmul.mubr.f32.gmra.mxu0 %v2837
        %v2839 = vpop.f32.mrf.mxu0
        %v2840 = vadd.f32 %v2749, %v2839
        %v2841 = vpop.f32.mrf.mxu0
        %v2842 = vadd.f32 %v2751, %v2841
        %2843 = vdwg.mxu0
        %2844 = vmatprep.subr.mxu0 0.0
        %2845 = vmatpush1.msra.mxu0 0.0
        %2846 = vmatprep.subr.mxu0 0.0
        %2847 = vmatpush1.msra.mxu0 0.0
        %2848 = vmatprep.subr.mxu0 0.0
        %2849 = vmatpush1.msra.mxu0 0.0
        %2850 = vmatprep.subr.mxu0 0.0
        %2851 = vmatpush1.msra.mxu0 0.0
        %2852 = vmatprep.subr.mxu0 0.0
        %2853 = vmatpush1.msra.mxu0 0.0
        %2854 = vmatprep.subr.mxu0 0.0
        %2855 = vmatpush1.msra.mxu0 0.0
        %2856 = vmatprep.subr.mxu0 0.0
        %2857 = vmatpush1.msra.mxu0 0.0
        %2858 = vmatprep.subr.mxu0 0.0
        %2859 = vmatpush1.msra.mxu0 0.0
        %2860 = vmatprep.subr.mxu0 0.0
        %2861 = vmatpush1.msra.mxu0 0.0
        %2862 = vmatprep.subr.mxu0 0.0
        %2863 = vmatpush1.msra.mxu0 0.0
        %2864 = vmatprep.subr.mxu0 0.0
        %2865 = vmatpush1.msra.mxu0 0.0
        %2866 = vmatprep.subr.mxu0 0.0
        %2867 = vmatpush1.msra.mxu0 0.0
        %v2868 = vand.u32 %v658, 4294901760
        %v2869 = vsub.f32 %v658, %v2868
        %v2870 = vand.u32 %v2869, 4294901760
        %2871 = vmatprep.subr.mxu0 %v2870
        %v2872 = vand.u32 %v657, 4294901760
        %v2873 = vsub.f32 %v657, %v2872
        %v2874 = vand.u32 %v2873, 4294901760
        %2875 = vmatpush1.msra.mxu0 %v2874
        %v2876 = vand.u32 %v650, 4294901760
        %v2877 = vsub.f32 %v650, %v2876
        %v2878 = vand.u32 %v2877, 4294901760
        %2879 = vmatprep.subr.mxu0 %v2878
        %v2880 = vand.u32 %v649, 4294901760
        %v2881 = vsub.f32 %v649, %v2880
        %v2882 = vand.u32 %v2881, 4294901760
        %2883 = vmatpush1.msra.mxu0 %v2882
        %v2884 = vand.u32 %v642, 4294901760
        %v2885 = vsub.f32 %v642, %v2884
        %v2886 = vand.u32 %v2885, 4294901760
        %2887 = vmatprep.subr.mxu0 %v2886
        %v2888 = vand.u32 %v641, 4294901760
        %v2889 = vsub.f32 %v641, %v2888
        %v2890 = vand.u32 %v2889, 4294901760
        %2891 = vmatpush1.msra.mxu0 %v2890
        %v2892 = vand.u32 %v634, 4294901760
        %v2893 = vsub.f32 %v634, %v2892
        %v2894 = vand.u32 %v2893, 4294901760
        %2895 = vmatprep.subr.mxu0 %v2894
        %v2896 = vand.u32 %v633, 4294901760
        %v2897 = vsub.f32 %v633, %v2896
        %v2898 = vand.u32 %v2897, 4294901760
        %2899 = vmatpush1.msra.mxu0 %v2898
        %2900 = vmatprep.subr.mxu0 0.0
        %2901 = vmatpush2.msra.mxu0 0.0
        %2902 = vmatprep.subr.mxu0 0.0
        %2903 = vmatpush2.msra.mxu0 0.0
        %2904 = vmatprep.subr.mxu0 0.0
        %2905 = vmatpush2.msra.mxu0 0.0
        %2906 = vmatprep.subr.mxu0 0.0
        %2907 = vmatpush2.msra.mxu0 0.0
        %2908 = vmatprep.subr.mxu0 0.0
        %2909 = vmatpush2.msra.mxu0 0.0
        %2910 = vmatprep.subr.mxu0 0.0
        %2911 = vmatpush2.msra.mxu0 0.0
        %2912 = vmatprep.subr.mxu0 0.0
        %2913 = vmatpush2.msra.mxu0 0.0
        %2914 = vmatprep.subr.mxu0 0.0
        %2915 = vmatpush2.msra.mxu0 0.0
        %2916 = vmatprep.subr.mxu0 0.0
        %2917 = vmatpush2.msra.mxu0 0.0
        %2918 = vmatprep.subr.mxu0 0.0
        %2919 = vmatpush2.msra.mxu0 0.0
        %2920 = vmatprep.subr.mxu0 0.0
        %2921 = vmatpush2.msra.mxu0 0.0
        %2922 = vmatprep.subr.mxu0 0.0
        %2923 = vmatpush2.msra.mxu0 0.0
        %2924 = vmatprep.subr.mxu0 0.0
        %2925 = vmatpush2.msra.mxu0 0.0
        %2926 = vmatprep.subr.mxu0 0.0
        %2927 = vmatpush2.msra.mxu0 0.0
        %2928 = vmatprep.subr.mxu0 0.0
        %2929 = vmatpush2.msra.mxu0 0.0
        %2930 = vmatprep.subr.mxu0 0.0
        %2931 = vmatpush2.msra.mxu0 0.0
        %2932 = vmatprep.mubr.f32.mxu0 0.0
        %v2933 = vand.u32 %v661, 4294901760
        %2934 = vmatmul.mubr.f32.gmra.mxu0 %v2933
        %v2935 = vpop.f32.mrf.mxu0
        %v2936 = vadd.f32 %v2831, %v2935
        %v2937 = vpop.f32.mrf.mxu0
        %v2938 = vadd.f32 %v2833, %v2937
        %2939 = vmatprep.mubr.f32.mxu0 0.0
        %v2940 = vand.u32 %v664, 4294901760
        %2941 = vmatmul.mubr.f32.gmra.mxu0 %v2940
        %v2942 = vpop.f32.mrf.mxu0
        %v2943 = vadd.f32 %v2840, %v2942
        %v2944 = vpop.f32.mrf.mxu0
        %v2945 = vadd.f32 %v2842, %v2944
        %2946 = vdwg.mxu0
        %2947 = vmatprep.subr.mxu0 0.0
        %2948 = vmatpush1.msra.mxu0 0.0
        %2949 = vmatprep.subr.mxu0 0.0
        %2950 = vmatpush1.msra.mxu0 0.0
        %2951 = vmatprep.subr.mxu0 0.0
        %2952 = vmatpush1.msra.mxu0 0.0
        %2953 = vmatprep.subr.mxu0 0.0
        %2954 = vmatpush1.msra.mxu0 0.0
        %2955 = vmatprep.subr.mxu0 0.0
        %2956 = vmatpush1.msra.mxu0 0.0
        %2957 = vmatprep.subr.mxu0 0.0
        %2958 = vmatpush1.msra.mxu0 0.0
        %2959 = vmatprep.subr.mxu0 0.0
        %2960 = vmatpush1.msra.mxu0 0.0
        %2961 = vmatprep.subr.mxu0 0.0
        %2962 = vmatpush1.msra.mxu0 0.0
        %2963 = vmatprep.subr.mxu0 0.0
        %2964 = vmatpush1.msra.mxu0 0.0
        %2965 = vmatprep.subr.mxu0 0.0
        %2966 = vmatpush1.msra.mxu0 0.0
        %2967 = vmatprep.subr.mxu0 0.0
        %2968 = vmatpush1.msra.mxu0 0.0
        %2969 = vmatprep.subr.mxu0 0.0
        %2970 = vmatpush1.msra.mxu0 0.0
        %v2971 = vand.u32 %v658, 4294901760
        %2972 = vmatprep.subr.mxu0 %v2971
        %v2973 = vand.u32 %v657, 4294901760
        %2974 = vmatpush1.msra.mxu0 %v2973
        %v2975 = vand.u32 %v650, 4294901760
        %2976 = vmatprep.subr.mxu0 %v2975
        %v2977 = vand.u32 %v649, 4294901760
        %2978 = vmatpush1.msra.mxu0 %v2977
        %v2979 = vand.u32 %v642, 4294901760
        %2980 = vmatprep.subr.mxu0 %v2979
        %v2981 = vand.u32 %v641, 4294901760
        %2982 = vmatpush1.msra.mxu0 %v2981
        %v2983 = vand.u32 %v634, 4294901760
        %2984 = vmatprep.subr.mxu0 %v2983
        %v2985 = vand.u32 %v633, 4294901760
        %2986 = vmatpush1.msra.mxu0 %v2985
        %2987 = vmatprep.subr.mxu0 0.0
        %2988 = vmatpush2.msra.mxu0 0.0
        %2989 = vmatprep.subr.mxu0 0.0
        %2990 = vmatpush2.msra.mxu0 0.0
        %2991 = vmatprep.subr.mxu0 0.0
        %2992 = vmatpush2.msra.mxu0 0.0
        %2993 = vmatprep.subr.mxu0 0.0
        %2994 = vmatpush2.msra.mxu0 0.0
        %2995 = vmatprep.subr.mxu0 0.0
        %2996 = vmatpush2.msra.mxu0 0.0
        %2997 = vmatprep.subr.mxu0 0.0
        %2998 = vmatpush2.msra.mxu0 0.0
        %2999 = vmatprep.subr.mxu0 0.0
        %3000 = vmatpush2.msra.mxu0 0.0
        %3001 = vmatprep.subr.mxu0 0.0
        %3002 = vmatpush2.msra.mxu0 0.0
        %3003 = vmatprep.subr.mxu0 0.0
        %3004 = vmatpush2.msra.mxu0 0.0
        %3005 = vmatprep.subr.mxu0 0.0
        %3006 = vmatpush2.msra.mxu0 0.0
        %3007 = vmatprep.subr.mxu0 0.0
        %3008 = vmatpush2.msra.mxu0 0.0
        %3009 = vmatprep.subr.mxu0 0.0
        %3010 = vmatpush2.msra.mxu0 0.0
        %3011 = vmatprep.subr.mxu0 0.0
        %3012 = vmatpush2.msra.mxu0 0.0
        %3013 = vmatprep.subr.mxu0 0.0
        %3014 = vmatpush2.msra.mxu0 0.0
        %3015 = vmatprep.subr.mxu0 0.0
        %3016 = vmatpush2.msra.mxu0 0.0
        %3017 = vmatprep.subr.mxu0 0.0
        %3018 = vmatpush2.msra.mxu0 0.0
        %3019 = vmatprep.mubr.f32.mxu0 0.0
        %v3020 = vand.u32 %v661, 4294901760
        %3021 = vmatmul.mubr.f32.gmra.mxu0 %v3020
        %v3022 = vpop.f32.mrf.mxu0
        %v3023 = vadd.f32 %v2936, %v3022
        %v3024 = vpop.f32.mrf.mxu0
        %v3025 = vadd.f32 %v2938, %v3024
        %3026 = vmatprep.mubr.f32.mxu0 0.0
        %v3027 = vand.u32 %v664, 4294901760
        %3028 = vmatmul.mubr.f32.gmra.mxu0 %v3027
        %v3029 = vpop.f32.mrf.mxu0
        %v3030 = vadd.f32 %v2943, %v3029
        %v3031 = vpop.f32.mrf.mxu0
        %v3032 = vadd.f32 %v2945, %v3031
        %3033 = vdwg.mxu0
        %3034 = vst [vmem:[#allocation3] sm:$0xff] %v1247
        %3035 = vst [vmem:[#allocation3 + $0x8] sm:$0xff] %v1254
        %3036 = vst [vmem:[#allocation3 + $0x10] sm:$0xff] %v1249
        %3037 = vst [vmem:[#allocation3 + $0x18] sm:$0xff] %v1256
        %3038 = vst [vmem:[#allocation3 + $0x20] sm:$0xff] %v1839
        %3039 = vst [vmem:[#allocation3 + $0x28] sm:$0xff] %v1846
        %3040 = vst [vmem:[#allocation3 + $0x30] sm:$0xff] %v1841
        %3041 = vst [vmem:[#allocation3 + $0x38] sm:$0xff] %v1848
        %3042 = vst [vmem:[#allocation3 + $0x40] sm:$0xff] %v2431
        %3043 = vst [vmem:[#allocation3 + $0x48] sm:$0xff] %v2438
        %3044 = vst [vmem:[#allocation3 + $0x50] sm:$0xff] %v2433
        %3045 = vst [vmem:[#allocation3 + $0x58] sm:$0xff] %v2440
        %3046 = vst [vmem:[#allocation3 + $0x60] sm:$0xff] %v3023
        %3047 = vst [vmem:[#allocation3 + $0x68] sm:$0xff] %v3030
        %3048 = vst [vmem:[#allocation3 + $0x70] sm:$0xff] %v3025
        %3049 = vst [vmem:[#allocation3 + $0x78] sm:$0xff] %v3032
        %v3050 = vld [vmem:[#allocation3] sm:$0xff]
        %v3051 = vld [vmem:[#allocation3 + $0x8] sm:$0xff]
        %v3052 = vld [vmem:[#allocation3 + $0x10] sm:$0xff]
        %v3053 = vld [vmem:[#allocation3 + $0x18] sm:$0xff]
        %v3054 = vld [vmem:[#allocation3 + $0x20] sm:$0xff]
        %v3055 = vld [vmem:[#allocation3 + $0x28] sm:$0xff]
        %v3056 = vld [vmem:[#allocation3 + $0x30] sm:$0xff]
        %v3057 = vld [vmem:[#allocation3 + $0x38] sm:$0xff]
        %v3058 = vld [vmem:[#allocation3 + $0x40] sm:$0xff]
        %v3059 = vld [vmem:[#allocation3 + $0x48] sm:$0xff]
        %v3060 = vld [vmem:[#allocation3 + $0x50] sm:$0xff]
        %v3061 = vld [vmem:[#allocation3 + $0x58] sm:$0xff]
        %v3062 = vld [vmem:[#allocation3 + $0x60] sm:$0xff]
        %v3063 = vld [vmem:[#allocation3 + $0x68] sm:$0xff]
        %v3064 = vld [vmem:[#allocation3 + $0x70] sm:$0xff]
        %v3065 = vld [vmem:[#allocation3 + $0x78] sm:$0xff]
        %v3066 = vld [vmem:[%s1] sm:$0xff]
        %v3067 = vld [vmem:[%s1 + $0x8] sm:$0xff]
        %v3068 = vld [vmem:[%s1 + $0x10] sm:$0xff]
        %v3069 = vld [vmem:[%s1 + $0x18] sm:$0xff]
        %v3070 = vld [vmem:[%s1 + $0x20] sm:$0xff]
        %v3071 = vld [vmem:[%s1 + $0x28] sm:$0xff]
        %v3072 = vld [vmem:[%s1 + $0x30] sm:$0xff]
        %v3073 = vld [vmem:[%s1 + $0x38] sm:$0xff]
        %v3074 = vld [vmem:[%s1 + $0x40] sm:$0xff]
        %v3075 = vld [vmem:[%s1 + $0x48] sm:$0xff]
        %v3076 = vld [vmem:[%s1 + $0x50] sm:$0xff]
        %v3077 = vld [vmem:[%s1 + $0x58] sm:$0xff]
        %v3078 = vld [vmem:[%s1 + $0x60] sm:$0xff]
        %v3079 = vld [vmem:[%s1 + $0x68] sm:$0xff]
        %v3080 = vld [vmem:[%s1 + $0x70] sm:$0xff]
        %v3081 = vld [vmem:[%s1 + $0x78] sm:$0xff]
        %3082 = vmatprep.subr.mxu0 0.0
        %v3083 = vand.u32 %v3081, 4294901760
        %3084 = vmatpush1.msra.mxu0 %v3083
        %3085 = vmatprep.subr.mxu0 0.0
        %v3086 = vand.u32 %v3080, 4294901760
        %3087 = vmatpush1.msra.mxu0 %v3086
        %3088 = vmatprep.subr.mxu0 0.0
        %v3089 = vand.u32 %v3079, 4294901760
        %3090 = vmatpush1.msra.mxu0 %v3089
        %3091 = vmatprep.subr.mxu0 0.0
        %v3092 = vand.u32 %v3078, 4294901760
        %3093 = vmatpush1.msra.mxu0 %v3092
        %3094 = vmatprep.subr.mxu0 0.0
        %v3095 = vand.u32 %v3077, 4294901760
        %3096 = vmatpush1.msra.mxu0 %v3095
        %3097 = vmatprep.subr.mxu0 0.0
        %v3098 = vand.u32 %v3076, 4294901760
        %3099 = vmatpush1.msra.mxu0 %v3098
        %3100 = vmatprep.subr.mxu0 0.0
        %v3101 = vand.u32 %v3075, 4294901760
        %3102 = vmatpush1.msra.mxu0 %v3101
        %3103 = vmatprep.subr.mxu0 0.0
        %v3104 = vand.u32 %v3074, 4294901760
        %3105 = vmatpush1.msra.mxu0 %v3104
        %3106 = vmatprep.subr.mxu0 0.0
        %v3107 = vand.u32 %v3073, 4294901760
        %3108 = vmatpush1.msra.mxu0 %v3107
        %3109 = vmatprep.subr.mxu0 0.0
        %v3110 = vand.u32 %v3072, 4294901760
        %3111 = vmatpush1.msra.mxu0 %v3110
        %3112 = vmatprep.subr.mxu0 0.0
        %v3113 = vand.u32 %v3071, 4294901760
        %3114 = vmatpush1.msra.mxu0 %v3113
        %3115 = vmatprep.subr.mxu0 0.0
        %v3116 = vand.u32 %v3070, 4294901760
        %3117 = vmatpush1.msra.mxu0 %v3116
        %3118 = vmatprep.subr.mxu0 0.0
        %v3119 = vand.u32 %v3069, 4294901760
        %3120 = vmatpush1.msra.mxu0 %v3119
        %3121 = vmatprep.subr.mxu0 0.0
        %v3122 = vand.u32 %v3068, 4294901760
        %3123 = vmatpush1.msra.mxu0 %v3122
        %3124 = vmatprep.subr.mxu0 0.0
        %v3125 = vand.u32 %v3067, 4294901760
        %3126 = vmatpush1.msra.mxu0 %v3125
        %3127 = vmatprep.subr.mxu0 0.0
        %v3128 = vand.u32 %v3066, 4294901760
        %3129 = vmatpush1.msra.mxu0 %v3128
        %3130 = vmatprep.subr.mxu0 0.0
        %3131 = vmatpush2.msra.mxu0 0.0
        %3132 = vmatprep.subr.mxu0 0.0
        %3133 = vmatpush2.msra.mxu0 0.0
        %3134 = vmatprep.subr.mxu0 0.0
        %3135 = vmatpush2.msra.mxu0 0.0
        %3136 = vmatprep.subr.mxu0 0.0
        %3137 = vmatpush2.msra.mxu0 0.0
        %3138 = vmatprep.subr.mxu0 0.0
        %3139 = vmatpush2.msra.mxu0 0.0
        %3140 = vmatprep.subr.mxu0 0.0
        %3141 = vmatpush2.msra.mxu0 0.0
        %3142 = vmatprep.subr.mxu0 0.0
        %3143 = vmatpush2.msra.mxu0 0.0
        %3144 = vmatprep.subr.mxu0 0.0
        %3145 = vmatpush2.msra.mxu0 0.0
        %3146 = vmatprep.subr.mxu0 0.0
        %3147 = vmatpush2.msra.mxu0 0.0
        %3148 = vmatprep.subr.mxu0 0.0
        %3149 = vmatpush2.msra.mxu0 0.0
        %3150 = vmatprep.subr.mxu0 0.0
        %3151 = vmatpush2.msra.mxu0 0.0
        %3152 = vmatprep.subr.mxu0 0.0
        %3153 = vmatpush2.msra.mxu0 0.0
        %3154 = vmatprep.subr.mxu0 0.0
        %3155 = vmatpush2.msra.mxu0 0.0
        %3156 = vmatprep.subr.mxu0 0.0
        %3157 = vmatpush2.msra.mxu0 0.0
        %3158 = vmatprep.subr.mxu0 0.0
        %3159 = vmatpush2.msra.mxu0 0.0
        %3160 = vmatprep.subr.mxu0 0.0
        %3161 = vmatpush2.msra.mxu0 0.0
        %3162 = vmatprep.mubr.f32.mxu0 0.0
        %v3163 = vand.u32 %v3050, 4294901760
        %v3164 = vsub.f32 %v3050, %v3163
        %v3165 = vand.u32 %v3164, 4294901760
        %v3166 = vsub.f32 %v3164, %v3165
        %v3167 = vand.u32 %v3166, 4294901760
        %3168 = vmatmul.mubr.f32.gmra.mxu0 %v3167
        %v3169 = vpop.f32.mrf.mxu0
        %v3170 = vadd.f32 0.0, %v3169
        %v3171 = vpop.f32.mrf.mxu0
        %3172 = vmatprep.mubr.f32.mxu0 0.0
        %v3173 = vand.u32 %v3051, 4294901760
        %v3174 = vsub.f32 %v3051, %v3173
        %v3175 = vand.u32 %v3174, 4294901760
        %v3176 = vsub.f32 %v3174, %v3175
        %v3177 = vand.u32 %v3176, 4294901760
        %3178 = vmatmul.mubr.f32.gmra.mxu0 %v3177
        %v3179 = vpop.f32.mrf.mxu0
        %v3180 = vadd.f32 0.0, %v3179
        %v3181 = vpop.f32.mrf.mxu0
        %3182 = vmatprep.mubr.f32.mxu0 0.0
        %v3183 = vand.u32 %v3052, 4294901760
        %v3184 = vsub.f32 %v3052, %v3183
        %v3185 = vand.u32 %v3184, 4294901760
        %v3186 = vsub.f32 %v3184, %v3185
        %v3187 = vand.u32 %v3186, 4294901760
        %3188 = vmatmul.mubr.f32.gmra.mxu0 %v3187
        %v3189 = vpop.f32.mrf.mxu0
        %v3190 = vadd.f32 0.0, %v3189
        %v3191 = vpop.f32.mrf.mxu0
        %3192 = vmatprep.mubr.f32.mxu0 0.0
        %v3193 = vand.u32 %v3053, 4294901760
        %v3194 = vsub.f32 %v3053, %v3193
        %v3195 = vand.u32 %v3194, 4294901760
        %v3196 = vsub.f32 %v3194, %v3195
        %v3197 = vand.u32 %v3196, 4294901760
        %3198 = vmatmul.mubr.f32.gmra.mxu0 %v3197
        %v3199 = vpop.f32.mrf.mxu0
        %v3200 = vadd.f32 0.0, %v3199
        %v3201 = vpop.f32.mrf.mxu0
        %3202 = vmatprep.mubr.f32.mxu0 0.0
        %v3203 = vand.u32 %v3054, 4294901760
        %v3204 = vsub.f32 %v3054, %v3203
        %v3205 = vand.u32 %v3204, 4294901760
        %v3206 = vsub.f32 %v3204, %v3205
        %v3207 = vand.u32 %v3206, 4294901760
        %3208 = vmatmul.mubr.f32.gmra.mxu0 %v3207
        %v3209 = vpop.f32.mrf.mxu0
        %v3210 = vadd.f32 0.0, %v3209
        %v3211 = vpop.f32.mrf.mxu0
        %3212 = vmatprep.mubr.f32.mxu0 0.0
        %v3213 = vand.u32 %v3055, 4294901760
        %v3214 = vsub.f32 %v3055, %v3213
        %v3215 = vand.u32 %v3214, 4294901760
        %v3216 = vsub.f32 %v3214, %v3215
        %v3217 = vand.u32 %v3216, 4294901760
        %3218 = vmatmul.mubr.f32.gmra.mxu0 %v3217
        %v3219 = vpop.f32.mrf.mxu0
        %v3220 = vadd.f32 0.0, %v3219
        %v3221 = vpop.f32.mrf.mxu0
        %3222 = vmatprep.mubr.f32.mxu0 0.0
        %v3223 = vand.u32 %v3056, 4294901760
        %v3224 = vsub.f32 %v3056, %v3223
        %v3225 = vand.u32 %v3224, 4294901760
        %v3226 = vsub.f32 %v3224, %v3225
        %v3227 = vand.u32 %v3226, 4294901760
        %3228 = vmatmul.mubr.f32.gmra.mxu0 %v3227
        %v3229 = vpop.f32.mrf.mxu0
        %v3230 = vadd.f32 0.0, %v3229
        %v3231 = vpop.f32.mrf.mxu0
        %3232 = vmatprep.mubr.f32.mxu0 0.0
        %v3233 = vand.u32 %v3057, 4294901760
        %v3234 = vsub.f32 %v3057, %v3233
        %v3235 = vand.u32 %v3234, 4294901760
        %v3236 = vsub.f32 %v3234, %v3235
        %v3237 = vand.u32 %v3236, 4294901760
        %3238 = vmatmul.mubr.f32.gmra.mxu0 %v3237
        %v3239 = vpop.f32.mrf.mxu0
        %v3240 = vadd.f32 0.0, %v3239
        %v3241 = vpop.f32.mrf.mxu0
        %3242 = vmatprep.mubr.f32.mxu0 0.0
        %v3243 = vand.u32 %v3058, 4294901760
        %v3244 = vsub.f32 %v3058, %v3243
        %v3245 = vand.u32 %v3244, 4294901760
        %v3246 = vsub.f32 %v3244, %v3245
        %v3247 = vand.u32 %v3246, 4294901760
        %3248 = vmatmul.mubr.f32.gmra.mxu0 %v3247
        %v3249 = vpop.f32.mrf.mxu0
        %v3250 = vadd.f32 0.0, %v3249
        %v3251 = vpop.f32.mrf.mxu0
        %3252 = vmatprep.mubr.f32.mxu0 0.0
        %v3253 = vand.u32 %v3059, 4294901760
        %v3254 = vsub.f32 %v3059, %v3253
        %v3255 = vand.u32 %v3254, 4294901760
        %v3256 = vsub.f32 %v3254, %v3255
        %v3257 = vand.u32 %v3256, 4294901760
        %3258 = vmatmul.mubr.f32.gmra.mxu0 %v3257
        %v3259 = vpop.f32.mrf.mxu0
        %v3260 = vadd.f32 0.0, %v3259
        %v3261 = vpop.f32.mrf.mxu0
        %3262 = vmatprep.mubr.f32.mxu0 0.0
        %v3263 = vand.u32 %v3060, 4294901760
        %v3264 = vsub.f32 %v3060, %v3263
        %v3265 = vand.u32 %v3264, 4294901760
        %v3266 = vsub.f32 %v3264, %v3265
        %v3267 = vand.u32 %v3266, 4294901760
        %3268 = vmatmul.mubr.f32.gmra.mxu0 %v3267
        %v3269 = vpop.f32.mrf.mxu0
        %v3270 = vadd.f32 0.0, %v3269
        %v3271 = vpop.f32.mrf.mxu0
        %3272 = vmatprep.mubr.f32.mxu0 0.0
        %v3273 = vand.u32 %v3061, 4294901760
        %v3274 = vsub.f32 %v3061, %v3273
        %v3275 = vand.u32 %v3274, 4294901760
        %v3276 = vsub.f32 %v3274, %v3275
        %v3277 = vand.u32 %v3276, 4294901760
        %3278 = vmatmul.mubr.f32.gmra.mxu0 %v3277
        %v3279 = vpop.f32.mrf.mxu0
        %v3280 = vadd.f32 0.0, %v3279
        %v3281 = vpop.f32.mrf.mxu0
        %3282 = vmatprep.mubr.f32.mxu0 0.0
        %v3283 = vand.u32 %v3062, 4294901760
        %v3284 = vsub.f32 %v3062, %v3283
        %v3285 = vand.u32 %v3284, 4294901760
        %v3286 = vsub.f32 %v3284, %v3285
        %v3287 = vand.u32 %v3286, 4294901760
        %3288 = vmatmul.mubr.f32.gmra.mxu0 %v3287
        %v3289 = vpop.f32.mrf.mxu0
        %v3290 = vadd.f32 0.0, %v3289
        %v3291 = vpop.f32.mrf.mxu0
        %3292 = vmatprep.mubr.f32.mxu0 0.0
        %v3293 = vand.u32 %v3063, 4294901760
        %v3294 = vsub.f32 %v3063, %v3293
        %v3295 = vand.u32 %v3294, 4294901760
        %v3296 = vsub.f32 %v3294, %v3295
        %v3297 = vand.u32 %v3296, 4294901760
        %3298 = vmatmul.mubr.f32.gmra.mxu0 %v3297
        %v3299 = vpop.f32.mrf.mxu0
        %v3300 = vadd.f32 0.0, %v3299
        %v3301 = vpop.f32.mrf.mxu0
        %3302 = vmatprep.mubr.f32.mxu0 0.0
        %v3303 = vand.u32 %v3064, 4294901760
        %v3304 = vsub.f32 %v3064, %v3303
        %v3305 = vand.u32 %v3304, 4294901760
        %v3306 = vsub.f32 %v3304, %v3305
        %v3307 = vand.u32 %v3306, 4294901760
        %3308 = vmatmul.mubr.f32.gmra.mxu0 %v3307
        %v3309 = vpop.f32.mrf.mxu0
        %v3310 = vadd.f32 0.0, %v3309
        %v3311 = vpop.f32.mrf.mxu0
        %3312 = vmatprep.mubr.f32.mxu0 0.0
        %v3313 = vand.u32 %v3065, 4294901760
        %v3314 = vsub.f32 %v3065, %v3313
        %v3315 = vand.u32 %v3314, 4294901760
        %v3316 = vsub.f32 %v3314, %v3315
        %v3317 = vand.u32 %v3316, 4294901760
        %3318 = vmatmul.mubr.f32.gmra.mxu0 %v3317
        %v3319 = vpop.f32.mrf.mxu0
        %v3320 = vadd.f32 0.0, %v3319
        %v3321 = vpop.f32.mrf.mxu0
        %3322 = vdwg.mxu0
        %3323 = vmatprep.subr.mxu0 0.0
        %v3324 = vand.u32 %v3081, 4294901760
        %v3325 = vsub.f32 %v3081, %v3324
        %v3326 = vand.u32 %v3325, 4294901760
        %v3327 = vsub.f32 %v3325, %v3326
        %v3328 = vand.u32 %v3327, 4294901760
        %3329 = vmatpush1.msra.mxu0 %v3328
        %3330 = vmatprep.subr.mxu0 0.0
        %v3331 = vand.u32 %v3080, 4294901760
        %v3332 = vsub.f32 %v3080, %v3331
        %v3333 = vand.u32 %v3332, 4294901760
        %v3334 = vsub.f32 %v3332, %v3333
        %v3335 = vand.u32 %v3334, 4294901760
        %3336 = vmatpush1.msra.mxu0 %v3335
        %3337 = vmatprep.subr.mxu0 0.0
        %v3338 = vand.u32 %v3079, 4294901760
        %v3339 = vsub.f32 %v3079, %v3338
        %v3340 = vand.u32 %v3339, 4294901760
        %v3341 = vsub.f32 %v3339, %v3340
        %v3342 = vand.u32 %v3341, 4294901760
        %3343 = vmatpush1.msra.mxu0 %v3342
        %3344 = vmatprep.subr.mxu0 0.0
        %v3345 = vand.u32 %v3078, 4294901760
        %v3346 = vsub.f32 %v3078, %v3345
        %v3347 = vand.u32 %v3346, 4294901760
        %v3348 = vsub.f32 %v3346, %v3347
        %v3349 = vand.u32 %v3348, 4294901760
        %3350 = vmatpush1.msra.mxu0 %v3349
        %3351 = vmatprep.subr.mxu0 0.0
        %v3352 = vand.u32 %v3077, 4294901760
        %v3353 = vsub.f32 %v3077, %v3352
        %v3354 = vand.u32 %v3353, 4294901760
        %v3355 = vsub.f32 %v3353, %v3354
        %v3356 = vand.u32 %v3355, 4294901760
        %3357 = vmatpush1.msra.mxu0 %v3356
        %3358 = vmatprep.subr.mxu0 0.0
        %v3359 = vand.u32 %v3076, 4294901760
        %v3360 = vsub.f32 %v3076, %v3359
        %v3361 = vand.u32 %v3360, 4294901760
        %v3362 = vsub.f32 %v3360, %v3361
        %v3363 = vand.u32 %v3362, 4294901760
        %3364 = vmatpush1.msra.mxu0 %v3363
        %3365 = vmatprep.subr.mxu0 0.0
        %v3366 = vand.u32 %v3075, 4294901760
        %v3367 = vsub.f32 %v3075, %v3366
        %v3368 = vand.u32 %v3367, 4294901760
        %v3369 = vsub.f32 %v3367, %v3368
        %v3370 = vand.u32 %v3369, 4294901760
        %3371 = vmatpush1.msra.mxu0 %v3370
        %3372 = vmatprep.subr.mxu0 0.0
        %v3373 = vand.u32 %v3074, 4294901760
        %v3374 = vsub.f32 %v3074, %v3373
        %v3375 = vand.u32 %v3374, 4294901760
        %v3376 = vsub.f32 %v3374, %v3375
        %v3377 = vand.u32 %v3376, 4294901760
        %3378 = vmatpush1.msra.mxu0 %v3377
        %3379 = vmatprep.subr.mxu0 0.0
        %v3380 = vand.u32 %v3073, 4294901760
        %v3381 = vsub.f32 %v3073, %v3380
        %v3382 = vand.u32 %v3381, 4294901760
        %v3383 = vsub.f32 %v3381, %v3382
        %v3384 = vand.u32 %v3383, 4294901760
        %3385 = vmatpush1.msra.mxu0 %v3384
        %3386 = vmatprep.subr.mxu0 0.0
        %v3387 = vand.u32 %v3072, 4294901760
        %v3388 = vsub.f32 %v3072, %v3387
        %v3389 = vand.u32 %v3388, 4294901760
        %v3390 = vsub.f32 %v3388, %v3389
        %v3391 = vand.u32 %v3390, 4294901760
        %3392 = vmatpush1.msra.mxu0 %v3391
        %3393 = vmatprep.subr.mxu0 0.0
        %v3394 = vand.u32 %v3071, 4294901760
        %v3395 = vsub.f32 %v3071, %v3394
        %v3396 = vand.u32 %v3395, 4294901760
        %v3397 = vsub.f32 %v3395, %v3396
        %v3398 = vand.u32 %v3397, 4294901760
        %3399 = vmatpush1.msra.mxu0 %v3398
        %3400 = vmatprep.subr.mxu0 0.0
        %v3401 = vand.u32 %v3070, 4294901760
        %v3402 = vsub.f32 %v3070, %v3401
        %v3403 = vand.u32 %v3402, 4294901760
        %v3404 = vsub.f32 %v3402, %v3403
        %v3405 = vand.u32 %v3404, 4294901760
        %3406 = vmatpush1.msra.mxu0 %v3405
        %3407 = vmatprep.subr.mxu0 0.0
        %v3408 = vand.u32 %v3069, 4294901760
        %v3409 = vsub.f32 %v3069, %v3408
        %v3410 = vand.u32 %v3409, 4294901760
        %v3411 = vsub.f32 %v3409, %v3410
        %v3412 = vand.u32 %v3411, 4294901760
        %3413 = vmatpush1.msra.mxu0 %v3412
        %3414 = vmatprep.subr.mxu0 0.0
        %v3415 = vand.u32 %v3068, 4294901760
        %v3416 = vsub.f32 %v3068, %v3415
        %v3417 = vand.u32 %v3416, 4294901760
        %v3418 = vsub.f32 %v3416, %v3417
        %v3419 = vand.u32 %v3418, 4294901760
        %3420 = vmatpush1.msra.mxu0 %v3419
        %3421 = vmatprep.subr.mxu0 0.0
        %v3422 = vand.u32 %v3067, 4294901760
        %v3423 = vsub.f32 %v3067, %v3422
        %v3424 = vand.u32 %v3423, 4294901760
        %v3425 = vsub.f32 %v3423, %v3424
        %v3426 = vand.u32 %v3425, 4294901760
        %3427 = vmatpush1.msra.mxu0 %v3426
        %3428 = vmatprep.subr.mxu0 0.0
        %v3429 = vand.u32 %v3066, 4294901760
        %v3430 = vsub.f32 %v3066, %v3429
        %v3431 = vand.u32 %v3430, 4294901760
        %v3432 = vsub.f32 %v3430, %v3431
        %v3433 = vand.u32 %v3432, 4294901760
        %3434 = vmatpush1.msra.mxu0 %v3433
        %3435 = vmatprep.subr.mxu0 0.0
        %3436 = vmatpush2.msra.mxu0 0.0
        %3437 = vmatprep.subr.mxu0 0.0
        %3438 = vmatpush2.msra.mxu0 0.0
        %3439 = vmatprep.subr.mxu0 0.0
        %3440 = vmatpush2.msra.mxu0 0.0
        %3441 = vmatprep.subr.mxu0 0.0
        %3442 = vmatpush2.msra.mxu0 0.0
        %3443 = vmatprep.subr.mxu0 0.0
        %3444 = vmatpush2.msra.mxu0 0.0
        %3445 = vmatprep.subr.mxu0 0.0
        %3446 = vmatpush2.msra.mxu0 0.0
        %3447 = vmatprep.subr.mxu0 0.0
        %3448 = vmatpush2.msra.mxu0 0.0
        %3449 = vmatprep.subr.mxu0 0.0
        %3450 = vmatpush2.msra.mxu0 0.0
        %3451 = vmatprep.subr.mxu0 0.0
        %3452 = vmatpush2.msra.mxu0 0.0
        %3453 = vmatprep.subr.mxu0 0.0
        %3454 = vmatpush2.msra.mxu0 0.0
        %3455 = vmatprep.subr.mxu0 0.0
        %3456 = vmatpush2.msra.mxu0 0.0
        %3457 = vmatprep.subr.mxu0 0.0
        %3458 = vmatpush2.msra.mxu0 0.0
        %3459 = vmatprep.subr.mxu0 0.0
        %3460 = vmatpush2.msra.mxu0 0.0
        %3461 = vmatprep.subr.mxu0 0.0
        %3462 = vmatpush2.msra.mxu0 0.0
        %3463 = vmatprep.subr.mxu0 0.0
        %3464 = vmatpush2.msra.mxu0 0.0
        %3465 = vmatprep.subr.mxu0 0.0
        %3466 = vmatpush2.msra.mxu0 0.0
        %3467 = vmatprep.mubr.f32.mxu0 0.0
        %v3468 = vand.u32 %v3050, 4294901760
        %3469 = vmatmul.mubr.f32.gmra.mxu0 %v3468
        %v3470 = vpop.f32.mrf.mxu0
        %v3471 = vadd.f32 %v3170, %v3470
        %v3472 = vpop.f32.mrf.mxu0
        %3473 = vmatprep.mubr.f32.mxu0 0.0
        %v3474 = vand.u32 %v3051, 4294901760
        %3475 = vmatmul.mubr.f32.gmra.mxu0 %v3474
        %v3476 = vpop.f32.mrf.mxu0
        %v3477 = vadd.f32 %v3180, %v3476
        %v3478 = vpop.f32.mrf.mxu0
        %3479 = vmatprep.mubr.f32.mxu0 0.0
        %v3480 = vand.u32 %v3052, 4294901760
        %3481 = vmatmul.mubr.f32.gmra.mxu0 %v3480
        %v3482 = vpop.f32.mrf.mxu0
        %v3483 = vadd.f32 %v3190, %v3482
        %v3484 = vpop.f32.mrf.mxu0
        %3485 = vmatprep.mubr.f32.mxu0 0.0
        %v3486 = vand.u32 %v3053, 4294901760
        %3487 = vmatmul.mubr.f32.gmra.mxu0 %v3486
        %v3488 = vpop.f32.mrf.mxu0
        %v3489 = vadd.f32 %v3200, %v3488
        %v3490 = vpop.f32.mrf.mxu0
        %3491 = vmatprep.mubr.f32.mxu0 0.0
        %v3492 = vand.u32 %v3054, 4294901760
        %3493 = vmatmul.mubr.f32.gmra.mxu0 %v3492
        %v3494 = vpop.f32.mrf.mxu0
        %v3495 = vadd.f32 %v3210, %v3494
        %v3496 = vpop.f32.mrf.mxu0
        %3497 = vmatprep.mubr.f32.mxu0 0.0
        %v3498 = vand.u32 %v3055, 4294901760
        %3499 = vmatmul.mubr.f32.gmra.mxu0 %v3498
        %v3500 = vpop.f32.mrf.mxu0
        %v3501 = vadd.f32 %v3220, %v3500
        %v3502 = vpop.f32.mrf.mxu0
        %3503 = vmatprep.mubr.f32.mxu0 0.0
        %v3504 = vand.u32 %v3056, 4294901760
        %3505 = vmatmul.mubr.f32.gmra.mxu0 %v3504
        %v3506 = vpop.f32.mrf.mxu0
        %v3507 = vadd.f32 %v3230, %v3506
        %v3508 = vpop.f32.mrf.mxu0
        %3509 = vmatprep.mubr.f32.mxu0 0.0
        %v3510 = vand.u32 %v3057, 4294901760
        %3511 = vmatmul.mubr.f32.gmra.mxu0 %v3510
        %v3512 = vpop.f32.mrf.mxu0
        %v3513 = vadd.f32 %v3240, %v3512
        %v3514 = vpop.f32.mrf.mxu0
        %3515 = vmatprep.mubr.f32.mxu0 0.0
        %v3516 = vand.u32 %v3058, 4294901760
        %3517 = vmatmul.mubr.f32.gmra.mxu0 %v3516
        %v3518 = vpop.f32.mrf.mxu0
        %v3519 = vadd.f32 %v3250, %v3518
        %v3520 = vpop.f32.mrf.mxu0
        %3521 = vmatprep.mubr.f32.mxu0 0.0
        %v3522 = vand.u32 %v3059, 4294901760
        %3523 = vmatmul.mubr.f32.gmra.mxu0 %v3522
        %v3524 = vpop.f32.mrf.mxu0
        %v3525 = vadd.f32 %v3260, %v3524
        %v3526 = vpop.f32.mrf.mxu0
        %3527 = vmatprep.mubr.f32.mxu0 0.0
        %v3528 = vand.u32 %v3060, 4294901760
        %3529 = vmatmul.mubr.f32.gmra.mxu0 %v3528
        %v3530 = vpop.f32.mrf.mxu0
        %v3531 = vadd.f32 %v3270, %v3530
        %v3532 = vpop.f32.mrf.mxu0
        %3533 = vmatprep.mubr.f32.mxu0 0.0
        %v3534 = vand.u32 %v3061, 4294901760
        %3535 = vmatmul.mubr.f32.gmra.mxu0 %v3534
        %v3536 = vpop.f32.mrf.mxu0
        %v3537 = vadd.f32 %v3280, %v3536
        %v3538 = vpop.f32.mrf.mxu0
        %3539 = vmatprep.mubr.f32.mxu0 0.0
        %v3540 = vand.u32 %v3062, 4294901760
        %3541 = vmatmul.mubr.f32.gmra.mxu0 %v3540
        %v3542 = vpop.f32.mrf.mxu0
        %v3543 = vadd.f32 %v3290, %v3542
        %v3544 = vpop.f32.mrf.mxu0
        %3545 = vmatprep.mubr.f32.mxu0 0.0
        %v3546 = vand.u32 %v3063, 4294901760
        %3547 = vmatmul.mubr.f32.gmra.mxu0 %v3546
        %v3548 = vpop.f32.mrf.mxu0
        %v3549 = vadd.f32 %v3300, %v3548
        %v3550 = vpop.f32.mrf.mxu0
        %3551 = vmatprep.mubr.f32.mxu0 0.0
        %v3552 = vand.u32 %v3064, 4294901760
        %3553 = vmatmul.mubr.f32.gmra.mxu0 %v3552
        %v3554 = vpop.f32.mrf.mxu0
        %v3555 = vadd.f32 %v3310, %v3554
        %v3556 = vpop.f32.mrf.mxu0
        %3557 = vmatprep.mubr.f32.mxu0 0.0
        %v3558 = vand.u32 %v3065, 4294901760
        %3559 = vmatmul.mubr.f32.gmra.mxu0 %v3558
        %v3560 = vpop.f32.mrf.mxu0
        %v3561 = vadd.f32 %v3320, %v3560
        %v3562 = vpop.f32.mrf.mxu0
        %3563 = vdwg.mxu0
        %3564 = vmatprep.subr.mxu0 0.0
        %v3565 = vand.u32 %v3081, 4294901760
        %v3566 = vsub.f32 %v3081, %v3565
        %3567 = vmatpush1.msra.mxu0 %v3566
        %3568 = vmatprep.subr.mxu0 0.0
        %v3569 = vand.u32 %v3080, 4294901760
        %v3570 = vsub.f32 %v3080, %v3569
        %3571 = vmatpush1.msra.mxu0 %v3570
        %3572 = vmatprep.subr.mxu0 0.0
        %v3573 = vand.u32 %v3079, 4294901760
        %v3574 = vsub.f32 %v3079, %v3573
        %3575 = vmatpush1.msra.mxu0 %v3574
        %3576 = vmatprep.subr.mxu0 0.0
        %v3577 = vand.u32 %v3078, 4294901760
        %v3578 = vsub.f32 %v3078, %v3577
        %3579 = vmatpush1.msra.mxu0 %v3578
        %3580 = vmatprep.subr.mxu0 0.0
        %v3581 = vand.u32 %v3077, 4294901760
        %v3582 = vsub.f32 %v3077, %v3581
        %3583 = vmatpush1.msra.mxu0 %v3582
        %3584 = vmatprep.subr.mxu0 0.0
        %v3585 = vand.u32 %v3076, 4294901760
        %v3586 = vsub.f32 %v3076, %v3585
        %3587 = vmatpush1.msra.mxu0 %v3586
        %3588 = vmatprep.subr.mxu0 0.0
        %v3589 = vand.u32 %v3075, 4294901760
        %v3590 = vsub.f32 %v3075, %v3589
        %3591 = vmatpush1.msra.mxu0 %v3590
        %3592 = vmatprep.subr.mxu0 0.0
        %v3593 = vand.u32 %v3074, 4294901760
        %v3594 = vsub.f32 %v3074, %v3593
        %3595 = vmatpush1.msra.mxu0 %v3594
        %3596 = vmatprep.subr.mxu0 0.0
        %v3597 = vand.u32 %v3073, 4294901760
        %v3598 = vsub.f32 %v3073, %v3597
        %3599 = vmatpush1.msra.mxu0 %v3598
        %3600 = vmatprep.subr.mxu0 0.0
        %v3601 = vand.u32 %v3072, 4294901760
        %v3602 = vsub.f32 %v3072, %v3601
        %3603 = vmatpush1.msra.mxu0 %v3602
        %3604 = vmatprep.subr.mxu0 0.0
        %v3605 = vand.u32 %v3071, 4294901760
        %v3606 = vsub.f32 %v3071, %v3605
        %3607 = vmatpush1.msra.mxu0 %v3606
        %3608 = vmatprep.subr.mxu0 0.0
        %v3609 = vand.u32 %v3070, 4294901760
        %v3610 = vsub.f32 %v3070, %v3609
        %3611 = vmatpush1.msra.mxu0 %v3610
        %3612 = vmatprep.subr.mxu0 0.0
        %v3613 = vand.u32 %v3069, 4294901760
        %v3614 = vsub.f32 %v3069, %v3613
        %3615 = vmatpush1.msra.mxu0 %v3614
        %3616 = vmatprep.subr.mxu0 0.0
        %v3617 = vand.u32 %v3068, 4294901760
        %v3618 = vsub.f32 %v3068, %v3617
        %3619 = vmatpush1.msra.mxu0 %v3618
        %3620 = vmatprep.subr.mxu0 0.0
        %v3621 = vand.u32 %v3067, 4294901760
        %v3622 = vsub.f32 %v3067, %v3621
        %3623 = vmatpush1.msra.mxu0 %v3622
        %3624 = vmatprep.subr.mxu0 0.0
        %v3625 = vand.u32 %v3066, 4294901760
        %v3626 = vsub.f32 %v3066, %v3625
        %3627 = vmatpush1.msra.mxu0 %v3626
        %3628 = vmatprep.subr.mxu0 0.0
        %3629 = vmatpush2.msra.mxu0 0.0
        %3630 = vmatprep.subr.mxu0 0.0
        %3631 = vmatpush2.msra.mxu0 0.0
        %3632 = vmatprep.subr.mxu0 0.0
        %3633 = vmatpush2.msra.mxu0 0.0
        %3634 = vmatprep.subr.mxu0 0.0
        %3635 = vmatpush2.msra.mxu0 0.0
        %3636 = vmatprep.subr.mxu0 0.0
        %3637 = vmatpush2.msra.mxu0 0.0
        %3638 = vmatprep.subr.mxu0 0.0
        %3639 = vmatpush2.msra.mxu0 0.0
        %3640 = vmatprep.subr.mxu0 0.0
        %3641 = vmatpush2.msra.mxu0 0.0
        %3642 = vmatprep.subr.mxu0 0.0
        %3643 = vmatpush2.msra.mxu0 0.0
        %3644 = vmatprep.subr.mxu0 0.0
        %3645 = vmatpush2.msra.mxu0 0.0
        %3646 = vmatprep.subr.mxu0 0.0
        %3647 = vmatpush2.msra.mxu0 0.0
        %3648 = vmatprep.subr.mxu0 0.0
        %3649 = vmatpush2.msra.mxu0 0.0
        %3650 = vmatprep.subr.mxu0 0.0
        %3651 = vmatpush2.msra.mxu0 0.0
        %3652 = vmatprep.subr.mxu0 0.0
        %3653 = vmatpush2.msra.mxu0 0.0
        %3654 = vmatprep.subr.mxu0 0.0
        %3655 = vmatpush2.msra.mxu0 0.0
        %3656 = vmatprep.subr.mxu0 0.0
        %3657 = vmatpush2.msra.mxu0 0.0
        %3658 = vmatprep.subr.mxu0 0.0
        %3659 = vmatpush2.msra.mxu0 0.0
        %3660 = vmatprep.mubr.f32.mxu0 0.0
        %v3661 = vand.u32 %v3050, 4294901760
        %v3662 = vsub.f32 %v3050, %v3661
        %3663 = vmatmul.mubr.f32.gmra.mxu0 %v3662
        %v3664 = vpop.f32.mrf.mxu0
        %v3665 = vadd.f32 %v3471, %v3664
        %v3666 = vpop.f32.mrf.mxu0
        %3667 = vmatprep.mubr.f32.mxu0 0.0
        %v3668 = vand.u32 %v3051, 4294901760
        %v3669 = vsub.f32 %v3051, %v3668
        %3670 = vmatmul.mubr.f32.gmra.mxu0 %v3669
        %v3671 = vpop.f32.mrf.mxu0
        %v3672 = vadd.f32 %v3477, %v3671
        %v3673 = vpop.f32.mrf.mxu0
        %3674 = vmatprep.mubr.f32.mxu0 0.0
        %v3675 = vand.u32 %v3052, 4294901760
        %v3676 = vsub.f32 %v3052, %v3675
        %3677 = vmatmul.mubr.f32.gmra.mxu0 %v3676
        %v3678 = vpop.f32.mrf.mxu0
        %v3679 = vadd.f32 %v3483, %v3678
        %v3680 = vpop.f32.mrf.mxu0
        %3681 = vmatprep.mubr.f32.mxu0 0.0
        %v3682 = vand.u32 %v3053, 4294901760
        %v3683 = vsub.f32 %v3053, %v3682
        %3684 = vmatmul.mubr.f32.gmra.mxu0 %v3683
        %v3685 = vpop.f32.mrf.mxu0
        %v3686 = vadd.f32 %v3489, %v3685
        %v3687 = vpop.f32.mrf.mxu0
        %3688 = vmatprep.mubr.f32.mxu0 0.0
        %v3689 = vand.u32 %v3054, 4294901760
        %v3690 = vsub.f32 %v3054, %v3689
        %3691 = vmatmul.mubr.f32.gmra.mxu0 %v3690
        %v3692 = vpop.f32.mrf.mxu0
        %v3693 = vadd.f32 %v3495, %v3692
        %v3694 = vpop.f32.mrf.mxu0
        %3695 = vmatprep.mubr.f32.mxu0 0.0
        %v3696 = vand.u32 %v3055, 4294901760
        %v3697 = vsub.f32 %v3055, %v3696
        %3698 = vmatmul.mubr.f32.gmra.mxu0 %v3697
        %v3699 = vpop.f32.mrf.mxu0
        %v3700 = vadd.f32 %v3501, %v3699
        %v3701 = vpop.f32.mrf.mxu0
        %3702 = vmatprep.mubr.f32.mxu0 0.0
        %v3703 = vand.u32 %v3056, 4294901760
        %v3704 = vsub.f32 %v3056, %v3703
        %3705 = vmatmul.mubr.f32.gmra.mxu0 %v3704
        %v3706 = vpop.f32.mrf.mxu0
        %v3707 = vadd.f32 %v3507, %v3706
        %v3708 = vpop.f32.mrf.mxu0
        %3709 = vmatprep.mubr.f32.mxu0 0.0
        %v3710 = vand.u32 %v3057, 4294901760
        %v3711 = vsub.f32 %v3057, %v3710
        %3712 = vmatmul.mubr.f32.gmra.mxu0 %v3711
        %v3713 = vpop.f32.mrf.mxu0
        %v3714 = vadd.f32 %v3513, %v3713
        %v3715 = vpop.f32.mrf.mxu0
        %3716 = vmatprep.mubr.f32.mxu0 0.0
        %v3717 = vand.u32 %v3058, 4294901760
        %v3718 = vsub.f32 %v3058, %v3717
        %3719 = vmatmul.mubr.f32.gmra.mxu0 %v3718
        %v3720 = vpop.f32.mrf.mxu0
        %v3721 = vadd.f32 %v3519, %v3720
        %v3722 = vpop.f32.mrf.mxu0
        %3723 = vmatprep.mubr.f32.mxu0 0.0
        %v3724 = vand.u32 %v3059, 4294901760
        %v3725 = vsub.f32 %v3059, %v3724
        %3726 = vmatmul.mubr.f32.gmra.mxu0 %v3725
        %v3727 = vpop.f32.mrf.mxu0
        %v3728 = vadd.f32 %v3525, %v3727
        %v3729 = vpop.f32.mrf.mxu0
        %3730 = vmatprep.mubr.f32.mxu0 0.0
        %v3731 = vand.u32 %v3060, 4294901760
        %v3732 = vsub.f32 %v3060, %v3731
        %3733 = vmatmul.mubr.f32.gmra.mxu0 %v3732
        %v3734 = vpop.f32.mrf.mxu0
        %v3735 = vadd.f32 %v3531, %v3734
        %v3736 = vpop.f32.mrf.mxu0
        %3737 = vmatprep.mubr.f32.mxu0 0.0
        %v3738 = vand.u32 %v3061, 4294901760
        %v3739 = vsub.f32 %v3061, %v3738
        %3740 = vmatmul.mubr.f32.gmra.mxu0 %v3739
        %v3741 = vpop.f32.mrf.mxu0
        %v3742 = vadd.f32 %v3537, %v3741
        %v3743 = vpop.f32.mrf.mxu0
        %3744 = vmatprep.mubr.f32.mxu0 0.0
        %v3745 = vand.u32 %v3062, 4294901760
        %v3746 = vsub.f32 %v3062, %v3745
        %3747 = vmatmul.mubr.f32.gmra.mxu0 %v3746
        %v3748 = vpop.f32.mrf.mxu0
        %v3749 = vadd.f32 %v3543, %v3748
        %v3750 = vpop.f32.mrf.mxu0
        %3751 = vmatprep.mubr.f32.mxu0 0.0
        %v3752 = vand.u32 %v3063, 4294901760
        %v3753 = vsub.f32 %v3063, %v3752
        %3754 = vmatmul.mubr.f32.gmra.mxu0 %v3753
        %v3755 = vpop.f32.mrf.mxu0
        %v3756 = vadd.f32 %v3549, %v3755
        %v3757 = vpop.f32.mrf.mxu0
        %3758 = vmatprep.mubr.f32.mxu0 0.0
        %v3759 = vand.u32 %v3064, 4294901760
        %v3760 = vsub.f32 %v3064, %v3759
        %3761 = vmatmul.mubr.f32.gmra.mxu0 %v3760
        %v3762 = vpop.f32.mrf.mxu0
        %v3763 = vadd.f32 %v3555, %v3762
        %v3764 = vpop.f32.mrf.mxu0
        %3765 = vmatprep.mubr.f32.mxu0 0.0
        %v3766 = vand.u32 %v3065, 4294901760
        %v3767 = vsub.f32 %v3065, %v3766
        %3768 = vmatmul.mubr.f32.gmra.mxu0 %v3767
        %v3769 = vpop.f32.mrf.mxu0
        %v3770 = vadd.f32 %v3561, %v3769
        %v3771 = vpop.f32.mrf.mxu0
        %3772 = vdwg.mxu0
        %3773 = vmatprep.subr.mxu0 0.0
        %v3774 = vand.u32 %v3081, 4294901760
        %3775 = vmatpush1.msra.mxu0 %v3774
        %3776 = vmatprep.subr.mxu0 0.0
        %v3777 = vand.u32 %v3080, 4294901760
        %3778 = vmatpush1.msra.mxu0 %v3777
        %3779 = vmatprep.subr.mxu0 0.0
        %v3780 = vand.u32 %v3079, 4294901760
        %3781 = vmatpush1.msra.mxu0 %v3780
        %3782 = vmatprep.subr.mxu0 0.0
        %v3783 = vand.u32 %v3078, 4294901760
        %3784 = vmatpush1.msra.mxu0 %v3783
        %3785 = vmatprep.subr.mxu0 0.0
        %v3786 = vand.u32 %v3077, 4294901760
        %3787 = vmatpush1.msra.mxu0 %v3786
        %3788 = vmatprep.subr.mxu0 0.0
        %v3789 = vand.u32 %v3076, 4294901760
        %3790 = vmatpush1.msra.mxu0 %v3789
        %3791 = vmatprep.subr.mxu0 0.0
        %v3792 = vand.u32 %v3075, 4294901760
        %3793 = vmatpush1.msra.mxu0 %v3792
        %3794 = vmatprep.subr.mxu0 0.0
        %v3795 = vand.u32 %v3074, 4294901760
        %3796 = vmatpush1.msra.mxu0 %v3795
        %3797 = vmatprep.subr.mxu0 0.0
        %v3798 = vand.u32 %v3073, 4294901760
        %3799 = vmatpush1.msra.mxu0 %v3798
        %3800 = vmatprep.subr.mxu0 0.0
        %v3801 = vand.u32 %v3072, 4294901760
        %3802 = vmatpush1.msra.mxu0 %v3801
        %3803 = vmatprep.subr.mxu0 0.0
        %v3804 = vand.u32 %v3071, 4294901760
        %3805 = vmatpush1.msra.mxu0 %v3804
        %3806 = vmatprep.subr.mxu0 0.0
        %v3807 = vand.u32 %v3070, 4294901760
        %3808 = vmatpush1.msra.mxu0 %v3807
        %3809 = vmatprep.subr.mxu0 0.0
        %v3810 = vand.u32 %v3069, 4294901760
        %3811 = vmatpush1.msra.mxu0 %v3810
        %3812 = vmatprep.subr.mxu0 0.0
        %v3813 = vand.u32 %v3068, 4294901760
        %3814 = vmatpush1.msra.mxu0 %v3813
        %3815 = vmatprep.subr.mxu0 0.0
        %v3816 = vand.u32 %v3067, 4294901760
        %3817 = vmatpush1.msra.mxu0 %v3816
        %3818 = vmatprep.subr.mxu0 0.0
        %v3819 = vand.u32 %v3066, 4294901760
        %3820 = vmatpush1.msra.mxu0 %v3819
        %3821 = vmatprep.subr.mxu0 0.0
        %3822 = vmatpush2.msra.mxu0 0.0
        %3823 = vmatprep.subr.mxu0 0.0
        %3824 = vmatpush2.msra.mxu0 0.0
        %3825 = vmatprep.subr.mxu0 0.0
        %3826 = vmatpush2.msra.mxu0 0.0
        %3827 = vmatprep.subr.mxu0 0.0
        %3828 = vmatpush2.msra.mxu0 0.0
        %3829 = vmatprep.subr.mxu0 0.0
        %3830 = vmatpush2.msra.mxu0 0.0
        %3831 = vmatprep.subr.mxu0 0.0
        %3832 = vmatpush2.msra.mxu0 0.0
        %3833 = vmatprep.subr.mxu0 0.0
        %3834 = vmatpush2.msra.mxu0 0.0
        %3835 = vmatprep.subr.mxu0 0.0
        %3836 = vmatpush2.msra.mxu0 0.0
        %3837 = vmatprep.subr.mxu0 0.0
        %3838 = vmatpush2.msra.mxu0 0.0
        %3839 = vmatprep.subr.mxu0 0.0
        %3840 = vmatpush2.msra.mxu0 0.0
        %3841 = vmatprep.subr.mxu0 0.0
        %3842 = vmatpush2.msra.mxu0 0.0
        %3843 = vmatprep.subr.mxu0 0.0
        %3844 = vmatpush2.msra.mxu0 0.0
        %3845 = vmatprep.subr.mxu0 0.0
        %3846 = vmatpush2.msra.mxu0 0.0
        %3847 = vmatprep.subr.mxu0 0.0
        %3848 = vmatpush2.msra.mxu0 0.0
        %3849 = vmatprep.subr.mxu0 0.0
        %3850 = vmatpush2.msra.mxu0 0.0
        %3851 = vmatprep.subr.mxu0 0.0
        %3852 = vmatpush2.msra.mxu0 0.0
        %3853 = vmatprep.mubr.f32.mxu0 0.0
        %v3854 = vand.u32 %v3050, 4294901760
        %v3855 = vsub.f32 %v3050, %v3854
        %v3856 = vand.u32 %v3855, 4294901760
        %3857 = vmatmul.mubr.f32.gmra.mxu0 %v3856
        %v3858 = vpop.f32.mrf.mxu0
        %v3859 = vadd.f32 %v3665, %v3858
        %v3860 = vpop.f32.mrf.mxu0
        %3861 = vmatprep.mubr.f32.mxu0 0.0
        %v3862 = vand.u32 %v3051, 4294901760
        %v3863 = vsub.f32 %v3051, %v3862
        %v3864 = vand.u32 %v3863, 4294901760
        %3865 = vmatmul.mubr.f32.gmra.mxu0 %v3864
        %v3866 = vpop.f32.mrf.mxu0
        %v3867 = vadd.f32 %v3672, %v3866
        %v3868 = vpop.f32.mrf.mxu0
        %3869 = vmatprep.mubr.f32.mxu0 0.0
        %v3870 = vand.u32 %v3052, 4294901760
        %v3871 = vsub.f32 %v3052, %v3870
        %v3872 = vand.u32 %v3871, 4294901760
        %3873 = vmatmul.mubr.f32.gmra.mxu0 %v3872
        %v3874 = vpop.f32.mrf.mxu0
        %v3875 = vadd.f32 %v3679, %v3874
        %v3876 = vpop.f32.mrf.mxu0
        %3877 = vmatprep.mubr.f32.mxu0 0.0
        %v3878 = vand.u32 %v3053, 4294901760
        %v3879 = vsub.f32 %v3053, %v3878
        %v3880 = vand.u32 %v3879, 4294901760
        %3881 = vmatmul.mubr.f32.gmra.mxu0 %v3880
        %v3882 = vpop.f32.mrf.mxu0
        %v3883 = vadd.f32 %v3686, %v3882
        %v3884 = vpop.f32.mrf.mxu0
        %3885 = vmatprep.mubr.f32.mxu0 0.0
        %v3886 = vand.u32 %v3054, 4294901760
        %v3887 = vsub.f32 %v3054, %v3886
        %v3888 = vand.u32 %v3887, 4294901760
        %3889 = vmatmul.mubr.f32.gmra.mxu0 %v3888
        %v3890 = vpop.f32.mrf.mxu0
        %v3891 = vadd.f32 %v3693, %v3890
        %v3892 = vpop.f32.mrf.mxu0
        %3893 = vmatprep.mubr.f32.mxu0 0.0
        %v3894 = vand.u32 %v3055, 4294901760
        %v3895 = vsub.f32 %v3055, %v3894
        %v3896 = vand.u32 %v3895, 4294901760
        %3897 = vmatmul.mubr.f32.gmra.mxu0 %v3896
        %v3898 = vpop.f32.mrf.mxu0
        %v3899 = vadd.f32 %v3700, %v3898
        %v3900 = vpop.f32.mrf.mxu0
        %3901 = vmatprep.mubr.f32.mxu0 0.0
        %v3902 = vand.u32 %v3056, 4294901760
        %v3903 = vsub.f32 %v3056, %v3902
        %v3904 = vand.u32 %v3903, 4294901760
        %3905 = vmatmul.mubr.f32.gmra.mxu0 %v3904
        %v3906 = vpop.f32.mrf.mxu0
        %v3907 = vadd.f32 %v3707, %v3906
        %v3908 = vpop.f32.mrf.mxu0
        %3909 = vmatprep.mubr.f32.mxu0 0.0
        %v3910 = vand.u32 %v3057, 4294901760
        %v3911 = vsub.f32 %v3057, %v3910
        %v3912 = vand.u32 %v3911, 4294901760
        %3913 = vmatmul.mubr.f32.gmra.mxu0 %v3912
        %v3914 = vpop.f32.mrf.mxu0
        %v3915 = vadd.f32 %v3714, %v3914
        %v3916 = vpop.f32.mrf.mxu0
        %3917 = vmatprep.mubr.f32.mxu0 0.0
        %v3918 = vand.u32 %v3058, 4294901760
        %v3919 = vsub.f32 %v3058, %v3918
        %v3920 = vand.u32 %v3919, 4294901760
        %3921 = vmatmul.mubr.f32.gmra.mxu0 %v3920
        %v3922 = vpop.f32.mrf.mxu0
        %v3923 = vadd.f32 %v3721, %v3922
        %v3924 = vpop.f32.mrf.mxu0
        %3925 = vmatprep.mubr.f32.mxu0 0.0
        %v3926 = vand.u32 %v3059, 4294901760
        %v3927 = vsub.f32 %v3059, %v3926
        %v3928 = vand.u32 %v3927, 4294901760
        %3929 = vmatmul.mubr.f32.gmra.mxu0 %v3928
        %v3930 = vpop.f32.mrf.mxu0
        %v3931 = vadd.f32 %v3728, %v3930
        %v3932 = vpop.f32.mrf.mxu0
        %3933 = vmatprep.mubr.f32.mxu0 0.0
        %v3934 = vand.u32 %v3060, 4294901760
        %v3935 = vsub.f32 %v3060, %v3934
        %v3936 = vand.u32 %v3935, 4294901760
        %3937 = vmatmul.mubr.f32.gmra.mxu0 %v3936
        %v3938 = vpop.f32.mrf.mxu0
        %v3939 = vadd.f32 %v3735, %v3938
        %v3940 = vpop.f32.mrf.mxu0
        %3941 = vmatprep.mubr.f32.mxu0 0.0
        %v3942 = vand.u32 %v3061, 4294901760
        %v3943 = vsub.f32 %v3061, %v3942
        %v3944 = vand.u32 %v3943, 4294901760
        %3945 = vmatmul.mubr.f32.gmra.mxu0 %v3944
        %v3946 = vpop.f32.mrf.mxu0
        %v3947 = vadd.f32 %v3742, %v3946
        %v3948 = vpop.f32.mrf.mxu0
        %3949 = vmatprep.mubr.f32.mxu0 0.0
        %v3950 = vand.u32 %v3062, 4294901760
        %v3951 = vsub.f32 %v3062, %v3950
        %v3952 = vand.u32 %v3951, 4294901760
        %3953 = vmatmul.mubr.f32.gmra.mxu0 %v3952
        %v3954 = vpop.f32.mrf.mxu0
        %v3955 = vadd.f32 %v3749, %v3954
        %v3956 = vpop.f32.mrf.mxu0
        %3957 = vmatprep.mubr.f32.mxu0 0.0
        %v3958 = vand.u32 %v3063, 4294901760
        %v3959 = vsub.f32 %v3063, %v3958
        %v3960 = vand.u32 %v3959, 4294901760
        %3961 = vmatmul.mubr.f32.gmra.mxu0 %v3960
        %v3962 = vpop.f32.mrf.mxu0
        %v3963 = vadd.f32 %v3756, %v3962
        %v3964 = vpop.f32.mrf.mxu0
        %3965 = vmatprep.mubr.f32.mxu0 0.0
        %v3966 = vand.u32 %v3064, 4294901760
        %v3967 = vsub.f32 %v3064, %v3966
        %v3968 = vand.u32 %v3967, 4294901760
        %3969 = vmatmul.mubr.f32.gmra.mxu0 %v3968
        %v3970 = vpop.f32.mrf.mxu0
        %v3971 = vadd.f32 %v3763, %v3970
        %v3972 = vpop.f32.mrf.mxu0
        %3973 = vmatprep.mubr.f32.mxu0 0.0
        %v3974 = vand.u32 %v3065, 4294901760
        %v3975 = vsub.f32 %v3065, %v3974
        %v3976 = vand.u32 %v3975, 4294901760
        %3977 = vmatmul.mubr.f32.gmra.mxu0 %v3976
        %v3978 = vpop.f32.mrf.mxu0
        %v3979 = vadd.f32 %v3770, %v3978
        %v3980 = vpop.f32.mrf.mxu0
        %3981 = vdwg.mxu0
        %3982 = vmatprep.subr.mxu0 0.0
        %v3983 = vand.u32 %v3081, 4294901760
        %v3984 = vsub.f32 %v3081, %v3983
        %v3985 = vand.u32 %v3984, 4294901760
        %3986 = vmatpush1.msra.mxu0 %v3985
        %3987 = vmatprep.subr.mxu0 0.0
        %v3988 = vand.u32 %v3080, 4294901760
        %v3989 = vsub.f32 %v3080, %v3988
        %v3990 = vand.u32 %v3989, 4294901760
        %3991 = vmatpush1.msra.mxu0 %v3990
        %3992 = vmatprep.subr.mxu0 0.0
        %v3993 = vand.u32 %v3079, 4294901760
        %v3994 = vsub.f32 %v3079, %v3993
        %v3995 = vand.u32 %v3994, 4294901760
        %3996 = vmatpush1.msra.mxu0 %v3995
        %3997 = vmatprep.subr.mxu0 0.0
        %v3998 = vand.u32 %v3078, 4294901760
        %v3999 = vsub.f32 %v3078, %v3998
        %v4000 = vand.u32 %v3999, 4294901760
        %4001 = vmatpush1.msra.mxu0 %v4000
        %4002 = vmatprep.subr.mxu0 0.0
        %v4003 = vand.u32 %v3077, 4294901760
        %v4004 = vsub.f32 %v3077, %v4003
        %v4005 = vand.u32 %v4004, 4294901760
        %4006 = vmatpush1.msra.mxu0 %v4005
        %4007 = vmatprep.subr.mxu0 0.0
        %v4008 = vand.u32 %v3076, 4294901760
        %v4009 = vsub.f32 %v3076, %v4008
        %v4010 = vand.u32 %v4009, 4294901760
        %4011 = vmatpush1.msra.mxu0 %v4010
        %4012 = vmatprep.subr.mxu0 0.0
        %v4013 = vand.u32 %v3075, 4294901760
        %v4014 = vsub.f32 %v3075, %v4013
        %v4015 = vand.u32 %v4014, 4294901760
        %4016 = vmatpush1.msra.mxu0 %v4015
        %4017 = vmatprep.subr.mxu0 0.0
        %v4018 = vand.u32 %v3074, 4294901760
        %v4019 = vsub.f32 %v3074, %v4018
        %v4020 = vand.u32 %v4019, 4294901760
        %4021 = vmatpush1.msra.mxu0 %v4020
        %4022 = vmatprep.subr.mxu0 0.0
        %v4023 = vand.u32 %v3073, 4294901760
        %v4024 = vsub.f32 %v3073, %v4023
        %v4025 = vand.u32 %v4024, 4294901760
        %4026 = vmatpush1.msra.mxu0 %v4025
        %4027 = vmatprep.subr.mxu0 0.0
        %v4028 = vand.u32 %v3072, 4294901760
        %v4029 = vsub.f32 %v3072, %v4028
        %v4030 = vand.u32 %v4029, 4294901760
        %4031 = vmatpush1.msra.mxu0 %v4030
        %4032 = vmatprep.subr.mxu0 0.0
        %v4033 = vand.u32 %v3071, 4294901760
        %v4034 = vsub.f32 %v3071, %v4033
        %v4035 = vand.u32 %v4034, 4294901760
        %4036 = vmatpush1.msra.mxu0 %v4035
        %4037 = vmatprep.subr.mxu0 0.0
        %v4038 = vand.u32 %v3070, 4294901760
        %v4039 = vsub.f32 %v3070, %v4038
        %v4040 = vand.u32 %v4039, 4294901760
        %4041 = vmatpush1.msra.mxu0 %v4040
        %4042 = vmatprep.subr.mxu0 0.0
        %v4043 = vand.u32 %v3069, 4294901760
        %v4044 = vsub.f32 %v3069, %v4043
        %v4045 = vand.u32 %v4044, 4294901760
        %4046 = vmatpush1.msra.mxu0 %v4045
        %4047 = vmatprep.subr.mxu0 0.0
        %v4048 = vand.u32 %v3068, 4294901760
        %v4049 = vsub.f32 %v3068, %v4048
        %v4050 = vand.u32 %v4049, 4294901760
        %4051 = vmatpush1.msra.mxu0 %v4050
        %4052 = vmatprep.subr.mxu0 0.0
        %v4053 = vand.u32 %v3067, 4294901760
        %v4054 = vsub.f32 %v3067, %v4053
        %v4055 = vand.u32 %v4054, 4294901760
        %4056 = vmatpush1.msra.mxu0 %v4055
        %4057 = vmatprep.subr.mxu0 0.0
        %v4058 = vand.u32 %v3066, 4294901760
        %v4059 = vsub.f32 %v3066, %v4058
        %v4060 = vand.u32 %v4059, 4294901760
        %4061 = vmatpush1.msra.mxu0 %v4060
        %4062 = vmatprep.subr.mxu0 0.0
        %4063 = vmatpush2.msra.mxu0 0.0
        %4064 = vmatprep.subr.mxu0 0.0
        %4065 = vmatpush2.msra.mxu0 0.0
        %4066 = vmatprep.subr.mxu0 0.0
        %4067 = vmatpush2.msra.mxu0 0.0
        %4068 = vmatprep.subr.mxu0 0.0
        %4069 = vmatpush2.msra.mxu0 0.0
        %4070 = vmatprep.subr.mxu0 0.0
        %4071 = vmatpush2.msra.mxu0 0.0
        %4072 = vmatprep.subr.mxu0 0.0
        %4073 = vmatpush2.msra.mxu0 0.0
        %4074 = vmatprep.subr.mxu0 0.0
        %4075 = vmatpush2.msra.mxu0 0.0
        %4076 = vmatprep.subr.mxu0 0.0
        %4077 = vmatpush2.msra.mxu0 0.0
        %4078 = vmatprep.subr.mxu0 0.0
        %4079 = vmatpush2.msra.mxu0 0.0
        %4080 = vmatprep.subr.mxu0 0.0
        %4081 = vmatpush2.msra.mxu0 0.0
        %4082 = vmatprep.subr.mxu0 0.0
        %4083 = vmatpush2.msra.mxu0 0.0
        %4084 = vmatprep.subr.mxu0 0.0
        %4085 = vmatpush2.msra.mxu0 0.0
        %4086 = vmatprep.subr.mxu0 0.0
        %4087 = vmatpush2.msra.mxu0 0.0
        %4088 = vmatprep.subr.mxu0 0.0
        %4089 = vmatpush2.msra.mxu0 0.0
        %4090 = vmatprep.subr.mxu0 0.0
        %4091 = vmatpush2.msra.mxu0 0.0
        %4092 = vmatprep.subr.mxu0 0.0
        %4093 = vmatpush2.msra.mxu0 0.0
        %4094 = vmatprep.mubr.f32.mxu0 0.0
        %v4095 = vand.u32 %v3050, 4294901760
        %4096 = vmatmul.mubr.f32.gmra.mxu0 %v4095
        %v4097 = vpop.f32.mrf.mxu0
        %v4098 = vadd.f32 %v3859, %v4097
        %v4099 = vpop.f32.mrf.mxu0
        %4100 = vmatprep.mubr.f32.mxu0 0.0
        %v4101 = vand.u32 %v3051, 4294901760
        %4102 = vmatmul.mubr.f32.gmra.mxu0 %v4101
        %v4103 = vpop.f32.mrf.mxu0
        %v4104 = vadd.f32 %v3867, %v4103
        %v4105 = vpop.f32.mrf.mxu0
        %4106 = vmatprep.mubr.f32.mxu0 0.0
        %v4107 = vand.u32 %v3052, 4294901760
        %4108 = vmatmul.mubr.f32.gmra.mxu0 %v4107
        %v4109 = vpop.f32.mrf.mxu0
        %v4110 = vadd.f32 %v3875, %v4109
        %v4111 = vpop.f32.mrf.mxu0
        %4112 = vmatprep.mubr.f32.mxu0 0.0
        %v4113 = vand.u32 %v3053, 4294901760
        %4114 = vmatmul.mubr.f32.gmra.mxu0 %v4113
        %v4115 = vpop.f32.mrf.mxu0
        %v4116 = vadd.f32 %v3883, %v4115
        %v4117 = vpop.f32.mrf.mxu0
        %4118 = vmatprep.mubr.f32.mxu0 0.0
        %v4119 = vand.u32 %v3054, 4294901760
        %4120 = vmatmul.mubr.f32.gmra.mxu0 %v4119
        %v4121 = vpop.f32.mrf.mxu0
        %v4122 = vadd.f32 %v3891, %v4121
        %v4123 = vpop.f32.mrf.mxu0
        %4124 = vmatprep.mubr.f32.mxu0 0.0
        %v4125 = vand.u32 %v3055, 4294901760
        %4126 = vmatmul.mubr.f32.gmra.mxu0 %v4125
        %v4127 = vpop.f32.mrf.mxu0
        %v4128 = vadd.f32 %v3899, %v4127
        %v4129 = vpop.f32.mrf.mxu0
        %4130 = vmatprep.mubr.f32.mxu0 0.0
        %v4131 = vand.u32 %v3056, 4294901760
        %4132 = vmatmul.mubr.f32.gmra.mxu0 %v4131
        %v4133 = vpop.f32.mrf.mxu0
        %v4134 = vadd.f32 %v3907, %v4133
        %v4135 = vpop.f32.mrf.mxu0
        %4136 = vmatprep.mubr.f32.mxu0 0.0
        %v4137 = vand.u32 %v3057, 4294901760
        %4138 = vmatmul.mubr.f32.gmra.mxu0 %v4137
        %v4139 = vpop.f32.mrf.mxu0
        %v4140 = vadd.f32 %v3915, %v4139
        %v4141 = vpop.f32.mrf.mxu0
        %4142 = vmatprep.mubr.f32.mxu0 0.0
        %v4143 = vand.u32 %v3058, 4294901760
        %4144 = vmatmul.mubr.f32.gmra.mxu0 %v4143
        %v4145 = vpop.f32.mrf.mxu0
        %v4146 = vadd.f32 %v3923, %v4145
        %v4147 = vpop.f32.mrf.mxu0
        %4148 = vmatprep.mubr.f32.mxu0 0.0
        %v4149 = vand.u32 %v3059, 4294901760
        %4150 = vmatmul.mubr.f32.gmra.mxu0 %v4149
        %v4151 = vpop.f32.mrf.mxu0
        %v4152 = vadd.f32 %v3931, %v4151
        %v4153 = vpop.f32.mrf.mxu0
        %4154 = vmatprep.mubr.f32.mxu0 0.0
        %v4155 = vand.u32 %v3060, 4294901760
        %4156 = vmatmul.mubr.f32.gmra.mxu0 %v4155
        %v4157 = vpop.f32.mrf.mxu0
        %v4158 = vadd.f32 %v3939, %v4157
        %v4159 = vpop.f32.mrf.mxu0
        %4160 = vmatprep.mubr.f32.mxu0 0.0
        %v4161 = vand.u32 %v3061, 4294901760
        %4162 = vmatmul.mubr.f32.gmra.mxu0 %v4161
        %v4163 = vpop.f32.mrf.mxu0
        %v4164 = vadd.f32 %v3947, %v4163
        %v4165 = vpop.f32.mrf.mxu0
        %4166 = vmatprep.mubr.f32.mxu0 0.0
        %v4167 = vand.u32 %v3062, 4294901760
        %4168 = vmatmul.mubr.f32.gmra.mxu0 %v4167
        %v4169 = vpop.f32.mrf.mxu0
        %v4170 = vadd.f32 %v3955, %v4169
        %v4171 = vpop.f32.mrf.mxu0
        %4172 = vmatprep.mubr.f32.mxu0 0.0
        %v4173 = vand.u32 %v3063, 4294901760
        %4174 = vmatmul.mubr.f32.gmra.mxu0 %v4173
        %v4175 = vpop.f32.mrf.mxu0
        %v4176 = vadd.f32 %v3963, %v4175
        %v4177 = vpop.f32.mrf.mxu0
        %4178 = vmatprep.mubr.f32.mxu0 0.0
        %v4179 = vand.u32 %v3064, 4294901760
        %4180 = vmatmul.mubr.f32.gmra.mxu0 %v4179
        %v4181 = vpop.f32.mrf.mxu0
        %v4182 = vadd.f32 %v3971, %v4181
        %v4183 = vpop.f32.mrf.mxu0
        %4184 = vmatprep.mubr.f32.mxu0 0.0
        %v4185 = vand.u32 %v3065, 4294901760
        %4186 = vmatmul.mubr.f32.gmra.mxu0 %v4185
        %v4187 = vpop.f32.mrf.mxu0
        %v4188 = vadd.f32 %v3979, %v4187
        %v4189 = vpop.f32.mrf.mxu0
        %4190 = vdwg.mxu0
        %4191 = vmatprep.subr.mxu0 0.0
        %v4192 = vand.u32 %v3081, 4294901760
        %4193 = vmatpush1.msra.mxu0 %v4192
        %4194 = vmatprep.subr.mxu0 0.0
        %v4195 = vand.u32 %v3080, 4294901760
        %4196 = vmatpush1.msra.mxu0 %v4195
        %4197 = vmatprep.subr.mxu0 0.0
        %v4198 = vand.u32 %v3079, 4294901760
        %4199 = vmatpush1.msra.mxu0 %v4198
        %4200 = vmatprep.subr.mxu0 0.0
        %v4201 = vand.u32 %v3078, 4294901760
        %4202 = vmatpush1.msra.mxu0 %v4201
        %4203 = vmatprep.subr.mxu0 0.0
        %v4204 = vand.u32 %v3077, 4294901760
        %4205 = vmatpush1.msra.mxu0 %v4204
        %4206 = vmatprep.subr.mxu0 0.0
        %v4207 = vand.u32 %v3076, 4294901760
        %4208 = vmatpush1.msra.mxu0 %v4207
        %4209 = vmatprep.subr.mxu0 0.0
        %v4210 = vand.u32 %v3075, 4294901760
        %4211 = vmatpush1.msra.mxu0 %v4210
        %4212 = vmatprep.subr.mxu0 0.0
        %v4213 = vand.u32 %v3074, 4294901760
        %4214 = vmatpush1.msra.mxu0 %v4213
        %4215 = vmatprep.subr.mxu0 0.0
        %v4216 = vand.u32 %v3073, 4294901760
        %4217 = vmatpush1.msra.mxu0 %v4216
        %4218 = vmatprep.subr.mxu0 0.0
        %v4219 = vand.u32 %v3072, 4294901760
        %4220 = vmatpush1.msra.mxu0 %v4219
        %4221 = vmatprep.subr.mxu0 0.0
        %v4222 = vand.u32 %v3071, 4294901760
        %4223 = vmatpush1.msra.mxu0 %v4222
        %4224 = vmatprep.subr.mxu0 0.0
        %v4225 = vand.u32 %v3070, 4294901760
        %4226 = vmatpush1.msra.mxu0 %v4225
        %4227 = vmatprep.subr.mxu0 0.0
        %v4228 = vand.u32 %v3069, 4294901760
        %4229 = vmatpush1.msra.mxu0 %v4228
        %4230 = vmatprep.subr.mxu0 0.0
        %v4231 = vand.u32 %v3068, 4294901760
        %4232 = vmatpush1.msra.mxu0 %v4231
        %4233 = vmatprep.subr.mxu0 0.0
        %v4234 = vand.u32 %v3067, 4294901760
        %4235 = vmatpush1.msra.mxu0 %v4234
        %4236 = vmatprep.subr.mxu0 0.0
        %v4237 = vand.u32 %v3066, 4294901760
        %4238 = vmatpush1.msra.mxu0 %v4237
        %4239 = vmatprep.subr.mxu0 0.0
        %4240 = vmatpush2.msra.mxu0 0.0
        %4241 = vmatprep.subr.mxu0 0.0
        %4242 = vmatpush2.msra.mxu0 0.0
        %4243 = vmatprep.subr.mxu0 0.0
        %4244 = vmatpush2.msra.mxu0 0.0
        %4245 = vmatprep.subr.mxu0 0.0
        %4246 = vmatpush2.msra.mxu0 0.0
        %4247 = vmatprep.subr.mxu0 0.0
        %4248 = vmatpush2.msra.mxu0 0.0
        %4249 = vmatprep.subr.mxu0 0.0
        %4250 = vmatpush2.msra.mxu0 0.0
        %4251 = vmatprep.subr.mxu0 0.0
        %4252 = vmatpush2.msra.mxu0 0.0
        %4253 = vmatprep.subr.mxu0 0.0
        %4254 = vmatpush2.msra.mxu0 0.0
        %4255 = vmatprep.subr.mxu0 0.0
        %4256 = vmatpush2.msra.mxu0 0.0
        %4257 = vmatprep.subr.mxu0 0.0
        %4258 = vmatpush2.msra.mxu0 0.0
        %4259 = vmatprep.subr.mxu0 0.0
        %4260 = vmatpush2.msra.mxu0 0.0
        %4261 = vmatprep.subr.mxu0 0.0
        %4262 = vmatpush2.msra.mxu0 0.0
        %4263 = vmatprep.subr.mxu0 0.0
        %4264 = vmatpush2.msra.mxu0 0.0
        %4265 = vmatprep.subr.mxu0 0.0
        %4266 = vmatpush2.msra.mxu0 0.0
        %4267 = vmatprep.subr.mxu0 0.0
        %4268 = vmatpush2.msra.mxu0 0.0
        %4269 = vmatprep.subr.mxu0 0.0
        %4270 = vmatpush2.msra.mxu0 0.0
        %4271 = vmatprep.mubr.f32.mxu0 0.0
        %v4272 = vand.u32 %v3050, 4294901760
        %4273 = vmatmul.mubr.f32.gmra.mxu0 %v4272
        %v4274 = vpop.f32.mrf.mxu0
        %v4275 = vadd.f32 %v4098, %v4274
        %v4276 = vpop.f32.mrf.mxu0
        %4277 = vmatprep.mubr.f32.mxu0 0.0
        %v4278 = vand.u32 %v3051, 4294901760
        %4279 = vmatmul.mubr.f32.gmra.mxu0 %v4278
        %v4280 = vpop.f32.mrf.mxu0
        %v4281 = vadd.f32 %v4104, %v4280
        %v4282 = vpop.f32.mrf.mxu0
        %4283 = vmatprep.mubr.f32.mxu0 0.0
        %v4284 = vand.u32 %v3052, 4294901760
        %4285 = vmatmul.mubr.f32.gmra.mxu0 %v4284
        %v4286 = vpop.f32.mrf.mxu0
        %v4287 = vadd.f32 %v4110, %v4286
        %v4288 = vpop.f32.mrf.mxu0
        %4289 = vmatprep.mubr.f32.mxu0 0.0
        %v4290 = vand.u32 %v3053, 4294901760
        %4291 = vmatmul.mubr.f32.gmra.mxu0 %v4290
        %v4292 = vpop.f32.mrf.mxu0
        %v4293 = vadd.f32 %v4116, %v4292
        %v4294 = vpop.f32.mrf.mxu0
        %4295 = vmatprep.mubr.f32.mxu0 0.0
        %v4296 = vand.u32 %v3054, 4294901760
        %4297 = vmatmul.mubr.f32.gmra.mxu0 %v4296
        %v4298 = vpop.f32.mrf.mxu0
        %v4299 = vadd.f32 %v4122, %v4298
        %v4300 = vpop.f32.mrf.mxu0
        %4301 = vmatprep.mubr.f32.mxu0 0.0
        %v4302 = vand.u32 %v3055, 4294901760
        %4303 = vmatmul.mubr.f32.gmra.mxu0 %v4302
        %v4304 = vpop.f32.mrf.mxu0
        %v4305 = vadd.f32 %v4128, %v4304
        %v4306 = vpop.f32.mrf.mxu0
        %4307 = vmatprep.mubr.f32.mxu0 0.0
        %v4308 = vand.u32 %v3056, 4294901760
        %4309 = vmatmul.mubr.f32.gmra.mxu0 %v4308
        %v4310 = vpop.f32.mrf.mxu0
        %v4311 = vadd.f32 %v4134, %v4310
        %v4312 = vpop.f32.mrf.mxu0
        %4313 = vmatprep.mubr.f32.mxu0 0.0
        %v4314 = vand.u32 %v3057, 4294901760
        %4315 = vmatmul.mubr.f32.gmra.mxu0 %v4314
        %v4316 = vpop.f32.mrf.mxu0
        %v4317 = vadd.f32 %v4140, %v4316
        %v4318 = vpop.f32.mrf.mxu0
        %4319 = vmatprep.mubr.f32.mxu0 0.0
        %v4320 = vand.u32 %v3058, 4294901760
        %4321 = vmatmul.mubr.f32.gmra.mxu0 %v4320
        %v4322 = vpop.f32.mrf.mxu0
        %v4323 = vadd.f32 %v4146, %v4322
        %v4324 = vpop.f32.mrf.mxu0
        %4325 = vmatprep.mubr.f32.mxu0 0.0
        %v4326 = vand.u32 %v3059, 4294901760
        %4327 = vmatmul.mubr.f32.gmra.mxu0 %v4326
        %v4328 = vpop.f32.mrf.mxu0
        %v4329 = vadd.f32 %v4152, %v4328
        %v4330 = vpop.f32.mrf.mxu0
        %4331 = vmatprep.mubr.f32.mxu0 0.0
        %v4332 = vand.u32 %v3060, 4294901760
        %4333 = vmatmul.mubr.f32.gmra.mxu0 %v4332
        %v4334 = vpop.f32.mrf.mxu0
        %v4335 = vadd.f32 %v4158, %v4334
        %v4336 = vpop.f32.mrf.mxu0
        %4337 = vmatprep.mubr.f32.mxu0 0.0
        %v4338 = vand.u32 %v3061, 4294901760
        %4339 = vmatmul.mubr.f32.gmra.mxu0 %v4338
        %v4340 = vpop.f32.mrf.mxu0
        %v4341 = vadd.f32 %v4164, %v4340
        %v4342 = vpop.f32.mrf.mxu0
        %4343 = vmatprep.mubr.f32.mxu0 0.0
        %v4344 = vand.u32 %v3062, 4294901760
        %4345 = vmatmul.mubr.f32.gmra.mxu0 %v4344
        %v4346 = vpop.f32.mrf.mxu0
        %v4347 = vadd.f32 %v4170, %v4346
        %v4348 = vpop.f32.mrf.mxu0
        %4349 = vmatprep.mubr.f32.mxu0 0.0
        %v4350 = vand.u32 %v3063, 4294901760
        %4351 = vmatmul.mubr.f32.gmra.mxu0 %v4350
        %v4352 = vpop.f32.mrf.mxu0
        %v4353 = vadd.f32 %v4176, %v4352
        %v4354 = vpop.f32.mrf.mxu0
        %4355 = vmatprep.mubr.f32.mxu0 0.0
        %v4356 = vand.u32 %v3064, 4294901760
        %4357 = vmatmul.mubr.f32.gmra.mxu0 %v4356
        %v4358 = vpop.f32.mrf.mxu0
        %v4359 = vadd.f32 %v4182, %v4358
        %v4360 = vpop.f32.mrf.mxu0
        %4361 = vmatprep.mubr.f32.mxu0 0.0
        %v4362 = vand.u32 %v3065, 4294901760
        %4363 = vmatmul.mubr.f32.gmra.mxu0 %v4362
        %v4364 = vpop.f32.mrf.mxu0
        %v4365 = vadd.f32 %v4188, %v4364
        %v4366 = vpop.f32.mrf.mxu0
        %4367 = vdwg.mxu0
        %v4368 = vmul.f32 %v4299, %v4299
        %v4369 = vmul.f32 %v4305, %v4305
        %v4370 = vsub.f32 %v4335, %v4368
        %v4371 = vsub.f32 %v4341, %v4369
        %v4372 = vmul.f32 %v4275, %v4275
        %v4373 = vmul.f32 %v4281, %v4281
        %v4374 = vmul.f32 %v4275, %v4299
        %v4375 = vmul.f32 %v4281, %v4305
        %v4376 = vsub.f32 %v4311, %v4372
        %v4377 = vsub.f32 %v4317, %v4373
        %v4378 = vsub.f32 %v4347, %v4374
        %v4379 = vsub.f32 %v4353, %v4375
        %v4380 = vmul.f32 %v4374, 2.0
        %v4381 = vmul.f32 %v4375, 2.0
        %v4382 = vadd.f32 %v4380, 0.0001
        %v4383 = vadd.f32 %v4381, 0.0001
        %v4384 = vmul.f32 %v4378, 2.0
        %v4385 = vmul.f32 %v4379, 2.0
        %v4386 = vadd.f32 %v4384, 0.0009
        %v4387 = vadd.f32 %v4385, 0.0009
        %v4388 = vmul.f32 %v4382, %v4386
        %v4389 = vmul.f32 %v4383, %v4387
        %v4390 = vadd.f32 %v4372, %v4368
        %v4391 = vadd.f32 %v4373, %v4369
        %v4392 = vadd.f32 %v4390, 0.0001
        %v4393 = vadd.f32 %v4391, 0.0001
        %v4394 = vadd.f32 %v4376, %v4370
        %v4395 = vadd.f32 %v4377, %v4371
        %v4396 = vadd.f32 %v4394, 0.0009
        %v4397 = vadd.f32 %v4395, 0.0009
        %v4398 = vmul.f32 %v4392, %v4396
        %v4399 = vmul.f32 %v4393, %v4397
        %v4400 = vrcp.pop %v4398
        %v4401 = vmul.f32 %v4388, %v4400
        %v4402 = vrcp.pop %v4399
        %v4403 = vmul.f32 %v4389, %v4402
        %v4404 = vmul.f32 %v346, %v4401
        %v4405 = vmul.f32 %v347, %v4403
        %v4406 = vadd.f32 %v4404, %v4405
        %4407 = vadd.xlane.f32.xlu0 %v4406
        %v4408 = vpop.xlane.xlu0 %4407
        %v4409 = vrot.slane %v4408, 4
        %v4410 = vadd.f32 %v4408, %v4409
        %v4411 = vrot.slane %v4410, 2
        %v4412 = vadd.f32 %v4410, %v4411
        %v4413 = vrot.slane %v4412, 1
        %v4414 = vadd.f32 %v4412, %v4413
        %s4415 = vtos %v4414
        %v4416 = vmul.f32 %v4287, %v4287
        %v4417 = vmul.f32 %v4293, %v4293
        %v4418 = vmul.f32 %v4287, %v4299
        %v4419 = vmul.f32 %v4293, %v4305
        %v4420 = vsub.f32 %v4323, %v4416
        %v4421 = vsub.f32 %v4329, %v4417
        %v4422 = vsub.f32 %v4359, %v4418
        %v4423 = vsub.f32 %v4365, %v4419
        %v4424 = vmul.f32 %v4418, 2.0
        %v4425 = vmul.f32 %v4419, 2.0
        %v4426 = vadd.f32 %v4424, 0.0001
        %v4427 = vadd.f32 %v4425, 0.0001
        %v4428 = vmul.f32 %v4422, 2.0
        %v4429 = vmul.f32 %v4423, 2.0
        %v4430 = vadd.f32 %v4428, 0.0009
        %v4431 = vadd.f32 %v4429, 0.0009
        %v4432 = vmul.f32 %v4426, %v4430
        %v4433 = vmul.f32 %v4427, %v4431
        %v4434 = vadd.f32 %v4416, %v4368
        %v4435 = vadd.f32 %v4417, %v4369
        %v4436 = vadd.f32 %v4434, 0.0001
        %v4437 = vadd.f32 %v4435, 0.0001
        %v4438 = vadd.f32 %v4420, %v4370
        %v4439 = vadd.f32 %v4421, %v4371
        %v4440 = vadd.f32 %v4438, 0.0009
        %v4441 = vadd.f32 %v4439, 0.0009
        %v4442 = vmul.f32 %v4436, %v4440
        %v4443 = vmul.f32 %v4437, %v4441
        %v4444 = vrcp.pop %v4442
        %v4445 = vmul.f32 %v4432, %v4444
        %v4446 = vrcp.pop %v4443
        %v4447 = vmul.f32 %v4433, %v4446
        %v4448 = vmul.f32 %v346, %v4445
        %v4449 = vmul.f32 %v347, %v4447
        %v4450 = vadd.f32 %v4448, %v4449
        %4451 = vadd.xlane.f32.xlu0 %v4450
        %v4452 = vpop.xlane.xlu0 %4451
        %v4453 = vrot.slane %v4452, 4
        %v4454 = vadd.f32 %v4452, %v4453
        %v4455 = vrot.slane %v4454, 2
        %v4456 = vadd.f32 %v4454, %v4455
        %v4457 = vrot.slane %v4456, 1
        %v4458 = vadd.f32 %v4456, %v4457
        %s4459 = vtos %v4458
        %s4460 = scalar_lea.smem %s291, 0 [#allocation4]
        %4461 = sst [smem:[%s4460]] %s465
        %s4462 = scalar_lea.smem %s291, 1 [#allocation4]
        %4463 = sst [smem:[%s4462]] %s572
        %s4464 = scalar_lea.smem %s291, 2 [#allocation4]
        %4465 = sst [smem:[%s4464]] %s4415
        %s4466 = scalar_lea.smem %s291, 3 [#allocation4]
        %4467 = sst [smem:[%s4466]] %s4459
        %s4468 = sand.u32 %s167, 1
        %s4469 = scalar_lea.sflag [#allocation5], %s4468
        %s4470 = sand.u32 %s167, 1
        %s4471 = smul.addr %s4470, 128
        %s4472 = scalar_lea.smem [#allocation4], %s4471
        // Predicated region
        $region41: #{l_ssim_loss.1} parent=39 // pred_check
          %p4473 = pneg %p177
        $region42: #{l_ssim_loss.1} parent=39 // pred_check_branch
          %4475 = sbr.rel (%p4473) target = $region44
        $region43: #{l_ssim_loss.1} parent=39 // pred_region
          %s4477 = ssub.s32 16, 16
          %4478 = vsyncadd %s4469, %s4477
          %s4479 = sadd.s32 %s24, %s23
          %s4480 = scalar_lea.vmem %s5, %s4479
          %s4482 = sshll.u32 %s4480, 4
          %s4483 = int_to_ptr.vmem [resolvable:$true] %s4482
          %4485 = dma.smem_to_vmem %s4472, 16, %s4483, %s4469
        $region44: #{l_ssim_loss.1} parent=39 // pred_fallthru
          _
      $region40: #{l_ssim_loss.1} parent=5 // pred_fallthru
        _
      %p4486 = scmp.le.s32.totalorder 2, %s14
      // Predicated region
      $region45: #{l_ssim_loss.1} parent=5 // pred_check
        %p4487 = pneg %p4486
      $region46: #{l_ssim_loss.1} parent=5 // pred_check_branch
        %4489 = sbr.rel (%p4487) target = $region48
      $region47: #{l_ssim_loss.1} parent=5 // pred_region
        %s4490 = ssub.s32 %s14, 2
        // Predicated region
        $region49: #{l_ssim_loss.1} parent=47 // pred_check
          %p4491 = pneg %p183
        $region50: #{l_ssim_loss.1} parent=47 // pred_check_branch
          %4493 = sbr.rel (%p4491) target = $region52
        $region51: #{l_ssim_loss.1} parent=47 // pred_region
          %s4494 = sand.u32 %s168, 1
          %s4495 = scalar_lea.sflag [#allocation5], %s4494
          %s4496 = sand.u32 %s168, 1
          %s4497 = smul.addr %s4496, 128
          %s4498 = scalar_lea.smem [#allocation4], %s4497
          %4499 = dma.done %s4495, 16
        $region52: #{l_ssim_loss.1} parent=47 // pred_fallthru
          _
        %4500 = sfence
      $region48: #{l_ssim_loss.1} parent=5 // pred_fallthru
        _
    $region6: #{l_ssim_loss.1} parent=1 // loop_footer
      %s18 = sadd.s32 1, %s14
    $region7: #{l_ssim_loss.1} parent=1 // loop_footer_branch
      %13 = sbr.rel target = $region3
    $region8: #{l_ssim_loss.1} parent=1 // loop_exit
      _
    %4501 = vsyncpa [#allocation5], 1
    %s4502 = scalar_lea.sflag [#allocation5], 1
    %4503 = vsyncpa %s4502, 1

</llo_original>
